<compile_context>
chip_gen: v6e
topology: v6e:2x2x1
jax: 0.10.0
libtpu: 0.0.40
codegen_flags: <defaults>
</compile_context>

<pallas_src>
import functools

import numpy as np
import jax
import jax.numpy as jnp
from jax.experimental import pallas as pl
from jax.experimental.pallas import tpu as pltpu


# ------------------------------ fused forward kernel -----------------------------------
def _ht_conv_kernel(x_ref, wdw_ref, bdw_ref,
                    w11_ref, b11_ref, w12_ref, b12_ref,
                    w21_ref, b21_ref, w22_ref, b22_ref,
                    wr_ref, br_ref, wmask_ref,
                    o_ref, *, H, W, CP):
    """One batch image per grid step.  Activations are (CP, H*W) f32 (lanes = H*W)."""
    M = H * W
    f32 = jnp.float32

    wmask = wmask_ref[...]                                # (5, M) {0,1} W-boundary masks

    def conv5x5(a, w_ref, b_ref, relu, residual=None):
        # w_ref: (5, CP, 5*CP) with w_ref[kw][co, kh*CP + ci] = w[kh, kw, ci, co]
        marg = 2 * W + 2                                  # covers shifts up to +-(2W+2)
        z = jnp.zeros((CP, marg), f32)
        ap = jnp.concatenate([z, a, z], axis=1)           # (CP, M + 2*marg), zero margins
        acc = jnp.zeros((CP, M), f32)
        for kw in range(5):
            wins = []
            for kh in range(5):
                s = marg + (kh - 2) * W + (kw - 2)        # static lane offset
                wins.append(ap[:, s:s + M])               # (CP, M) shifted window
            stacked = jnp.concatenate(wins, axis=0)       # (5*CP, M)  in-VMEM "im2col"
            part = jnp.dot(w_ref[kw], stacked,            # (CP, M), default MXU precision
                           preferred_element_type=f32)
            acc = acc + part * wmask[kw:kw + 1, :]        # zero the wrapped-W columns
        acc = acc + b_ref[...]
        if residual is not None:
            acc = acc + residual
        if relu:
            acc = jnp.maximum(acc, 0.0)
        return acc

    # ---- conv1: depthwise (9,1) conv along H + bias + ReLU (pure VPU, exact f32) ----
    x = x_ref[...]                                        # (CP, M)
    marg = 4 * W
    z = jnp.zeros((CP, marg), f32)
    xp = jnp.concatenate([z, x, z], axis=1)               # (CP, M + 8*W)
    wdw = wdw_ref[...]                                    # (CP, 9)
    acc = jnp.zeros((CP, M), f32)
    for k in range(9):                                    # tap k -> row shift (k-4)
        acc = acc + xp[:, k * W:k * W + M] * wdw[:, k:k + 1]
    h = jnp.maximum(acc + bdw_ref[...], 0.0)

    # ---- block1: conv5x5 -> ReLU -> conv5x5 -> (+identity) -> ReLU ----
    a1 = conv5x5(h, w11_ref, b11_ref, relu=True)
    o1 = conv5x5(a1, w12_ref, b12_ref, relu=True, residual=h)

    # ---- block2: conv5x5 -> ReLU -> conv5x5 -> (+ fused 1x1 resample of o1) -> ReLU ----
    c1 = conv5x5(o1, w21_ref, b21_ref, relu=True)
    r = jnp.dot(wr_ref[...], o1, preferred_element_type=f32) + br_ref[...]
    o2 = conv5x5(c1, w22_ref, b22_ref, relu=True, residual=r)

    o_ref[...] = o2.astype(o_ref.dtype)


# ------------------------------ host-side wrapper ---------------------------------------
def _round_up(x, m):
    return ((x + m - 1) // m) * m


def _slab5(w_hwio, CP):
    """(5,5,Cin,Cout) -> (5, CP, 5*CP) with slab[kw, co, kh*CP + ci] = w[kh, kw, ci, co]."""
    KH, KW, Cin, Cout = w_hwio.shape
    wp = jnp.zeros((KH, KW, CP, CP), jnp.float32).at[:, :, :Cin, :Cout].set(w_hwio)
    return jnp.transpose(wp, (1, 3, 0, 2)).reshape(KW, CP, KH * CP)


def _col(b, CP):
    return jnp.zeros((CP, 1), jnp.float32).at[:b.shape[0], 0].set(b)


@jax.jit
def ht_conv_forward(x_nchw, p):
    N, Cin, H, W = x_nchw.shape
    Cout = p["w21"].shape[-1]
    CP = _round_up(max(Cin, Cout, 8), 8)                  # pad channels to full sublanes
    M = H * W

    # cheap layout / weight prep (tiny tensors); all heavy math stays inside the kernel
    x = jnp.pad(x_nchw.reshape(N, Cin, M), ((0, 0), (0, CP - Cin), (0, 0)))   # (N, CP, M)

    wdw = jnp.zeros((CP, 9), jnp.float32).at[:Cin, :].set(p["w_dw"].T)        # (CP, 9)
    bdw = _col(p["b_dw"], CP)
    w11 = _slab5(p["w11"], CP); b11 = _col(p["b11"], CP)
    w12 = _slab5(p["w12"], CP); b12 = _col(p["b12"], CP)
    w21 = _slab5(p["w21"], CP); b21 = _col(p["b21"], CP)
    w22 = _slab5(p["w22"], CP); b22 = _col(p["b22"], CP)
    wr = jnp.zeros((CP, CP), jnp.float32).at[:Cout, :Cin].set(p["wr"][0, 0].T)  # (co, ci)
    br = _col(p["br"], CP)

    # W-boundary validity masks (one per kw offset); H boundaries are handled by the
    # zero margins of the flattened activation inside the kernel.
    wcol = np.arange(M) % W
    wmask = jnp.asarray(np.stack(
        [((wcol + kw - 2 >= 0) & (wcol + kw - 2 < W)).astype(np.float32)
         for kw in range(5)]))                                                # (5, M)

    kern = functools.partial(_ht_conv_kernel, H=H, W=W, CP=CP)

    def full(shape):
        nd = len(shape)
        return pl.BlockSpec(shape, lambda n: (0,) * nd)

    out = pl.pallas_call(
        kern,
        out_shape=jax.ShapeDtypeStruct((N, CP, M), jnp.float32),
        grid=(N,),
        in_specs=[
            pl.BlockSpec((pl.Squeezed(), CP, M), lambda n: (n, 0, 0)),   # x (per image)
            full((CP, 9)), full((CP, 1)),                                # depthwise w, b
            full((5, CP, 5 * CP)), full((CP, 1)),                        # block1.conv1
            full((5, CP, 5 * CP)), full((CP, 1)),                        # block1.conv2
            full((5, CP, 5 * CP)), full((CP, 1)),                        # block2.conv1
            full((5, CP, 5 * CP)), full((CP, 1)),                        # block2.conv2
            full((CP, CP)), full((CP, 1)),                               # block2.resample
            full((5, M)),                                                # W-boundary masks
        ],
        out_specs=pl.BlockSpec((pl.Squeezed(), CP, M), lambda n: (n, 0, 0)),
        compiler_params=pltpu.CompilerParams(dimension_semantics=("parallel",)),
    )(x, wdw, bdw, w11, b11, w12, b12, w21, b21, w22, b22, wr, br, wmask)

    # (N, CP, M) -> (N, Cout, H, W): pure reshape/slice, no transpose.
    return out[:, :Cout, :].reshape(N, Cout, H, W)


# ----------------------------- deterministic parameter init ----------------------------
def init_params(inplanes, outplanes, key):
    ks = jax.random.split(key, 6)

    def kaiming(k, KH, KW, Cin, Cout):            # kaiming_normal_ (fan_out, relu), zero bias
        std = float(np.sqrt(2.0 / (Cout * KH * KW)))
        return std * jax.random.normal(k, (KH, KW, Cin, Cout), jnp.float32)

    # deterministic analogue of laplacian_init: Gaussian 2nd-derivative along H, normalized.
    KH = 9
    t = np.arange(KH, dtype=np.float64) - (KH - 1) // 2
    rows = []
    for c in range(inplanes):
        sigma = 1.0 + 2.0 * (c / max(inplanes - 1, 1))       # deterministic stand-in for U[1,3]
        g2 = (t ** 2 - sigma ** 2) / sigma ** 4 * np.exp(-t ** 2 / (2.0 * sigma ** 2))
        rows.append(-g2 / np.sum(np.abs(g2)))
    w_dw = jnp.asarray(np.stack(rows, axis=-1), jnp.float32)                  # (9, inplanes)

    return dict(
        w_dw=w_dw, b_dw=jnp.zeros((inplanes,), jnp.float32),
        w11=kaiming(ks[0], 5, 5, inplanes, inplanes), b11=jnp.zeros((inplanes,), jnp.float32),
        w12=kaiming(ks[1], 5, 5, inplanes, inplanes), b12=jnp.zeros((inplanes,), jnp.float32),
        w21=kaiming(ks[2], 5, 5, inplanes, outplanes), b21=jnp.zeros((outplanes,), jnp.float32),
        w22=kaiming(ks[3], 5, 5, outplanes, outplanes), b22=jnp.zeros((outplanes,), jnp.float32),
        # block2.resample keeps PyTorch default init (not zeroed) -> deterministic random here
        wr=(1.0 / np.sqrt(inplanes))
        * jax.random.normal(ks[4], (1, 1, inplanes, outplanes), jnp.float32),
        br=0.05 * jax.random.normal(ks[5], (outplanes,), jnp.float32),
    )


# ------------------------------ pure-JAX reference (for check) -------------------------
def ref_forward(x_nchw, p):
    x = jnp.transpose(x_nchw, (0, 2, 3, 1))
    dn = ("NHWC", "HWIO", "NHWC")

    def conv(x, w, b, pad, groups=1):
        y = jax.lax.conv_general_dilated(
            x, w, (1, 1), pad, dimension_numbers=dn, feature_group_count=groups,
            precision=jax.lax.Precision.HIGHEST)
        return y + b

    C = x.shape[-1]
    h = jax.nn.relu(conv(x, p["w_dw"].reshape(9, 1, 1, C), p["b_dw"],
                         [(4, 4), (0, 0)], groups=C))
    a = jax.nn.relu(conv(h, p["w11"], p["b11"], [(2, 2), (2, 2)]))
    o1 = jax.nn.relu(conv(a, p["w12"], p["b12"], [(2, 2), (2, 2)]) + h)
    c = jax.nn.relu(conv(o1, p["w21"], p["b21"], [(2, 2), (2, 2)]))
    r = conv(o1, p["wr"], p["br"], [(0, 0), (0, 0)])
    o2 = jax.nn.relu(conv(c, p["w22"], p["b22"], [(2, 2), (2, 2)]) + r)
    return jnp.transpose(o2, (0, 3, 1, 2))


if __name__ == "__main__":
    inplanes, outplanes = 4, 8
    key = jax.random.PRNGKey(0)
    kx, kp = jax.random.split(key)
    x = jax.random.normal(kx, (2, inplanes, 16, 16), jnp.float32)   # NCHW, like PyTorch
    params = init_params(inplanes, outplanes, kp)

    out = jax.block_until_ready(ht_conv_forward(x, params))
    ref = jax.block_until_ready(ref_forward(x, params))

    assert out.shape == (2, outplanes, 16, 16), out.shape
    # Kernel matmuls run at default MXU precision (single bf16 pass worst case) versus the
    # HIGHEST-precision f32 reference, hence the slightly relaxed tolerance.
    np.testing.assert_allclose(np.asarray(out), np.asarray(ref), rtol=2e-2, atol=2e-2)
    print("KERNEL_OK")
</pallas_src>

<mosaic_0001>
module attributes {stable_mosaic.version = 11 : i64} {
  func.func @_ht_conv_kernel(%arg0: i32, %arg1: memref<1x8x256xf32, #tpu.memory_space<vmem>>, %arg2: memref<8x9xf32, #tpu.memory_space<vmem>>, %arg3: memref<8x1xf32, #tpu.memory_space<vmem>>, %arg4: memref<5x8x40xf32, #tpu.memory_space<vmem>>, %arg5: memref<8x1xf32, #tpu.memory_space<vmem>>, %arg6: memref<5x8x40xf32, #tpu.memory_space<vmem>>, %arg7: memref<8x1xf32, #tpu.memory_space<vmem>>, %arg8: memref<5x8x40xf32, #tpu.memory_space<vmem>>, %arg9: memref<8x1xf32, #tpu.memory_space<vmem>>, %arg10: memref<5x8x40xf32, #tpu.memory_space<vmem>>, %arg11: memref<8x1xf32, #tpu.memory_space<vmem>>, %arg12: memref<8x8xf32, #tpu.memory_space<vmem>>, %arg13: memref<8x1xf32, #tpu.memory_space<vmem>>, %arg14: memref<5x256xf32, #tpu.memory_space<vmem>>, %arg15: memref<1x8x256xf32, #tpu.memory_space<vmem>>) attributes {dimension_semantics = [#tpu.dimension_semantics<parallel>], iteration_bounds = array<i64: 2>, scalar_prefetch = 0 : i64, scratch_operands = 0 : i64, tpu.core_type = #tpu.core_type<tc>, window_params = [{transform_indices = @transform_0, window_bounds = array<i64: 1, 8, 256>}, {pipeline_mode = #tpu.pipeline_mode<synchronous>, transform_indices = @transform_1, window_bounds = array<i64: 8, 9>}, {pipeline_mode = #tpu.pipeline_mode<synchronous>, transform_indices = @transform_2, window_bounds = array<i64: 8, 1>}, {pipeline_mode = #tpu.pipeline_mode<synchronous>, transform_indices = @transform_3, window_bounds = array<i64: 5, 8, 40>}, {pipeline_mode = #tpu.pipeline_mode<synchronous>, transform_indices = @transform_4, window_bounds = array<i64: 8, 1>}, {pipeline_mode = #tpu.pipeline_mode<synchronous>, transform_indices = @transform_5, window_bounds = array<i64: 5, 8, 40>}, {pipeline_mode = #tpu.pipeline_mode<synchronous>, transform_indices = @transform_6, window_bounds = array<i64: 8, 1>}, {pipeline_mode = #tpu.pipeline_mode<synchronous>, transform_indices = @transform_7, window_bounds = array<i64: 5, 8, 40>}, {pipeline_mode = #tpu.pipeline_mode<synchronous>, transform_indices = @transform_8, window_bounds = array<i64: 8, 1>}, {pipeline_mode = #tpu.pipeline_mode<synchronous>, transform_indices = @transform_9, window_bounds = array<i64: 5, 8, 40>}, {pipeline_mode = #tpu.pipeline_mode<synchronous>, transform_indices = @transform_10, window_bounds = array<i64: 8, 1>}, {pipeline_mode = #tpu.pipeline_mode<synchronous>, transform_indices = @transform_11, window_bounds = array<i64: 8, 8>}, {pipeline_mode = #tpu.pipeline_mode<synchronous>, transform_indices = @transform_12, window_bounds = array<i64: 8, 1>}, {pipeline_mode = #tpu.pipeline_mode<synchronous>, transform_indices = @transform_13, window_bounds = array<i64: 5, 256>}, {transform_indices = @transform_14, window_bounds = array<i64: 1, 8, 256>}]} {
    %c0 = arith.constant 0 : index
    %c0_0 = arith.constant 0 : index
    %0 = vector.load %arg14[%c0, %c0_0] : memref<5x256xf32, #tpu.memory_space<vmem>>, vector<5x256xf32>
    %c0_1 = arith.constant 0 : index
    %c0_2 = arith.constant 0 : index
    %c0_3 = arith.constant 0 : index
    %1 = vector.load %arg1[%c0_1, %c0_2, %c0_3] : memref<1x8x256xf32, #tpu.memory_space<vmem>>, vector<1x8x256xf32>
    %2 = vector.shape_cast %1 : vector<1x8x256xf32> to vector<8x256xf32>
    %cst = arith.constant 0.000000e+00 : f32
    %3 = vector.broadcast %cst : f32 to vector<8x64xf32>
    %4 = tpu.concatenate %3, %2, %3 in 1 : vector<8x64xf32>, vector<8x256xf32>, vector<8x64xf32> -> vector<8x384xf32>
    %c0_4 = arith.constant 0 : index
    %c0_5 = arith.constant 0 : index
    %5 = vector.load %arg2[%c0_4, %c0_5] : memref<8x9xf32, #tpu.memory_space<vmem>>, vector<8x9xf32>
    %cst_6 = arith.constant 0.000000e+00 : f32
    %6 = vector.broadcast %cst_6 : f32 to vector<8x256xf32>
    %7 = vector.extract_strided_slice %4 {offsets = [0, 0], sizes = [8, 256], strides = [1, 1]} : vector<8x384xf32> to vector<8x256xf32>
    %8 = vector.extract_strided_slice %5 {offsets = [0, 0], sizes = [8, 1], strides = [1, 1]} : vector<8x9xf32> to vector<8x1xf32>
    %9 = vector.broadcast %8 : vector<8x1xf32> to vector<8x256xf32>
    %10 = arith.mulf %7, %9 : vector<8x256xf32>
    %11 = arith.addf %6, %10 : vector<8x256xf32>
    %12 = vector.extract_strided_slice %4 {offsets = [0, 16], sizes = [8, 256], strides = [1, 1]} : vector<8x384xf32> to vector<8x256xf32>
    %13 = vector.extract_strided_slice %5 {offsets = [0, 1], sizes = [8, 1], strides = [1, 1]} : vector<8x9xf32> to vector<8x1xf32>
    %14 = vector.broadcast %13 : vector<8x1xf32> to vector<8x256xf32>
    %15 = arith.mulf %12, %14 : vector<8x256xf32>
    %16 = arith.addf %11, %15 : vector<8x256xf32>
    %17 = vector.extract_strided_slice %4 {offsets = [0, 32], sizes = [8, 256], strides = [1, 1]} : vector<8x384xf32> to vector<8x256xf32>
    %18 = vector.extract_strided_slice %5 {offsets = [0, 2], sizes = [8, 1], strides = [1, 1]} : vector<8x9xf32> to vector<8x1xf32>
    %19 = vector.broadcast %18 : vector<8x1xf32> to vector<8x256xf32>
    %20 = arith.mulf %17, %19 : vector<8x256xf32>
    %21 = arith.addf %16, %20 : vector<8x256xf32>
    %22 = vector.extract_strided_slice %4 {offsets = [0, 48], sizes = [8, 256], strides = [1, 1]} : vector<8x384xf32> to vector<8x256xf32>
    %23 = vector.extract_strided_slice %5 {offsets = [0, 3], sizes = [8, 1], strides = [1, 1]} : vector<8x9xf32> to vector<8x1xf32>
    %24 = vector.broadcast %23 : vector<8x1xf32> to vector<8x256xf32>
    %25 = arith.mulf %22, %24 : vector<8x256xf32>
    %26 = arith.addf %21, %25 : vector<8x256xf32>
    %27 = vector.extract_strided_slice %4 {offsets = [0, 64], sizes = [8, 256], strides = [1, 1]} : vector<8x384xf32> to vector<8x256xf32>
    %28 = vector.extract_strided_slice %5 {offsets = [0, 4], sizes = [8, 1], strides = [1, 1]} : vector<8x9xf32> to vector<8x1xf32>
    %29 = vector.broadcast %28 : vector<8x1xf32> to vector<8x256xf32>
    %30 = arith.mulf %27, %29 : vector<8x256xf32>
    %31 = arith.addf %26, %30 : vector<8x256xf32>
    %32 = vector.extract_strided_slice %4 {offsets = [0, 80], sizes = [8, 256], strides = [1, 1]} : vector<8x384xf32> to vector<8x256xf32>
    %33 = vector.extract_strided_slice %5 {offsets = [0, 5], sizes = [8, 1], strides = [1, 1]} : vector<8x9xf32> to vector<8x1xf32>
    %34 = vector.broadcast %33 : vector<8x1xf32> to vector<8x256xf32>
    %35 = arith.mulf %32, %34 : vector<8x256xf32>
    %36 = arith.addf %31, %35 : vector<8x256xf32>
    %37 = vector.extract_strided_slice %4 {offsets = [0, 96], sizes = [8, 256], strides = [1, 1]} : vector<8x384xf32> to vector<8x256xf32>
    %38 = vector.extract_strided_slice %5 {offsets = [0, 6], sizes = [8, 1], strides = [1, 1]} : vector<8x9xf32> to vector<8x1xf32>
    %39 = vector.broadcast %38 : vector<8x1xf32> to vector<8x256xf32>
    %40 = arith.mulf %37, %39 : vector<8x256xf32>
    %41 = arith.addf %36, %40 : vector<8x256xf32>
    %42 = vector.extract_strided_slice %4 {offsets = [0, 112], sizes = [8, 256], strides = [1, 1]} : vector<8x384xf32> to vector<8x256xf32>
    %43 = vector.extract_strided_slice %5 {offsets = [0, 7], sizes = [8, 1], strides = [1, 1]} : vector<8x9xf32> to vector<8x1xf32>
    %44 = vector.broadcast %43 : vector<8x1xf32> to vector<8x256xf32>
    %45 = arith.mulf %42, %44 : vector<8x256xf32>
    %46 = arith.addf %41, %45 : vector<8x256xf32>
    %47 = vector.extract_strided_slice %4 {offsets = [0, 128], sizes = [8, 256], strides = [1, 1]} : vector<8x384xf32> to vector<8x256xf32>
    %48 = vector.extract_strided_slice %5 {offsets = [0, 8], sizes = [8, 1], strides = [1, 1]} : vector<8x9xf32> to vector<8x1xf32>
    %49 = vector.broadcast %48 : vector<8x1xf32> to vector<8x256xf32>
    %50 = arith.mulf %47, %49 : vector<8x256xf32>
    %51 = arith.addf %46, %50 : vector<8x256xf32>
    %c0_7 = arith.constant 0 : index
    %c0_8 = arith.constant 0 : index
    %52 = vector.load %arg3[%c0_7, %c0_8] : memref<8x1xf32, #tpu.memory_space<vmem>>, vector<8x1xf32>
    %53 = vector.broadcast %52 : vector<8x1xf32> to vector<8x256xf32>
    %54 = arith.addf %51, %53 : vector<8x256xf32>
    %cst_9 = arith.constant 0.000000e+00 : f32
    %55 = vector.broadcast %cst_9 : f32 to vector<8x256xf32>
    %56 = arith.maximumf %54, %55 : vector<8x256xf32>
    %cst_10 = arith.constant 0.000000e+00 : f32
    %57 = vector.broadcast %cst_10 : f32 to vector<8x34xf32>
    %58 = tpu.concatenate %57, %56, %57 in 1 : vector<8x34xf32>, vector<8x256xf32>, vector<8x34xf32> -> vector<8x324xf32>
    %cst_11 = arith.constant 0.000000e+00 : f32
    %59 = vector.broadcast %cst_11 : f32 to vector<8x256xf32>
    %60 = vector.extract_strided_slice %58 {offsets = [0, 0], sizes = [8, 256], strides = [1, 1]} : vector<8x324xf32> to vector<8x256xf32>
    %61 = vector.extract_strided_slice %58 {offsets = [0, 16], sizes = [8, 256], strides = [1, 1]} : vector<8x324xf32> to vector<8x256xf32>
    %62 = vector.extract_strided_slice %58 {offsets = [0, 32], sizes = [8, 256], strides = [1, 1]} : vector<8x324xf32> to vector<8x256xf32>
    %63 = vector.extract_strided_slice %58 {offsets = [0, 48], sizes = [8, 256], strides = [1, 1]} : vector<8x324xf32> to vector<8x256xf32>
    %64 = vector.extract_strided_slice %58 {offsets = [0, 64], sizes = [8, 256], strides = [1, 1]} : vector<8x324xf32> to vector<8x256xf32>
    %65 = tpu.concatenate %60, %61, %62, %63, %64 in 0 : vector<8x256xf32>, vector<8x256xf32>, vector<8x256xf32>, vector<8x256xf32>, vector<8x256xf32> -> vector<40x256xf32>
    %c0_12 = arith.constant 0 : index
    %c0_13 = arith.constant 0 : index
    %c0_14 = arith.constant 0 : index
    %66 = vector.load %arg4[%c0_12, %c0_13, %c0_14] : memref<5x8x40xf32, #tpu.memory_space<vmem>>, vector<1x8x40xf32>
    %67 = vector.shape_cast %66 : vector<1x8x40xf32> to vector<8x40xf32>
    %cst_15 = arith.constant dense<0.000000e+00> : vector<8x256xf32>
    %68 = tpu.matmul %67, %65, %cst_15 {dimension_numbers = #tpu.dot_dimension_numbers<[1], [0], [0], [1], [0, 0, 1, 1], [], []>} : vector<8x40xf32>, vector<40x256xf32>, vector<8x256xf32> -> vector<8x256xf32>
    %69 = vector.extract_strided_slice %0 {offsets = [0, 0], sizes = [1, 256], strides = [1, 1]} : vector<5x256xf32> to vector<1x256xf32>
    %70 = vector.broadcast %69 : vector<1x256xf32> to vector<8x256xf32>
    %71 = arith.mulf %68, %70 : vector<8x256xf32>
    %72 = arith.addf %59, %71 : vector<8x256xf32>
    %73 = vector.extract_strided_slice %58 {offsets = [0, 1], sizes = [8, 256], strides = [1, 1]} : vector<8x324xf32> to vector<8x256xf32>
    %74 = vector.extract_strided_slice %58 {offsets = [0, 17], sizes = [8, 256], strides = [1, 1]} : vector<8x324xf32> to vector<8x256xf32>
    %75 = vector.extract_strided_slice %58 {offsets = [0, 33], sizes = [8, 256], strides = [1, 1]} : vector<8x324xf32> to vector<8x256xf32>
    %76 = vector.extract_strided_slice %58 {offsets = [0, 49], sizes = [8, 256], strides = [1, 1]} : vector<8x324xf32> to vector<8x256xf32>
    %77 = vector.extract_strided_slice %58 {offsets = [0, 65], sizes = [8, 256], strides = [1, 1]} : vector<8x324xf32> to vector<8x256xf32>
    %78 = tpu.concatenate %73, %74, %75, %76, %77 in 0 : vector<8x256xf32>, vector<8x256xf32>, vector<8x256xf32>, vector<8x256xf32>, vector<8x256xf32> -> vector<40x256xf32>
    %c1 = arith.constant 1 : index
    %c0_16 = arith.constant 0 : index
    %c0_17 = arith.constant 0 : index
    %79 = vector.load %arg4[%c1, %c0_16, %c0_17] : memref<5x8x40xf32, #tpu.memory_space<vmem>>, vector<1x8x40xf32>
    %80 = vector.shape_cast %79 : vector<1x8x40xf32> to vector<8x40xf32>
    %cst_18 = arith.constant dense<0.000000e+00> : vector<8x256xf32>
    %81 = tpu.matmul %80, %78, %cst_18 {dimension_numbers = #tpu.dot_dimension_numbers<[1], [0], [0], [1], [0, 0, 1, 1], [], []>} : vector<8x40xf32>, vector<40x256xf32>, vector<8x256xf32> -> vector<8x256xf32>
    %82 = vector.extract_strided_slice %0 {offsets = [1, 0], sizes = [1, 256], strides = [1, 1]} : vector<5x256xf32> to vector<1x256xf32>
    %83 = vector.broadcast %82 : vector<1x256xf32> to vector<8x256xf32>
    %84 = arith.mulf %81, %83 : vector<8x256xf32>
    %85 = arith.addf %72, %84 : vector<8x256xf32>
    %86 = vector.extract_strided_slice %58 {offsets = [0, 2], sizes = [8, 256], strides = [1, 1]} : vector<8x324xf32> to vector<8x256xf32>
    %87 = vector.extract_strided_slice %58 {offsets = [0, 18], sizes = [8, 256], strides = [1, 1]} : vector<8x324xf32> to vector<8x256xf32>
    %88 = vector.extract_strided_slice %58 {offsets = [0, 34], sizes = [8, 256], strides = [1, 1]} : vector<8x324xf32> to vector<8x256xf32>
    %89 = vector.extract_strided_slice %58 {offsets = [0, 50], sizes = [8, 256], strides = [1, 1]} : vector<8x324xf32> to vector<8x256xf32>
    %90 = vector.extract_strided_slice %58 {offsets = [0, 66], sizes = [8, 256], strides = [1, 1]} : vector<8x324xf32> to vector<8x256xf32>
    %91 = tpu.concatenate %86, %87, %88, %89, %90 in 0 : vector<8x256xf32>, vector<8x256xf32>, vector<8x256xf32>, vector<8x256xf32>, vector<8x256xf32> -> vector<40x256xf32>
    %c2 = arith.constant 2 : index
    %c0_19 = arith.constant 0 : index
    %c0_20 = arith.constant 0 : index
    %92 = vector.load %arg4[%c2, %c0_19, %c0_20] : memref<5x8x40xf32, #tpu.memory_space<vmem>>, vector<1x8x40xf32>
    %93 = vector.shape_cast %92 : vector<1x8x40xf32> to vector<8x40xf32>
    %cst_21 = arith.constant dense<0.000000e+00> : vector<8x256xf32>
    %94 = tpu.matmul %93, %91, %cst_21 {dimension_numbers = #tpu.dot_dimension_numbers<[1], [0], [0], [1], [0, 0, 1, 1], [], []>} : vector<8x40xf32>, vector<40x256xf32>, vector<8x256xf32> -> vector<8x256xf32>
    %95 = vector.extract_strided_slice %0 {offsets = [2, 0], sizes = [1, 256], strides = [1, 1]} : vector<5x256xf32> to vector<1x256xf32>
    %96 = vector.broadcast %95 : vector<1x256xf32> to vector<8x256xf32>
    %97 = arith.mulf %94, %96 : vector<8x256xf32>
    %98 = arith.addf %85, %97 : vector<8x256xf32>
    %99 = vector.extract_strided_slice %58 {offsets = [0, 3], sizes = [8, 256], strides = [1, 1]} : vector<8x324xf32> to vector<8x256xf32>
    %100 = vector.extract_strided_slice %58 {offsets = [0, 19], sizes = [8, 256], strides = [1, 1]} : vector<8x324xf32> to vector<8x256xf32>
    %101 = vector.extract_strided_slice %58 {offsets = [0, 35], sizes = [8, 256], strides = [1, 1]} : vector<8x324xf32> to vector<8x256xf32>
    %102 = vector.extract_strided_slice %58 {offsets = [0, 51], sizes = [8, 256], strides = [1, 1]} : vector<8x324xf32> to vector<8x256xf32>
    %103 = vector.extract_strided_slice %58 {offsets = [0, 67], sizes = [8, 256], strides = [1, 1]} : vector<8x324xf32> to vector<8x256xf32>
    %104 = tpu.concatenate %99, %100, %101, %102, %103 in 0 : vector<8x256xf32>, vector<8x256xf32>, vector<8x256xf32>, vector<8x256xf32>, vector<8x256xf32> -> vector<40x256xf32>
    %c3 = arith.constant 3 : index
    %c0_22 = arith.constant 0 : index
    %c0_23 = arith.constant 0 : index
    %105 = vector.load %arg4[%c3, %c0_22, %c0_23] : memref<5x8x40xf32, #tpu.memory_space<vmem>>, vector<1x8x40xf32>
    %106 = vector.shape_cast %105 : vector<1x8x40xf32> to vector<8x40xf32>
    %cst_24 = arith.constant dense<0.000000e+00> : vector<8x256xf32>
    %107 = tpu.matmul %106, %104, %cst_24 {dimension_numbers = #tpu.dot_dimension_numbers<[1], [0], [0], [1], [0, 0, 1, 1], [], []>} : vector<8x40xf32>, vector<40x256xf32>, vector<8x256xf32> -> vector<8x256xf32>
    %108 = vector.extract_strided_slice %0 {offsets = [3, 0], sizes = [1, 256], strides = [1, 1]} : vector<5x256xf32> to vector<1x256xf32>
    %109 = vector.broadcast %108 : vector<1x256xf32> to vector<8x256xf32>
    %110 = arith.mulf %107, %109 : vector<8x256xf32>
    %111 = arith.addf %98, %110 : vector<8x256xf32>
    %112 = vector.extract_strided_slice %58 {offsets = [0, 4], sizes = [8, 256], strides = [1, 1]} : vector<8x324xf32> to vector<8x256xf32>
    %113 = vector.extract_strided_slice %58 {offsets = [0, 20], sizes = [8, 256], strides = [1, 1]} : vector<8x324xf32> to vector<8x256xf32>
    %114 = vector.extract_strided_slice %58 {offsets = [0, 36], sizes = [8, 256], strides = [1, 1]} : vector<8x324xf32> to vector<8x256xf32>
    %115 = vector.extract_strided_slice %58 {offsets = [0, 52], sizes = [8, 256], strides = [1, 1]} : vector<8x324xf32> to vector<8x256xf32>
    %116 = vector.extract_strided_slice %58 {offsets = [0, 68], sizes = [8, 256], strides = [1, 1]} : vector<8x324xf32> to vector<8x256xf32>
    %117 = tpu.concatenate %112, %113, %114, %115, %116 in 0 : vector<8x256xf32>, vector<8x256xf32>, vector<8x256xf32>, vector<8x256xf32>, vector<8x256xf32> -> vector<40x256xf32>
    %c4 = arith.constant 4 : index
    %c0_25 = arith.constant 0 : index
    %c0_26 = arith.constant 0 : index
    %118 = vector.load %arg4[%c4, %c0_25, %c0_26] : memref<5x8x40xf32, #tpu.memory_space<vmem>>, vector<1x8x40xf32>
    %119 = vector.shape_cast %118 : vector<1x8x40xf32> to vector<8x40xf32>
    %cst_27 = arith.constant dense<0.000000e+00> : vector<8x256xf32>
    %120 = tpu.matmul %119, %117, %cst_27 {dimension_numbers = #tpu.dot_dimension_numbers<[1], [0], [0], [1], [0, 0, 1, 1], [], []>} : vector<8x40xf32>, vector<40x256xf32>, vector<8x256xf32> -> vector<8x256xf32>
    %121 = vector.extract_strided_slice %0 {offsets = [4, 0], sizes = [1, 256], strides = [1, 1]} : vector<5x256xf32> to vector<1x256xf32>
    %122 = vector.broadcast %121 : vector<1x256xf32> to vector<8x256xf32>
    %123 = arith.mulf %120, %122 : vector<8x256xf32>
    %124 = arith.addf %111, %123 : vector<8x256xf32>
    %c0_28 = arith.constant 0 : index
    %c0_29 = arith.constant 0 : index
    %125 = vector.load %arg5[%c0_28, %c0_29] : memref<8x1xf32, #tpu.memory_space<vmem>>, vector<8x1xf32>
    %126 = vector.broadcast %125 : vector<8x1xf32> to vector<8x256xf32>
    %127 = arith.addf %124, %126 : vector<8x256xf32>
    %cst_30 = arith.constant 0.000000e+00 : f32
    %128 = vector.broadcast %cst_30 : f32 to vector<8x256xf32>
    %129 = arith.maximumf %127, %128 : vector<8x256xf32>
    %cst_31 = arith.constant 0.000000e+00 : f32
    %130 = vector.broadcast %cst_31 : f32 to vector<8x34xf32>
    %131 = tpu.concatenate %130, %129, %130 in 1 : vector<8x34xf32>, vector<8x256xf32>, vector<8x34xf32> -> vector<8x324xf32>
    %cst_32 = arith.constant 0.000000e+00 : f32
    %132 = vector.broadcast %cst_32 : f32 to vector<8x256xf32>
    %133 = vector.extract_strided_slice %131 {offsets = [0, 0], sizes = [8, 256], strides = [1, 1]} : vector<8x324xf32> to vector<8x256xf32>
    %134 = vector.extract_strided_slice %131 {offsets = [0, 16], sizes = [8, 256], strides = [1, 1]} : vector<8x324xf32> to vector<8x256xf32>
    %135 = vector.extract_strided_slice %131 {offsets = [0, 32], sizes = [8, 256], strides = [1, 1]} : vector<8x324xf32> to vector<8x256xf32>
    %136 = vector.extract_strided_slice %131 {offsets = [0, 48], sizes = [8, 256], strides = [1, 1]} : vector<8x324xf32> to vector<8x256xf32>
    %137 = vector.extract_strided_slice %131 {offsets = [0, 64], sizes = [8, 256], strides = [1, 1]} : vector<8x324xf32> to vector<8x256xf32>
    %138 = tpu.concatenate %133, %134, %135, %136, %137 in 0 : vector<8x256xf32>, vector<8x256xf32>, vector<8x256xf32>, vector<8x256xf32>, vector<8x256xf32> -> vector<40x256xf32>
    %c0_33 = arith.constant 0 : index
    %c0_34 = arith.constant 0 : index
    %c0_35 = arith.constant 0 : index
    %139 = vector.load %arg6[%c0_33, %c0_34, %c0_35] : memref<5x8x40xf32, #tpu.memory_space<vmem>>, vector<1x8x40xf32>
    %140 = vector.shape_cast %139 : vector<1x8x40xf32> to vector<8x40xf32>
    %cst_36 = arith.constant dense<0.000000e+00> : vector<8x256xf32>
    %141 = tpu.matmul %140, %138, %cst_36 {dimension_numbers = #tpu.dot_dimension_numbers<[1], [0], [0], [1], [0, 0, 1, 1], [], []>} : vector<8x40xf32>, vector<40x256xf32>, vector<8x256xf32> -> vector<8x256xf32>
    %142 = vector.extract_strided_slice %0 {offsets = [0, 0], sizes = [1, 256], strides = [1, 1]} : vector<5x256xf32> to vector<1x256xf32>
    %143 = vector.broadcast %142 : vector<1x256xf32> to vector<8x256xf32>
    %144 = arith.mulf %141, %143 : vector<8x256xf32>
    %145 = arith.addf %132, %144 : vector<8x256xf32>
    %146 = vector.extract_strided_slice %131 {offsets = [0, 1], sizes = [8, 256], strides = [1, 1]} : vector<8x324xf32> to vector<8x256xf32>
    %147 = vector.extract_strided_slice %131 {offsets = [0, 17], sizes = [8, 256], strides = [1, 1]} : vector<8x324xf32> to vector<8x256xf32>
    %148 = vector.extract_strided_slice %131 {offsets = [0, 33], sizes = [8, 256], strides = [1, 1]} : vector<8x324xf32> to vector<8x256xf32>
    %149 = vector.extract_strided_slice %131 {offsets = [0, 49], sizes = [8, 256], strides = [1, 1]} : vector<8x324xf32> to vector<8x256xf32>
    %150 = vector.extract_strided_slice %131 {offsets = [0, 65], sizes = [8, 256], strides = [1, 1]} : vector<8x324xf32> to vector<8x256xf32>
    %151 = tpu.concatenate %146, %147, %148, %149, %150 in 0 : vector<8x256xf32>, vector<8x256xf32>, vector<8x256xf32>, vector<8x256xf32>, vector<8x256xf32> -> vector<40x256xf32>
    %c1_37 = arith.constant 1 : index
    %c0_38 = arith.constant 0 : index
    %c0_39 = arith.constant 0 : index
    %152 = vector.load %arg6[%c1_37, %c0_38, %c0_39] : memref<5x8x40xf32, #tpu.memory_space<vmem>>, vector<1x8x40xf32>
    %153 = vector.shape_cast %152 : vector<1x8x40xf32> to vector<8x40xf32>
    %cst_40 = arith.constant dense<0.000000e+00> : vector<8x256xf32>
    %154 = tpu.matmul %153, %151, %cst_40 {dimension_numbers = #tpu.dot_dimension_numbers<[1], [0], [0], [1], [0, 0, 1, 1], [], []>} : vector<8x40xf32>, vector<40x256xf32>, vector<8x256xf32> -> vector<8x256xf32>
    %155 = vector.extract_strided_slice %0 {offsets = [1, 0], sizes = [1, 256], strides = [1, 1]} : vector<5x256xf32> to vector<1x256xf32>
    %156 = vector.broadcast %155 : vector<1x256xf32> to vector<8x256xf32>
    %157 = arith.mulf %154, %156 : vector<8x256xf32>
    %158 = arith.addf %145, %157 : vector<8x256xf32>
    %159 = vector.extract_strided_slice %131 {offsets = [0, 2], sizes = [8, 256], strides = [1, 1]} : vector<8x324xf32> to vector<8x256xf32>
    %160 = vector.extract_strided_slice %131 {offsets = [0, 18], sizes = [8, 256], strides = [1, 1]} : vector<8x324xf32> to vector<8x256xf32>
    %161 = vector.extract_strided_slice %131 {offsets = [0, 34], sizes = [8, 256], strides = [1, 1]} : vector<8x324xf32> to vector<8x256xf32>
    %162 = vector.extract_strided_slice %131 {offsets = [0, 50], sizes = [8, 256], strides = [1, 1]} : vector<8x324xf32> to vector<8x256xf32>
    %163 = vector.extract_strided_slice %131 {offsets = [0, 66], sizes = [8, 256], strides = [1, 1]} : vector<8x324xf32> to vector<8x256xf32>
    %164 = tpu.concatenate %159, %160, %161, %162, %163 in 0 : vector<8x256xf32>, vector<8x256xf32>, vector<8x256xf32>, vector<8x256xf32>, vector<8x256xf32> -> vector<40x256xf32>
    %c2_41 = arith.constant 2 : index
    %c0_42 = arith.constant 0 : index
    %c0_43 = arith.constant 0 : index
    %165 = vector.load %arg6[%c2_41, %c0_42, %c0_43] : memref<5x8x40xf32, #tpu.memory_space<vmem>>, vector<1x8x40xf32>
    %166 = vector.shape_cast %165 : vector<1x8x40xf32> to vector<8x40xf32>
    %cst_44 = arith.constant dense<0.000000e+00> : vector<8x256xf32>
    %167 = tpu.matmul %166, %164, %cst_44 {dimension_numbers = #tpu.dot_dimension_numbers<[1], [0], [0], [1], [0, 0, 1, 1], [], []>} : vector<8x40xf32>, vector<40x256xf32>, vector<8x256xf32> -> vector<8x256xf32>
    %168 = vector.extract_strided_slice %0 {offsets = [2, 0], sizes = [1, 256], strides = [1, 1]} : vector<5x256xf32> to vector<1x256xf32>
    %169 = vector.broadcast %168 : vector<1x256xf32> to vector<8x256xf32>
    %170 = arith.mulf %167, %169 : vector<8x256xf32>
    %171 = arith.addf %158, %170 : vector<8x256xf32>
    %172 = vector.extract_strided_slice %131 {offsets = [0, 3], sizes = [8, 256], strides = [1, 1]} : vector<8x324xf32> to vector<8x256xf32>
    %173 = vector.extract_strided_slice %131 {offsets = [0, 19], sizes = [8, 256], strides = [1, 1]} : vector<8x324xf32> to vector<8x256xf32>
    %174 = vector.extract_strided_slice %131 {offsets = [0, 35], sizes = [8, 256], strides = [1, 1]} : vector<8x324xf32> to vector<8x256xf32>
    %175 = vector.extract_strided_slice %131 {offsets = [0, 51], sizes = [8, 256], strides = [1, 1]} : vector<8x324xf32> to vector<8x256xf32>
    %176 = vector.extract_strided_slice %131 {offsets = [0, 67], sizes = [8, 256], strides = [1, 1]} : vector<8x324xf32> to vector<8x256xf32>
    %177 = tpu.concatenate %172, %173, %174, %175, %176 in 0 : vector<8x256xf32>, vector<8x256xf32>, vector<8x256xf32>, vector<8x256xf32>, vector<8x256xf32> -> vector<40x256xf32>
    %c3_45 = arith.constant 3 : index
    %c0_46 = arith.constant 0 : index
    %c0_47 = arith.constant 0 : index
    %178 = vector.load %arg6[%c3_45, %c0_46, %c0_47] : memref<5x8x40xf32, #tpu.memory_space<vmem>>, vector<1x8x40xf32>
    %179 = vector.shape_cast %178 : vector<1x8x40xf32> to vector<8x40xf32>
    %cst_48 = arith.constant dense<0.000000e+00> : vector<8x256xf32>
    %180 = tpu.matmul %179, %177, %cst_48 {dimension_numbers = #tpu.dot_dimension_numbers<[1], [0], [0], [1], [0, 0, 1, 1], [], []>} : vector<8x40xf32>, vector<40x256xf32>, vector<8x256xf32> -> vector<8x256xf32>
    %181 = vector.extract_strided_slice %0 {offsets = [3, 0], sizes = [1, 256], strides = [1, 1]} : vector<5x256xf32> to vector<1x256xf32>
    %182 = vector.broadcast %181 : vector<1x256xf32> to vector<8x256xf32>
    %183 = arith.mulf %180, %182 : vector<8x256xf32>
    %184 = arith.addf %171, %183 : vector<8x256xf32>
    %185 = vector.extract_strided_slice %131 {offsets = [0, 4], sizes = [8, 256], strides = [1, 1]} : vector<8x324xf32> to vector<8x256xf32>
    %186 = vector.extract_strided_slice %131 {offsets = [0, 20], sizes = [8, 256], strides = [1, 1]} : vector<8x324xf32> to vector<8x256xf32>
    %187 = vector.extract_strided_slice %131 {offsets = [0, 36], sizes = [8, 256], strides = [1, 1]} : vector<8x324xf32> to vector<8x256xf32>
    %188 = vector.extract_strided_slice %131 {offsets = [0, 52], sizes = [8, 256], strides = [1, 1]} : vector<8x324xf32> to vector<8x256xf32>
    %189 = vector.extract_strided_slice %131 {offsets = [0, 68], sizes = [8, 256], strides = [1, 1]} : vector<8x324xf32> to vector<8x256xf32>
    %190 = tpu.concatenate %185, %186, %187, %188, %189 in 0 : vector<8x256xf32>, vector<8x256xf32>, vector<8x256xf32>, vector<8x256xf32>, vector<8x256xf32> -> vector<40x256xf32>
    %c4_49 = arith.constant 4 : index
    %c0_50 = arith.constant 0 : index
    %c0_51 = arith.constant 0 : index
    %191 = vector.load %arg6[%c4_49, %c0_50, %c0_51] : memref<5x8x40xf32, #tpu.memory_space<vmem>>, vector<1x8x40xf32>
    %192 = vector.shape_cast %191 : vector<1x8x40xf32> to vector<8x40xf32>
    %cst_52 = arith.constant dense<0.000000e+00> : vector<8x256xf32>
    %193 = tpu.matmul %192, %190, %cst_52 {dimension_numbers = #tpu.dot_dimension_numbers<[1], [0], [0], [1], [0, 0, 1, 1], [], []>} : vector<8x40xf32>, vector<40x256xf32>, vector<8x256xf32> -> vector<8x256xf32>
    %194 = vector.extract_strided_slice %0 {offsets = [4, 0], sizes = [1, 256], strides = [1, 1]} : vector<5x256xf32> to vector<1x256xf32>
    %195 = vector.broadcast %194 : vector<1x256xf32> to vector<8x256xf32>
    %196 = arith.mulf %193, %195 : vector<8x256xf32>
    %197 = arith.addf %184, %196 : vector<8x256xf32>
    %c0_53 = arith.constant 0 : index
    %c0_54 = arith.constant 0 : index
    %198 = vector.load %arg7[%c0_53, %c0_54] : memref<8x1xf32, #tpu.memory_space<vmem>>, vector<8x1xf32>
    %199 = vector.broadcast %198 : vector<8x1xf32> to vector<8x256xf32>
    %200 = arith.addf %197, %199 : vector<8x256xf32>
    %201 = arith.addf %200, %56 : vector<8x256xf32>
    %cst_55 = arith.constant 0.000000e+00 : f32
    %202 = vector.broadcast %cst_55 : f32 to vector<8x256xf32>
    %203 = arith.maximumf %201, %202 : vector<8x256xf32>
    %cst_56 = arith.constant 0.000000e+00 : f32
    %204 = vector.broadcast %cst_56 : f32 to vector<8x34xf32>
    %205 = tpu.concatenate %204, %203, %204 in 1 : vector<8x34xf32>, vector<8x256xf32>, vector<8x34xf32> -> vector<8x324xf32>
    %cst_57 = arith.constant 0.000000e+00 : f32
    %206 = vector.broadcast %cst_57 : f32 to vector<8x256xf32>
    %207 = vector.extract_strided_slice %205 {offsets = [0, 0], sizes = [8, 256], strides = [1, 1]} : vector<8x324xf32> to vector<8x256xf32>
    %208 = vector.extract_strided_slice %205 {offsets = [0, 16], sizes = [8, 256], strides = [1, 1]} : vector<8x324xf32> to vector<8x256xf32>
    %209 = vector.extract_strided_slice %205 {offsets = [0, 32], sizes = [8, 256], strides = [1, 1]} : vector<8x324xf32> to vector<8x256xf32>
    %210 = vector.extract_strided_slice %205 {offsets = [0, 48], sizes = [8, 256], strides = [1, 1]} : vector<8x324xf32> to vector<8x256xf32>
    %211 = vector.extract_strided_slice %205 {offsets = [0, 64], sizes = [8, 256], strides = [1, 1]} : vector<8x324xf32> to vector<8x256xf32>
    %212 = tpu.concatenate %207, %208, %209, %210, %211 in 0 : vector<8x256xf32>, vector<8x256xf32>, vector<8x256xf32>, vector<8x256xf32>, vector<8x256xf32> -> vector<40x256xf32>
    %c0_58 = arith.constant 0 : index
    %c0_59 = arith.constant 0 : index
    %c0_60 = arith.constant 0 : index
    %213 = vector.load %arg8[%c0_58, %c0_59, %c0_60] : memref<5x8x40xf32, #tpu.memory_space<vmem>>, vector<1x8x40xf32>
    %214 = vector.shape_cast %213 : vector<1x8x40xf32> to vector<8x40xf32>
    %cst_61 = arith.constant dense<0.000000e+00> : vector<8x256xf32>
    %215 = tpu.matmul %214, %212, %cst_61 {dimension_numbers = #tpu.dot_dimension_numbers<[1], [0], [0], [1], [0, 0, 1, 1], [], []>} : vector<8x40xf32>, vector<40x256xf32>, vector<8x256xf32> -> vector<8x256xf32>
    %216 = vector.extract_strided_slice %0 {offsets = [0, 0], sizes = [1, 256], strides = [1, 1]} : vector<5x256xf32> to vector<1x256xf32>
    %217 = vector.broadcast %216 : vector<1x256xf32> to vector<8x256xf32>
    %218 = arith.mulf %215, %217 : vector<8x256xf32>
    %219 = arith.addf %206, %218 : vector<8x256xf32>
    %220 = vector.extract_strided_slice %205 {offsets = [0, 1], sizes = [8, 256], strides = [1, 1]} : vector<8x324xf32> to vector<8x256xf32>
    %221 = vector.extract_strided_slice %205 {offsets = [0, 17], sizes = [8, 256], strides = [1, 1]} : vector<8x324xf32> to vector<8x256xf32>
    %222 = vector.extract_strided_slice %205 {offsets = [0, 33], sizes = [8, 256], strides = [1, 1]} : vector<8x324xf32> to vector<8x256xf32>
    %223 = vector.extract_strided_slice %205 {offsets = [0, 49], sizes = [8, 256], strides = [1, 1]} : vector<8x324xf32> to vector<8x256xf32>
    %224 = vector.extract_strided_slice %205 {offsets = [0, 65], sizes = [8, 256], strides = [1, 1]} : vector<8x324xf32> to vector<8x256xf32>
    %225 = tpu.concatenate %220, %221, %222, %223, %224 in 0 : vector<8x256xf32>, vector<8x256xf32>, vector<8x256xf32>, vector<8x256xf32>, vector<8x256xf32> -> vector<40x256xf32>
    %c1_62 = arith.constant 1 : index
    %c0_63 = arith.constant 0 : index
    %c0_64 = arith.constant 0 : index
    %226 = vector.load %arg8[%c1_62, %c0_63, %c0_64] : memref<5x8x40xf32, #tpu.memory_space<vmem>>, vector<1x8x40xf32>
    %227 = vector.shape_cast %226 : vector<1x8x40xf32> to vector<8x40xf32>
    %cst_65 = arith.constant dense<0.000000e+00> : vector<8x256xf32>
    %228 = tpu.matmul %227, %225, %cst_65 {dimension_numbers = #tpu.dot_dimension_numbers<[1], [0], [0], [1], [0, 0, 1, 1], [], []>} : vector<8x40xf32>, vector<40x256xf32>, vector<8x256xf32> -> vector<8x256xf32>
    %229 = vector.extract_strided_slice %0 {offsets = [1, 0], sizes = [1, 256], strides = [1, 1]} : vector<5x256xf32> to vector<1x256xf32>
    %230 = vector.broadcast %229 : vector<1x256xf32> to vector<8x256xf32>
    %231 = arith.mulf %228, %230 : vector<8x256xf32>
    %232 = arith.addf %219, %231 : vector<8x256xf32>
    %233 = vector.extract_strided_slice %205 {offsets = [0, 2], sizes = [8, 256], strides = [1, 1]} : vector<8x324xf32> to vector<8x256xf32>
    %234 = vector.extract_strided_slice %205 {offsets = [0, 18], sizes = [8, 256], strides = [1, 1]} : vector<8x324xf32> to vector<8x256xf32>
    %235 = vector.extract_strided_slice %205 {offsets = [0, 34], sizes = [8, 256], strides = [1, 1]} : vector<8x324xf32> to vector<8x256xf32>
    %236 = vector.extract_strided_slice %205 {offsets = [0, 50], sizes = [8, 256], strides = [1, 1]} : vector<8x324xf32> to vector<8x256xf32>
    %237 = vector.extract_strided_slice %205 {offsets = [0, 66], sizes = [8, 256], strides = [1, 1]} : vector<8x324xf32> to vector<8x256xf32>
    %238 = tpu.concatenate %233, %234, %235, %236, %237 in 0 : vector<8x256xf32>, vector<8x256xf32>, vector<8x256xf32>, vector<8x256xf32>, vector<8x256xf32> -> vector<40x256xf32>
    %c2_66 = arith.constant 2 : index
    %c0_67 = arith.constant 0 : index
    %c0_68 = arith.constant 0 : index
    %239 = vector.load %arg8[%c2_66, %c0_67, %c0_68] : memref<5x8x40xf32, #tpu.memory_space<vmem>>, vector<1x8x40xf32>
    %240 = vector.shape_cast %239 : vector<1x8x40xf32> to vector<8x40xf32>
    %cst_69 = arith.constant dense<0.000000e+00> : vector<8x256xf32>
    %241 = tpu.matmul %240, %238, %cst_69 {dimension_numbers = #tpu.dot_dimension_numbers<[1], [0], [0], [1], [0, 0, 1, 1], [], []>} : vector<8x40xf32>, vector<40x256xf32>, vector<8x256xf32> -> vector<8x256xf32>
    %242 = vector.extract_strided_slice %0 {offsets = [2, 0], sizes = [1, 256], strides = [1, 1]} : vector<5x256xf32> to vector<1x256xf32>
    %243 = vector.broadcast %242 : vector<1x256xf32> to vector<8x256xf32>
    %244 = arith.mulf %241, %243 : vector<8x256xf32>
    %245 = arith.addf %232, %244 : vector<8x256xf32>
    %246 = vector.extract_strided_slice %205 {offsets = [0, 3], sizes = [8, 256], strides = [1, 1]} : vector<8x324xf32> to vector<8x256xf32>
    %247 = vector.extract_strided_slice %205 {offsets = [0, 19], sizes = [8, 256], strides = [1, 1]} : vector<8x324xf32> to vector<8x256xf32>
    %248 = vector.extract_strided_slice %205 {offsets = [0, 35], sizes = [8, 256], strides = [1, 1]} : vector<8x324xf32> to vector<8x256xf32>
    %249 = vector.extract_strided_slice %205 {offsets = [0, 51], sizes = [8, 256], strides = [1, 1]} : vector<8x324xf32> to vector<8x256xf32>
    %250 = vector.extract_strided_slice %205 {offsets = [0, 67], sizes = [8, 256], strides = [1, 1]} : vector<8x324xf32> to vector<8x256xf32>
    %251 = tpu.concatenate %246, %247, %248, %249, %250 in 0 : vector<8x256xf32>, vector<8x256xf32>, vector<8x256xf32>, vector<8x256xf32>, vector<8x256xf32> -> vector<40x256xf32>
    %c3_70 = arith.constant 3 : index
    %c0_71 = arith.constant 0 : index
    %c0_72 = arith.constant 0 : index
    %252 = vector.load %arg8[%c3_70, %c0_71, %c0_72] : memref<5x8x40xf32, #tpu.memory_space<vmem>>, vector<1x8x40xf32>
    %253 = vector.shape_cast %252 : vector<1x8x40xf32> to vector<8x40xf32>
    %cst_73 = arith.constant dense<0.000000e+00> : vector<8x256xf32>
    %254 = tpu.matmul %253, %251, %cst_73 {dimension_numbers = #tpu.dot_dimension_numbers<[1], [0], [0], [1], [0, 0, 1, 1], [], []>} : vector<8x40xf32>, vector<40x256xf32>, vector<8x256xf32> -> vector<8x256xf32>
    %255 = vector.extract_strided_slice %0 {offsets = [3, 0], sizes = [1, 256], strides = [1, 1]} : vector<5x256xf32> to vector<1x256xf32>
    %256 = vector.broadcast %255 : vector<1x256xf32> to vector<8x256xf32>
    %257 = arith.mulf %254, %256 : vector<8x256xf32>
    %258 = arith.addf %245, %257 : vector<8x256xf32>
    %259 = vector.extract_strided_slice %205 {offsets = [0, 4], sizes = [8, 256], strides = [1, 1]} : vector<8x324xf32> to vector<8x256xf32>
    %260 = vector.extract_strided_slice %205 {offsets = [0, 20], sizes = [8, 256], strides = [1, 1]} : vector<8x324xf32> to vector<8x256xf32>
    %261 = vector.extract_strided_slice %205 {offsets = [0, 36], sizes = [8, 256], strides = [1, 1]} : vector<8x324xf32> to vector<8x256xf32>
    %262 = vector.extract_strided_slice %205 {offsets = [0, 52], sizes = [8, 256], strides = [1, 1]} : vector<8x324xf32> to vector<8x256xf32>
    %263 = vector.extract_strided_slice %205 {offsets = [0, 68], sizes = [8, 256], strides = [1, 1]} : vector<8x324xf32> to vector<8x256xf32>
    %264 = tpu.concatenate %259, %260, %261, %262, %263 in 0 : vector<8x256xf32>, vector<8x256xf32>, vector<8x256xf32>, vector<8x256xf32>, vector<8x256xf32> -> vector<40x256xf32>
    %c4_74 = arith.constant 4 : index
    %c0_75 = arith.constant 0 : index
    %c0_76 = arith.constant 0 : index
    %265 = vector.load %arg8[%c4_74, %c0_75, %c0_76] : memref<5x8x40xf32, #tpu.memory_space<vmem>>, vector<1x8x40xf32>
    %266 = vector.shape_cast %265 : vector<1x8x40xf32> to vector<8x40xf32>
    %cst_77 = arith.constant dense<0.000000e+00> : vector<8x256xf32>
    %267 = tpu.matmul %266, %264, %cst_77 {dimension_numbers = #tpu.dot_dimension_numbers<[1], [0], [0], [1], [0, 0, 1, 1], [], []>} : vector<8x40xf32>, vector<40x256xf32>, vector<8x256xf32> -> vector<8x256xf32>
    %268 = vector.extract_strided_slice %0 {offsets = [4, 0], sizes = [1, 256], strides = [1, 1]} : vector<5x256xf32> to vector<1x256xf32>
    %269 = vector.broadcast %268 : vector<1x256xf32> to vector<8x256xf32>
    %270 = arith.mulf %267, %269 : vector<8x256xf32>
    %271 = arith.addf %258, %270 : vector<8x256xf32>
    %c0_78 = arith.constant 0 : index
    %c0_79 = arith.constant 0 : index
    %272 = vector.load %arg9[%c0_78, %c0_79] : memref<8x1xf32, #tpu.memory_space<vmem>>, vector<8x1xf32>
    %273 = vector.broadcast %272 : vector<8x1xf32> to vector<8x256xf32>
    %274 = arith.addf %271, %273 : vector<8x256xf32>
    %cst_80 = arith.constant 0.000000e+00 : f32
    %275 = vector.broadcast %cst_80 : f32 to vector<8x256xf32>
    %276 = arith.maximumf %274, %275 : vector<8x256xf32>
    %c0_81 = arith.constant 0 : index
    %c0_82 = arith.constant 0 : index
    %277 = vector.load %arg12[%c0_81, %c0_82] : memref<8x8xf32, #tpu.memory_space<vmem>>, vector<8x8xf32>
    %cst_83 = arith.constant dense<0.000000e+00> : vector<8x256xf32>
    %278 = tpu.matmul %277, %203, %cst_83 {dimension_numbers = #tpu.dot_dimension_numbers<[1], [0], [0], [1], [0, 0, 1, 1], [], []>} : vector<8x8xf32>, vector<8x256xf32>, vector<8x256xf32> -> vector<8x256xf32>
    %c0_84 = arith.constant 0 : index
    %c0_85 = arith.constant 0 : index
    %279 = vector.load %arg13[%c0_84, %c0_85] : memref<8x1xf32, #tpu.memory_space<vmem>>, vector<8x1xf32>
    %280 = vector.broadcast %279 : vector<8x1xf32> to vector<8x256xf32>
    %281 = arith.addf %278, %280 : vector<8x256xf32>
    %cst_86 = arith.constant 0.000000e+00 : f32
    %282 = vector.broadcast %cst_86 : f32 to vector<8x34xf32>
    %283 = tpu.concatenate %282, %276, %282 in 1 : vector<8x34xf32>, vector<8x256xf32>, vector<8x34xf32> -> vector<8x324xf32>
    %cst_87 = arith.constant 0.000000e+00 : f32
    %284 = vector.broadcast %cst_87 : f32 to vector<8x256xf32>
    %285 = vector.extract_strided_slice %283 {offsets = [0, 0], sizes = [8, 256], strides = [1, 1]} : vector<8x324xf32> to vector<8x256xf32>
    %286 = vector.extract_strided_slice %283 {offsets = [0, 16], sizes = [8, 256], strides = [1, 1]} : vector<8x324xf32> to vector<8x256xf32>
    %287 = vector.extract_strided_slice %283 {offsets = [0, 32], sizes = [8, 256], strides = [1, 1]} : vector<8x324xf32> to vector<8x256xf32>
    %288 = vector.extract_strided_slice %283 {offsets = [0, 48], sizes = [8, 256], strides = [1, 1]} : vector<8x324xf32> to vector<8x256xf32>
    %289 = vector.extract_strided_slice %283 {offsets = [0, 64], sizes = [8, 256], strides = [1, 1]} : vector<8x324xf32> to vector<8x256xf32>
    %290 = tpu.concatenate %285, %286, %287, %288, %289 in 0 : vector<8x256xf32>, vector<8x256xf32>, vector<8x256xf32>, vector<8x256xf32>, vector<8x256xf32> -> vector<40x256xf32>
    %c0_88 = arith.constant 0 : index
    %c0_89 = arith.constant 0 : index
    %c0_90 = arith.constant 0 : index
    %291 = vector.load %arg10[%c0_88, %c0_89, %c0_90] : memref<5x8x40xf32, #tpu.memory_space<vmem>>, vector<1x8x40xf32>
    %292 = vector.shape_cast %291 : vector<1x8x40xf32> to vector<8x40xf32>
    %cst_91 = arith.constant dense<0.000000e+00> : vector<8x256xf32>
    %293 = tpu.matmul %292, %290, %cst_91 {dimension_numbers = #tpu.dot_dimension_numbers<[1], [0], [0], [1], [0, 0, 1, 1], [], []>} : vector<8x40xf32>, vector<40x256xf32>, vector<8x256xf32> -> vector<8x256xf32>
    %294 = vector.extract_strided_slice %0 {offsets = [0, 0], sizes = [1, 256], strides = [1, 1]} : vector<5x256xf32> to vector<1x256xf32>
    %295 = vector.broadcast %294 : vector<1x256xf32> to vector<8x256xf32>
    %296 = arith.mulf %293, %295 : vector<8x256xf32>
    %297 = arith.addf %284, %296 : vector<8x256xf32>
    %298 = vector.extract_strided_slice %283 {offsets = [0, 1], sizes = [8, 256], strides = [1, 1]} : vector<8x324xf32> to vector<8x256xf32>
    %299 = vector.extract_strided_slice %283 {offsets = [0, 17], sizes = [8, 256], strides = [1, 1]} : vector<8x324xf32> to vector<8x256xf32>
    %300 = vector.extract_strided_slice %283 {offsets = [0, 33], sizes = [8, 256], strides = [1, 1]} : vector<8x324xf32> to vector<8x256xf32>
    %301 = vector.extract_strided_slice %283 {offsets = [0, 49], sizes = [8, 256], strides = [1, 1]} : vector<8x324xf32> to vector<8x256xf32>
    %302 = vector.extract_strided_slice %283 {offsets = [0, 65], sizes = [8, 256], strides = [1, 1]} : vector<8x324xf32> to vector<8x256xf32>
    %303 = tpu.concatenate %298, %299, %300, %301, %302 in 0 : vector<8x256xf32>, vector<8x256xf32>, vector<8x256xf32>, vector<8x256xf32>, vector<8x256xf32> -> vector<40x256xf32>
    %c1_92 = arith.constant 1 : index
    %c0_93 = arith.constant 0 : index
    %c0_94 = arith.constant 0 : index
    %304 = vector.load %arg10[%c1_92, %c0_93, %c0_94] : memref<5x8x40xf32, #tpu.memory_space<vmem>>, vector<1x8x40xf32>
    %305 = vector.shape_cast %304 : vector<1x8x40xf32> to vector<8x40xf32>
    %cst_95 = arith.constant dense<0.000000e+00> : vector<8x256xf32>
    %306 = tpu.matmul %305, %303, %cst_95 {dimension_numbers = #tpu.dot_dimension_numbers<[1], [0], [0], [1], [0, 0, 1, 1], [], []>} : vector<8x40xf32>, vector<40x256xf32>, vector<8x256xf32> -> vector<8x256xf32>
    %307 = vector.extract_strided_slice %0 {offsets = [1, 0], sizes = [1, 256], strides = [1, 1]} : vector<5x256xf32> to vector<1x256xf32>
    %308 = vector.broadcast %307 : vector<1x256xf32> to vector<8x256xf32>
    %309 = arith.mulf %306, %308 : vector<8x256xf32>
    %310 = arith.addf %297, %309 : vector<8x256xf32>
    %311 = vector.extract_strided_slice %283 {offsets = [0, 2], sizes = [8, 256], strides = [1, 1]} : vector<8x324xf32> to vector<8x256xf32>
    %312 = vector.extract_strided_slice %283 {offsets = [0, 18], sizes = [8, 256], strides = [1, 1]} : vector<8x324xf32> to vector<8x256xf32>
    %313 = vector.extract_strided_slice %283 {offsets = [0, 34], sizes = [8, 256], strides = [1, 1]} : vector<8x324xf32> to vector<8x256xf32>
    %314 = vector.extract_strided_slice %283 {offsets = [0, 50], sizes = [8, 256], strides = [1, 1]} : vector<8x324xf32> to vector<8x256xf32>
    %315 = vector.extract_strided_slice %283 {offsets = [0, 66], sizes = [8, 256], strides = [1, 1]} : vector<8x324xf32> to vector<8x256xf32>
    %316 = tpu.concatenate %311, %312, %313, %314, %315 in 0 : vector<8x256xf32>, vector<8x256xf32>, vector<8x256xf32>, vector<8x256xf32>, vector<8x256xf32> -> vector<40x256xf32>
    %c2_96 = arith.constant 2 : index
    %c0_97 = arith.constant 0 : index
    %c0_98 = arith.constant 0 : index
    %317 = vector.load %arg10[%c2_96, %c0_97, %c0_98] : memref<5x8x40xf32, #tpu.memory_space<vmem>>, vector<1x8x40xf32>
    %318 = vector.shape_cast %317 : vector<1x8x40xf32> to vector<8x40xf32>
    %cst_99 = arith.constant dense<0.000000e+00> : vector<8x256xf32>
    %319 = tpu.matmul %318, %316, %cst_99 {dimension_numbers = #tpu.dot_dimension_numbers<[1], [0], [0], [1], [0, 0, 1, 1], [], []>} : vector<8x40xf32>, vector<40x256xf32>, vector<8x256xf32> -> vector<8x256xf32>
    %320 = vector.extract_strided_slice %0 {offsets = [2, 0], sizes = [1, 256], strides = [1, 1]} : vector<5x256xf32> to vector<1x256xf32>
    %321 = vector.broadcast %320 : vector<1x256xf32> to vector<8x256xf32>
    %322 = arith.mulf %319, %321 : vector<8x256xf32>
    %323 = arith.addf %310, %322 : vector<8x256xf32>
    %324 = vector.extract_strided_slice %283 {offsets = [0, 3], sizes = [8, 256], strides = [1, 1]} : vector<8x324xf32> to vector<8x256xf32>
    %325 = vector.extract_strided_slice %283 {offsets = [0, 19], sizes = [8, 256], strides = [1, 1]} : vector<8x324xf32> to vector<8x256xf32>
    %326 = vector.extract_strided_slice %283 {offsets = [0, 35], sizes = [8, 256], strides = [1, 1]} : vector<8x324xf32> to vector<8x256xf32>
    %327 = vector.extract_strided_slice %283 {offsets = [0, 51], sizes = [8, 256], strides = [1, 1]} : vector<8x324xf32> to vector<8x256xf32>
    %328 = vector.extract_strided_slice %283 {offsets = [0, 67], sizes = [8, 256], strides = [1, 1]} : vector<8x324xf32> to vector<8x256xf32>
    %329 = tpu.concatenate %324, %325, %326, %327, %328 in 0 : vector<8x256xf32>, vector<8x256xf32>, vector<8x256xf32>, vector<8x256xf32>, vector<8x256xf32> -> vector<40x256xf32>
    %c3_100 = arith.constant 3 : index
    %c0_101 = arith.constant 0 : index
    %c0_102 = arith.constant 0 : index
    %330 = vector.load %arg10[%c3_100, %c0_101, %c0_102] : memref<5x8x40xf32, #tpu.memory_space<vmem>>, vector<1x8x40xf32>
    %331 = vector.shape_cast %330 : vector<1x8x40xf32> to vector<8x40xf32>
    %cst_103 = arith.constant dense<0.000000e+00> : vector<8x256xf32>
    %332 = tpu.matmul %331, %329, %cst_103 {dimension_numbers = #tpu.dot_dimension_numbers<[1], [0], [0], [1], [0, 0, 1, 1], [], []>} : vector<8x40xf32>, vector<40x256xf32>, vector<8x256xf32> -> vector<8x256xf32>
    %333 = vector.extract_strided_slice %0 {offsets = [3, 0], sizes = [1, 256], strides = [1, 1]} : vector<5x256xf32> to vector<1x256xf32>
    %334 = vector.broadcast %333 : vector<1x256xf32> to vector<8x256xf32>
    %335 = arith.mulf %332, %334 : vector<8x256xf32>
    %336 = arith.addf %323, %335 : vector<8x256xf32>
    %337 = vector.extract_strided_slice %283 {offsets = [0, 4], sizes = [8, 256], strides = [1, 1]} : vector<8x324xf32> to vector<8x256xf32>
    %338 = vector.extract_strided_slice %283 {offsets = [0, 20], sizes = [8, 256], strides = [1, 1]} : vector<8x324xf32> to vector<8x256xf32>
    %339 = vector.extract_strided_slice %283 {offsets = [0, 36], sizes = [8, 256], strides = [1, 1]} : vector<8x324xf32> to vector<8x256xf32>
    %340 = vector.extract_strided_slice %283 {offsets = [0, 52], sizes = [8, 256], strides = [1, 1]} : vector<8x324xf32> to vector<8x256xf32>
    %341 = vector.extract_strided_slice %283 {offsets = [0, 68], sizes = [8, 256], strides = [1, 1]} : vector<8x324xf32> to vector<8x256xf32>
    %342 = tpu.concatenate %337, %338, %339, %340, %341 in 0 : vector<8x256xf32>, vector<8x256xf32>, vector<8x256xf32>, vector<8x256xf32>, vector<8x256xf32> -> vector<40x256xf32>
    %c4_104 = arith.constant 4 : index
    %c0_105 = arith.constant 0 : index
    %c0_106 = arith.constant 0 : index
    %343 = vector.load %arg10[%c4_104, %c0_105, %c0_106] : memref<5x8x40xf32, #tpu.memory_space<vmem>>, vector<1x8x40xf32>
    %344 = vector.shape_cast %343 : vector<1x8x40xf32> to vector<8x40xf32>
    %cst_107 = arith.constant dense<0.000000e+00> : vector<8x256xf32>
    %345 = tpu.matmul %344, %342, %cst_107 {dimension_numbers = #tpu.dot_dimension_numbers<[1], [0], [0], [1], [0, 0, 1, 1], [], []>} : vector<8x40xf32>, vector<40x256xf32>, vector<8x256xf32> -> vector<8x256xf32>
    %346 = vector.extract_strided_slice %0 {offsets = [4, 0], sizes = [1, 256], strides = [1, 1]} : vector<5x256xf32> to vector<1x256xf32>
    %347 = vector.broadcast %346 : vector<1x256xf32> to vector<8x256xf32>
    %348 = arith.mulf %345, %347 : vector<8x256xf32>
    %349 = arith.addf %336, %348 : vector<8x256xf32>
    %c0_108 = arith.constant 0 : index
    %c0_109 = arith.constant 0 : index
    %350 = vector.load %arg11[%c0_108, %c0_109] : memref<8x1xf32, #tpu.memory_space<vmem>>, vector<8x1xf32>
    %351 = vector.broadcast %350 : vector<8x1xf32> to vector<8x256xf32>
    %352 = arith.addf %349, %351 : vector<8x256xf32>
    %353 = arith.addf %352, %281 : vector<8x256xf32>
    %cst_110 = arith.constant 0.000000e+00 : f32
    %354 = vector.broadcast %cst_110 : f32 to vector<8x256xf32>
    %355 = arith.maximumf %353, %354 : vector<8x256xf32>
    %c0_111 = arith.constant 0 : index
    %c0_112 = arith.constant 0 : index
    %c0_113 = arith.constant 0 : index
    %356 = vector.load %arg15[%c0_111, %c0_112, %c0_113] : memref<1x8x256xf32, #tpu.memory_space<vmem>>, vector<1x8x256xf32>
    %357 = vector.shape_cast %356 : vector<1x8x256xf32> to vector<8x256xf32>
    %358 = vector.shape_cast %355 : vector<8x256xf32> to vector<1x8x256xf32>
    tpu.vector_store %arg15[%c0_111, %c0_112, %c0_113], %358 {strides = array<i32>} : memref<1x8x256xf32, #tpu.memory_space<vmem>>, vector<1x8x256xf32>,
    return
  }
  func.func @transform_0(%arg0: i32) -> (i32, i32, i32) {
    %c0_i32 = arith.constant 0 : i32
    %c0_i32_0 = arith.constant 0 : i32
    %c0_i32_1 = arith.constant 0 : i32
    return %arg0, %c0_i32, %c0_i32_0 : i32, i32, i32
  }
  func.func @transform_1(%arg0: i32) -> (i32, i32) {
    %c0_i32 = arith.constant 0 : i32
    %c0_i32_0 = arith.constant 0 : i32
    %c0_i32_1 = arith.constant 0 : i32
    return %c0_i32, %c0_i32_0 : i32, i32
  }
  func.func @transform_2(%arg0: i32) -> (i32, i32) {
    %c0_i32 = arith.constant 0 : i32
    %c0_i32_0 = arith.constant 0 : i32
    %c0_i32_1 = arith.constant 0 : i32
    return %c0_i32, %c0_i32_0 : i32, i32
  }
  func.func @transform_3(%arg0: i32) -> (i32, i32, i32) {
    %c0_i32 = arith.constant 0 : i32
    %c0_i32_0 = arith.constant 0 : i32
    %c0_i32_1 = arith.constant 0 : i32
    %c0_i32_2 = arith.constant 0 : i32
    return %c0_i32, %c0_i32_0, %c0_i32_1 : i32, i32, i32
  }
  func.func @transform_4(%arg0: i32) -> (i32, i32) {
    %c0_i32 = arith.constant 0 : i32
    %c0_i32_0 = arith.constant 0 : i32
    %c0_i32_1 = arith.constant 0 : i32
    return %c0_i32, %c0_i32_0 : i32, i32
  }
  func.func @transform_5(%arg0: i32) -> (i32, i32, i32) {
    %c0_i32 = arith.constant 0 : i32
    %c0_i32_0 = arith.constant 0 : i32
    %c0_i32_1 = arith.constant 0 : i32
    %c0_i32_2 = arith.constant 0 : i32
    return %c0_i32, %c0_i32_0, %c0_i32_1 : i32, i32, i32
  }
  func.func @transform_6(%arg0: i32) -> (i32, i32) {
    %c0_i32 = arith.constant 0 : i32
    %c0_i32_0 = arith.constant 0 : i32
    %c0_i32_1 = arith.constant 0 : i32
    return %c0_i32, %c0_i32_0 : i32, i32
  }
  func.func @transform_7(%arg0: i32) -> (i32, i32, i32) {
    %c0_i32 = arith.constant 0 : i32
    %c0_i32_0 = arith.constant 0 : i32
    %c0_i32_1 = arith.constant 0 : i32
    %c0_i32_2 = arith.constant 0 : i32
    return %c0_i32, %c0_i32_0, %c0_i32_1 : i32, i32, i32
  }
  func.func @transform_8(%arg0: i32) -> (i32, i32) {
    %c0_i32 = arith.constant 0 : i32
    %c0_i32_0 = arith.constant 0 : i32
    %c0_i32_1 = arith.constant 0 : i32
    return %c0_i32, %c0_i32_0 : i32, i32
  }
  func.func @transform_9(%arg0: i32) -> (i32, i32, i32) {
    %c0_i32 = arith.constant 0 : i32
    %c0_i32_0 = arith.constant 0 : i32
    %c0_i32_1 = arith.constant 0 : i32
    %c0_i32_2 = arith.constant 0 : i32
    return %c0_i32, %c0_i32_0, %c0_i32_1 : i32, i32, i32
  }
  func.func @transform_10(%arg0: i32) -> (i32, i32) {
    %c0_i32 = arith.constant 0 : i32
    %c0_i32_0 = arith.constant 0 : i32
    %c0_i32_1 = arith.constant 0 : i32
    return %c0_i32, %c0_i32_0 : i32, i32
  }
  func.func @transform_11(%arg0: i32) -> (i32, i32) {
    %c0_i32 = arith.constant 0 : i32
    %c0_i32_0 = arith.constant 0 : i32
    %c0_i32_1 = arith.constant 0 : i32
    return %c0_i32, %c0_i32_0 : i32, i32
  }
  func.func @transform_12(%arg0: i32) -> (i32, i32) {
    %c0_i32 = arith.constant 0 : i32
    %c0_i32_0 = arith.constant 0 : i32
    %c0_i32_1 = arith.constant 0 : i32
    return %c0_i32, %c0_i32_0 : i32, i32
  }
  func.func @transform_13(%arg0: i32) -> (i32, i32) {
    %c0_i32 = arith.constant 0 : i32
    %c0_i32_0 = arith.constant 0 : i32
    %c0_i32_1 = arith.constant 0 : i32
    return %c0_i32, %c0_i32_0 : i32, i32
  }
  func.func @transform_14(%arg0: i32) -> (i32, i32, i32) {
    %c0_i32 = arith.constant 0 : i32
    %c0_i32_0 = arith.constant 0 : i32
    %c0_i32_1 = arith.constant 0 : i32
    return %arg0, %c0_i32, %c0_i32_0 : i32, i32, i32
  }
}

</mosaic_0001>

<llo_original>
// kernel: ht_conv_forward.1
$region0: #{ht_conv_forward.1}
  #allocation0 [shape = 'u32[]', space=smem, size = 0x4, offset = 0x4, fixed_abs, tag = 'smem constant byte address 0x4 - core index']
  #allocation1 [shape = 'u32[144,128]{1,0:T(1,128)}', space=vmem, size = 0x12000, scoped, tag = 'internal scratch']
  %s0 = inlined_call_operand.vmem [shape: f32[2,8,256], index: 0, kind: input, shape index: {}]
  %s1 = inlined_call_operand.vmem [shape: f32[8,9], index: 1, kind: input, shape index: {}]
  %s2 = inlined_call_operand.vmem [shape: f32[8,1], index: 2, kind: input, shape index: {}]
  %s3 = inlined_call_operand.vmem [shape: f32[5,8,40], index: 3, kind: input, shape index: {}]
  %s4 = inlined_call_operand.vmem [shape: f32[8,1], index: 4, kind: input, shape index: {}]
  %s5 = inlined_call_operand.vmem [shape: f32[5,8,40], index: 5, kind: input, shape index: {}]
  %s6 = inlined_call_operand.vmem [shape: f32[8,1], index: 6, kind: input, shape index: {}]
  %s7 = inlined_call_operand.vmem [shape: f32[5,8,40], index: 7, kind: input, shape index: {}]
  %s8 = inlined_call_operand.vmem [shape: f32[8,1], index: 8, kind: input, shape index: {}]
  %s9 = inlined_call_operand.vmem [shape: f32[5,8,40], index: 9, kind: input, shape index: {}]
  %s10 = inlined_call_operand.vmem [shape: f32[8,1], index: 10, kind: input, shape index: {}]
  %s11 = inlined_call_operand.vmem [shape: f32[8,8], index: 11, kind: input, shape index: {}]
  %s12 = inlined_call_operand.vmem [shape: f32[8,1], index: 12, kind: input, shape index: {}]
  %s13 = inlined_call_operand.vmem [shape: f32[5,256], index: 13, kind: input, shape index: {}]
  %s14 = inlined_call_operand.vmem [shape: f32[2,8,256], index: 14, kind: output, shape index: {}]
  %s15 = sld [smem:[#allocation0]]
  $region89: #{ht_conv_forward.1} parent=0
    _
  %s17 = ssub.s32 1, %s15
  %s18 = scalar_select 0, %s17, %s15
  loop: start=0, step=1, limit=4
  $region2: #{ht_conv_forward.1} parent=0 // loop_pre_header
    _
  $region3: #{ht_conv_forward.1} parent=0 // loop_header
    %s20 = sphi 0, %s24
    %p21 = scmp.ge.s32.totalorder %s20, 4
    %s30 = sphi 0, %s32
    %s33 = sphi 0, %s30
    %s34 = sphi 0, %s33
    %s50 = sphi 0, %s34
    %s54 = sphi 0, %s54
    %s56 = sphi 0, %s54
    %s57 = sphi 0, %s56
    %s71 = sphi 0, %s57
    %s75 = sphi 0, %s75
    %s77 = sphi 0, %s75
    %s78 = sphi 0, %s77
    %s92 = sphi 0, %s78
    %s96 = sphi 0, %s96
    %s98 = sphi 0, %s96
    %s99 = sphi 0, %s98
    %s113 = sphi 0, %s99
    %s117 = sphi 0, %s117
    %s119 = sphi 0, %s117
    %s120 = sphi 0, %s119
    %s134 = sphi 0, %s120
    %s138 = sphi 0, %s138
    %s140 = sphi 0, %s138
    %s141 = sphi 0, %s140
    %s155 = sphi 0, %s141
    %s159 = sphi 0, %s159
    %s161 = sphi 0, %s159
    %s162 = sphi 0, %s161
    %s176 = sphi 0, %s162
    %s180 = sphi 0, %s180
    %s182 = sphi 0, %s180
    %s183 = sphi 0, %s182
    %s197 = sphi 0, %s183
    %s201 = sphi 0, %s201
    %s203 = sphi 0, %s201
    %s204 = sphi 0, %s203
    %s218 = sphi 0, %s204
    %s222 = sphi 0, %s222
    %s224 = sphi 0, %s222
    %s225 = sphi 0, %s224
    %s239 = sphi 0, %s225
    %s243 = sphi 0, %s243
    %s245 = sphi 0, %s243
    %s246 = sphi 0, %s245
    %s260 = sphi 0, %s246
    %s264 = sphi 0, %s264
    %s266 = sphi 0, %s264
    %s267 = sphi 0, %s266
    %s281 = sphi 0, %s267
    %s285 = sphi 0, %s285
    %s287 = sphi 0, %s285
    %s288 = sphi 0, %s287
    %s302 = sphi 0, %s288
    %s306 = sphi 0, %s306
    %s308 = sphi 0, %s306
    %s309 = sphi 0, %s308
    %s323 = sphi 0, %s309
    %s329 = sphi 0, %s331
    %s332 = sphi 0, %s329
    %s333 = sphi 0, %s332
    %s349 = sphi 0, %s333
  $region4: #{ht_conv_forward.1} parent=0 // loop_header_branch
    %23 = sbr.rel (%p21) target = $region8
  $region5: #{ht_conv_forward.1} parent=0 // loop_body
    %s25 = ssub.s32 %s20, 1
    %s26 = ssub.s32 %s20, 2
    %s27 = sadd.s32 %s20, 1
    %s28 = ssub.s32 %s20, %s27
    %p29 = scmp.eq.s32.totalorder %s28, 0
    %s31 = sadd.s32 %s30, 1
    %s32 = scalar_select %p29, %s30, %s31
    %p35 = pneg %p29
    %p36 = scmp.eq.s32.totalorder %s20, 1
    %p37 = por %p35, %p36
    %p38 = scmp.ne.s32.totalorder %s30, %s33
    %p39 = scmp.eq.s32.totalorder %s20, 0
    %p40 = por %p38, %p39
    %p41 = scmp.ne.s32.totalorder %s30, %s33
    %p42 = scmp.eq.s32.totalorder %s25, 1
    %p43 = por %p41, %p42
    %p44 = scmp.ne.s32.totalorder %s33, %s34
    %p45 = scmp.eq.s32.totalorder %s25, 0
    %p46 = por %p44, %p45
    %p47 = scmp.ne.s32.totalorder %s33, %s34
    %p48 = scmp.eq.s32.totalorder %s26, 1
    %p49 = por %p47, %p48
    %p51 = scmp.ne.s32.totalorder %s34, %s50
    %p52 = scmp.eq.s32.totalorder %s26, 0
    %p53 = por %p51, %p52
    %s55 = sadd.s32 %s54, 1
    %p58 = scmp.eq.s32.totalorder %s20, 1
    %p59 = scmp.ne.s32.totalorder %s54, %s56
    %p60 = scmp.eq.s32.totalorder %s20, 0
    %p61 = por %p59, %p60
    %p62 = scmp.ne.s32.totalorder %s54, %s56
    %p63 = scmp.eq.s32.totalorder %s25, 1
    %p64 = por %p62, %p63
    %p65 = scmp.ne.s32.totalorder %s56, %s57
    %p66 = scmp.eq.s32.totalorder %s25, 0
    %p67 = por %p65, %p66
    %p68 = scmp.ne.s32.totalorder %s56, %s57
    %p69 = scmp.eq.s32.totalorder %s26, 1
    %p70 = por %p68, %p69
    %p72 = scmp.ne.s32.totalorder %s57, %s71
    %p73 = scmp.eq.s32.totalorder %s26, 0
    %p74 = por %p72, %p73
    %s76 = sadd.s32 %s75, 1
    %p79 = scmp.eq.s32.totalorder %s20, 1
    %p80 = scmp.ne.s32.totalorder %s75, %s77
    %p81 = scmp.eq.s32.totalorder %s20, 0
    %p82 = por %p80, %p81
    %p83 = scmp.ne.s32.totalorder %s75, %s77
    %p84 = scmp.eq.s32.totalorder %s25, 1
    %p85 = por %p83, %p84
    %p86 = scmp.ne.s32.totalorder %s77, %s78
    %p87 = scmp.eq.s32.totalorder %s25, 0
    %p88 = por %p86, %p87
    %p89 = scmp.ne.s32.totalorder %s77, %s78
    %p90 = scmp.eq.s32.totalorder %s26, 1
    %p91 = por %p89, %p90
    %p93 = scmp.ne.s32.totalorder %s78, %s92
    %p94 = scmp.eq.s32.totalorder %s26, 0
    %p95 = por %p93, %p94
    %s97 = sadd.s32 %s96, 1
    %p100 = scmp.eq.s32.totalorder %s20, 1
    %p101 = scmp.ne.s32.totalorder %s96, %s98
    %p102 = scmp.eq.s32.totalorder %s20, 0
    %p103 = por %p101, %p102
    %p104 = scmp.ne.s32.totalorder %s96, %s98
    %p105 = scmp.eq.s32.totalorder %s25, 1
    %p106 = por %p104, %p105
    %p107 = scmp.ne.s32.totalorder %s98, %s99
    %p108 = scmp.eq.s32.totalorder %s25, 0
    %p109 = por %p107, %p108
    %p110 = scmp.ne.s32.totalorder %s98, %s99
    %p111 = scmp.eq.s32.totalorder %s26, 1
    %p112 = por %p110, %p111
    %p114 = scmp.ne.s32.totalorder %s99, %s113
    %p115 = scmp.eq.s32.totalorder %s26, 0
    %p116 = por %p114, %p115
    %s118 = sadd.s32 %s117, 1
    %p121 = scmp.eq.s32.totalorder %s20, 1
    %p122 = scmp.ne.s32.totalorder %s117, %s119
    %p123 = scmp.eq.s32.totalorder %s20, 0
    %p124 = por %p122, %p123
    %p125 = scmp.ne.s32.totalorder %s117, %s119
    %p126 = scmp.eq.s32.totalorder %s25, 1
    %p127 = por %p125, %p126
    %p128 = scmp.ne.s32.totalorder %s119, %s120
    %p129 = scmp.eq.s32.totalorder %s25, 0
    %p130 = por %p128, %p129
    %p131 = scmp.ne.s32.totalorder %s119, %s120
    %p132 = scmp.eq.s32.totalorder %s26, 1
    %p133 = por %p131, %p132
    %p135 = scmp.ne.s32.totalorder %s120, %s134
    %p136 = scmp.eq.s32.totalorder %s26, 0
    %p137 = por %p135, %p136
    %s139 = sadd.s32 %s138, 1
    %p142 = scmp.eq.s32.totalorder %s20, 1
    %p143 = scmp.ne.s32.totalorder %s138, %s140
    %p144 = scmp.eq.s32.totalorder %s20, 0
    %p145 = por %p143, %p144
    %p146 = scmp.ne.s32.totalorder %s138, %s140
    %p147 = scmp.eq.s32.totalorder %s25, 1
    %p148 = por %p146, %p147
    %p149 = scmp.ne.s32.totalorder %s140, %s141
    %p150 = scmp.eq.s32.totalorder %s25, 0
    %p151 = por %p149, %p150
    %p152 = scmp.ne.s32.totalorder %s140, %s141
    %p153 = scmp.eq.s32.totalorder %s26, 1
    %p154 = por %p152, %p153
    %p156 = scmp.ne.s32.totalorder %s141, %s155
    %p157 = scmp.eq.s32.totalorder %s26, 0
    %p158 = por %p156, %p157
    %s160 = sadd.s32 %s159, 1
    %p163 = scmp.eq.s32.totalorder %s20, 1
    %p164 = scmp.ne.s32.totalorder %s159, %s161
    %p165 = scmp.eq.s32.totalorder %s20, 0
    %p166 = por %p164, %p165
    %p167 = scmp.ne.s32.totalorder %s159, %s161
    %p168 = scmp.eq.s32.totalorder %s25, 1
    %p169 = por %p167, %p168
    %p170 = scmp.ne.s32.totalorder %s161, %s162
    %p171 = scmp.eq.s32.totalorder %s25, 0
    %p172 = por %p170, %p171
    %p173 = scmp.ne.s32.totalorder %s161, %s162
    %p174 = scmp.eq.s32.totalorder %s26, 1
    %p175 = por %p173, %p174
    %p177 = scmp.ne.s32.totalorder %s162, %s176
    %p178 = scmp.eq.s32.totalorder %s26, 0
    %p179 = por %p177, %p178
    %s181 = sadd.s32 %s180, 1
    %p184 = scmp.eq.s32.totalorder %s20, 1
    %p185 = scmp.ne.s32.totalorder %s180, %s182
    %p186 = scmp.eq.s32.totalorder %s20, 0
    %p187 = por %p185, %p186
    %p188 = scmp.ne.s32.totalorder %s180, %s182
    %p189 = scmp.eq.s32.totalorder %s25, 1
    %p190 = por %p188, %p189
    %p191 = scmp.ne.s32.totalorder %s182, %s183
    %p192 = scmp.eq.s32.totalorder %s25, 0
    %p193 = por %p191, %p192
    %p194 = scmp.ne.s32.totalorder %s182, %s183
    %p195 = scmp.eq.s32.totalorder %s26, 1
    %p196 = por %p194, %p195
    %p198 = scmp.ne.s32.totalorder %s183, %s197
    %p199 = scmp.eq.s32.totalorder %s26, 0
    %p200 = por %p198, %p199
    %s202 = sadd.s32 %s201, 1
    %p205 = scmp.eq.s32.totalorder %s20, 1
    %p206 = scmp.ne.s32.totalorder %s201, %s203
    %p207 = scmp.eq.s32.totalorder %s20, 0
    %p208 = por %p206, %p207
    %p209 = scmp.ne.s32.totalorder %s201, %s203
    %p210 = scmp.eq.s32.totalorder %s25, 1
    %p211 = por %p209, %p210
    %p212 = scmp.ne.s32.totalorder %s203, %s204
    %p213 = scmp.eq.s32.totalorder %s25, 0
    %p214 = por %p212, %p213
    %p215 = scmp.ne.s32.totalorder %s203, %s204
    %p216 = scmp.eq.s32.totalorder %s26, 1
    %p217 = por %p215, %p216
    %p219 = scmp.ne.s32.totalorder %s204, %s218
    %p220 = scmp.eq.s32.totalorder %s26, 0
    %p221 = por %p219, %p220
    %s223 = sadd.s32 %s222, 1
    %p226 = scmp.eq.s32.totalorder %s20, 1
    %p227 = scmp.ne.s32.totalorder %s222, %s224
    %p228 = scmp.eq.s32.totalorder %s20, 0
    %p229 = por %p227, %p228
    %p230 = scmp.ne.s32.totalorder %s222, %s224
    %p231 = scmp.eq.s32.totalorder %s25, 1
    %p232 = por %p230, %p231
    %p233 = scmp.ne.s32.totalorder %s224, %s225
    %p234 = scmp.eq.s32.totalorder %s25, 0
    %p235 = por %p233, %p234
    %p236 = scmp.ne.s32.totalorder %s224, %s225
    %p237 = scmp.eq.s32.totalorder %s26, 1
    %p238 = por %p236, %p237
    %p240 = scmp.ne.s32.totalorder %s225, %s239
    %p241 = scmp.eq.s32.totalorder %s26, 0
    %p242 = por %p240, %p241
    %s244 = sadd.s32 %s243, 1
    %p247 = scmp.eq.s32.totalorder %s20, 1
    %p248 = scmp.ne.s32.totalorder %s243, %s245
    %p249 = scmp.eq.s32.totalorder %s20, 0
    %p250 = por %p248, %p249
    %p251 = scmp.ne.s32.totalorder %s243, %s245
    %p252 = scmp.eq.s32.totalorder %s25, 1
    %p253 = por %p251, %p252
    %p254 = scmp.ne.s32.totalorder %s245, %s246
    %p255 = scmp.eq.s32.totalorder %s25, 0
    %p256 = por %p254, %p255
    %p257 = scmp.ne.s32.totalorder %s245, %s246
    %p258 = scmp.eq.s32.totalorder %s26, 1
    %p259 = por %p257, %p258
    %p261 = scmp.ne.s32.totalorder %s246, %s260
    %p262 = scmp.eq.s32.totalorder %s26, 0
    %p263 = por %p261, %p262
    %s265 = sadd.s32 %s264, 1
    %p268 = scmp.eq.s32.totalorder %s20, 1
    %p269 = scmp.ne.s32.totalorder %s264, %s266
    %p270 = scmp.eq.s32.totalorder %s20, 0
    %p271 = por %p269, %p270
    %p272 = scmp.ne.s32.totalorder %s264, %s266
    %p273 = scmp.eq.s32.totalorder %s25, 1
    %p274 = por %p272, %p273
    %p275 = scmp.ne.s32.totalorder %s266, %s267
    %p276 = scmp.eq.s32.totalorder %s25, 0
    %p277 = por %p275, %p276
    %p278 = scmp.ne.s32.totalorder %s266, %s267
    %p279 = scmp.eq.s32.totalorder %s26, 1
    %p280 = por %p278, %p279
    %p282 = scmp.ne.s32.totalorder %s267, %s281
    %p283 = scmp.eq.s32.totalorder %s26, 0
    %p284 = por %p282, %p283
    %s286 = sadd.s32 %s285, 1
    %p289 = scmp.eq.s32.totalorder %s20, 1
    %p290 = scmp.ne.s32.totalorder %s285, %s287
    %p291 = scmp.eq.s32.totalorder %s20, 0
    %p292 = por %p290, %p291
    %p293 = scmp.ne.s32.totalorder %s285, %s287
    %p294 = scmp.eq.s32.totalorder %s25, 1
    %p295 = por %p293, %p294
    %p296 = scmp.ne.s32.totalorder %s287, %s288
    %p297 = scmp.eq.s32.totalorder %s25, 0
    %p298 = por %p296, %p297
    %p299 = scmp.ne.s32.totalorder %s287, %s288
    %p300 = scmp.eq.s32.totalorder %s26, 1
    %p301 = por %p299, %p300
    %p303 = scmp.ne.s32.totalorder %s288, %s302
    %p304 = scmp.eq.s32.totalorder %s26, 0
    %p305 = por %p303, %p304
    %s307 = sadd.s32 %s306, 1
    %p310 = scmp.eq.s32.totalorder %s20, 1
    %p311 = scmp.ne.s32.totalorder %s306, %s308
    %p312 = scmp.eq.s32.totalorder %s20, 0
    %p313 = por %p311, %p312
    %p314 = scmp.ne.s32.totalorder %s306, %s308
    %p315 = scmp.eq.s32.totalorder %s25, 1
    %p316 = por %p314, %p315
    %p317 = scmp.ne.s32.totalorder %s308, %s309
    %p318 = scmp.eq.s32.totalorder %s25, 0
    %p319 = por %p317, %p318
    %p320 = scmp.ne.s32.totalorder %s308, %s309
    %p321 = scmp.eq.s32.totalorder %s26, 1
    %p322 = por %p320, %p321
    %p324 = scmp.ne.s32.totalorder %s309, %s323
    %p325 = scmp.eq.s32.totalorder %s26, 0
    %p326 = por %p324, %p325
    %s327 = ssub.s32 %s20, %s27
    %p328 = scmp.eq.s32.totalorder %s327, 0
    %s330 = sadd.s32 %s329, 1
    %s331 = scalar_select %p328, %s329, %s330
    %p334 = pneg %p328
    %p335 = scmp.eq.s32.totalorder %s20, 1
    %p336 = por %p334, %p335
    %p337 = scmp.ne.s32.totalorder %s329, %s332
    %p338 = scmp.eq.s32.totalorder %s20, 0
    %p339 = por %p337, %p338
    %p340 = scmp.ne.s32.totalorder %s329, %s332
    %p341 = scmp.eq.s32.totalorder %s25, 1
    %p342 = por %p340, %p341
    %p343 = scmp.ne.s32.totalorder %s332, %s333
    %p344 = scmp.eq.s32.totalorder %s25, 0
    %p345 = por %p343, %p344
    %p346 = scmp.ne.s32.totalorder %s332, %s333
    %p347 = scmp.eq.s32.totalorder %s26, 1
    %p348 = por %p346, %p347
    %p350 = scmp.ne.s32.totalorder %s333, %s349
    %p351 = scmp.eq.s32.totalorder %s26, 0
    %p352 = por %p350, %p351
    %p353 = scmp.le.s32.totalorder 1, %s20
    %p354 = scmp.lt.s32.totalorder %s20, 3
    %p355 = pnand %p353, %p354
    %p356 = pneg %p355
    // Predicated region
    $region9: #{ht_conv_forward.1} parent=5 // pred_check
      _
    $region10: #{ht_conv_forward.1} parent=5 // pred_check_branch
      %358 = sbr.rel (%p355) target = $region12
    $region11: #{ht_conv_forward.1} parent=5 // pred_region
      %s359 = ssub.s32 %s20, 1
      // Predicated region
      $region13: #{ht_conv_forward.1} parent=11 // pred_check
        %p360 = pneg %p67
      $region14: #{ht_conv_forward.1} parent=11 // pred_check_branch
        %362 = sbr.rel (%p360) target = $region16
      $region15: #{ht_conv_forward.1} parent=11 // pred_region
        _
      $region16: #{ht_conv_forward.1} parent=11 // pred_fallthru
        _
      // Predicated region
      $region17: #{ht_conv_forward.1} parent=11 // pred_check
        %p363 = pneg %p88
      $region18: #{ht_conv_forward.1} parent=11 // pred_check_branch
        %365 = sbr.rel (%p363) target = $region20
      $region19: #{ht_conv_forward.1} parent=11 // pred_region
        _
      $region20: #{ht_conv_forward.1} parent=11 // pred_fallthru
        _
      // Predicated region
      $region21: #{ht_conv_forward.1} parent=11 // pred_check
        %p366 = pneg %p109
      $region22: #{ht_conv_forward.1} parent=11 // pred_check_branch
        %368 = sbr.rel (%p366) target = $region24
      $region23: #{ht_conv_forward.1} parent=11 // pred_region
        _
      $region24: #{ht_conv_forward.1} parent=11 // pred_fallthru
        _
      // Predicated region
      $region25: #{ht_conv_forward.1} parent=11 // pred_check
        %p369 = pneg %p130
      $region26: #{ht_conv_forward.1} parent=11 // pred_check_branch
        %371 = sbr.rel (%p369) target = $region28
      $region27: #{ht_conv_forward.1} parent=11 // pred_region
        _
      $region28: #{ht_conv_forward.1} parent=11 // pred_fallthru
        _
      // Predicated region
      $region29: #{ht_conv_forward.1} parent=11 // pred_check
        %p372 = pneg %p151
      $region30: #{ht_conv_forward.1} parent=11 // pred_check_branch
        %374 = sbr.rel (%p372) target = $region32
      $region31: #{ht_conv_forward.1} parent=11 // pred_region
        _
      $region32: #{ht_conv_forward.1} parent=11 // pred_fallthru
        _
      // Predicated region
      $region33: #{ht_conv_forward.1} parent=11 // pred_check
        %p375 = pneg %p172
      $region34: #{ht_conv_forward.1} parent=11 // pred_check_branch
        %377 = sbr.rel (%p375) target = $region36
      $region35: #{ht_conv_forward.1} parent=11 // pred_region
        _
      $region36: #{ht_conv_forward.1} parent=11 // pred_fallthru
        _
      // Predicated region
      $region37: #{ht_conv_forward.1} parent=11 // pred_check
        %p378 = pneg %p193
      $region38: #{ht_conv_forward.1} parent=11 // pred_check_branch
        %380 = sbr.rel (%p378) target = $region40
      $region39: #{ht_conv_forward.1} parent=11 // pred_region
        _
      $region40: #{ht_conv_forward.1} parent=11 // pred_fallthru
        _
      // Predicated region
      $region41: #{ht_conv_forward.1} parent=11 // pred_check
        %p381 = pneg %p214
      $region42: #{ht_conv_forward.1} parent=11 // pred_check_branch
        %383 = sbr.rel (%p381) target = $region44
      $region43: #{ht_conv_forward.1} parent=11 // pred_region
        _
      $region44: #{ht_conv_forward.1} parent=11 // pred_fallthru
        _
      // Predicated region
      $region45: #{ht_conv_forward.1} parent=11 // pred_check
        %p384 = pneg %p235
      $region46: #{ht_conv_forward.1} parent=11 // pred_check_branch
        %386 = sbr.rel (%p384) target = $region48
      $region47: #{ht_conv_forward.1} parent=11 // pred_region
        _
      $region48: #{ht_conv_forward.1} parent=11 // pred_fallthru
        _
      // Predicated region
      $region49: #{ht_conv_forward.1} parent=11 // pred_check
        %p387 = pneg %p256
      $region50: #{ht_conv_forward.1} parent=11 // pred_check_branch
        %389 = sbr.rel (%p387) target = $region52
      $region51: #{ht_conv_forward.1} parent=11 // pred_region
        _
      $region52: #{ht_conv_forward.1} parent=11 // pred_fallthru
        _
      // Predicated region
      $region53: #{ht_conv_forward.1} parent=11 // pred_check
        %p390 = pneg %p277
      $region54: #{ht_conv_forward.1} parent=11 // pred_check_branch
        %392 = sbr.rel (%p390) target = $region56
      $region55: #{ht_conv_forward.1} parent=11 // pred_region
        _
      $region56: #{ht_conv_forward.1} parent=11 // pred_fallthru
        _
      // Predicated region
      $region57: #{ht_conv_forward.1} parent=11 // pred_check
        %p393 = pneg %p298
      $region58: #{ht_conv_forward.1} parent=11 // pred_check_branch
        %395 = sbr.rel (%p393) target = $region60
      $region59: #{ht_conv_forward.1} parent=11 // pred_region
        _
      $region60: #{ht_conv_forward.1} parent=11 // pred_fallthru
        _
      // Predicated region
      $region61: #{ht_conv_forward.1} parent=11 // pred_check
        %p396 = pneg %p319
      $region62: #{ht_conv_forward.1} parent=11 // pred_check_branch
        %398 = sbr.rel (%p396) target = $region64
      $region63: #{ht_conv_forward.1} parent=11 // pred_region
        _
      $region64: #{ht_conv_forward.1} parent=11 // pred_fallthru
        _
    $region12: #{ht_conv_forward.1} parent=5 // pred_fallthru
      _
    %p399 = scmp.lt.s32.totalorder %s20, 2
    // Predicated region
    $region65: #{ht_conv_forward.1} parent=5 // pred_check
      %p400 = pneg %p399
    $region66: #{ht_conv_forward.1} parent=5 // pred_check_branch
      %402 = sbr.rel (%p400) target = $region68
    $region67: #{ht_conv_forward.1} parent=5 // pred_region
      // Predicated region
      $region69: #{ht_conv_forward.1} parent=67 // pred_check
        %p403 = pneg %p40
      $region70: #{ht_conv_forward.1} parent=67 // pred_check_branch
        %405 = sbr.rel (%p403) target = $region72
      $region71: #{ht_conv_forward.1} parent=67 // pred_region
        %p406 = scmp.lt.s32.totalorder %s20, 1
        %s407 = scalar_select %p406, %s20, 1
        %s408 = smul.addr %s407, 2
        %s409 = smul.addr %s408, 8
        %s410 = scalar_lea.vmem %s0, %s409
      $region72: #{ht_conv_forward.1} parent=67 // pred_fallthru
        _
    $region68: #{ht_conv_forward.1} parent=5 // pred_fallthru
      _
    %p411 = scmp.le.s32.totalorder 1, %s20
    %p412 = scmp.lt.s32.totalorder %s20, 3
    %p413 = pnand %p411, %p412
    %p414 = pneg %p413
    // Predicated region
    $region73: #{ht_conv_forward.1} parent=5 // pred_check
      _
    $region74: #{ht_conv_forward.1} parent=5 // pred_check_branch
      %416 = sbr.rel (%p413) target = $region76
    $region75: #{ht_conv_forward.1} parent=5 // pred_region
      %s417 = ssub.s32 %s20, 1
      %p418 = scmp.lt.s32.totalorder %s25, 1
      %s419 = scalar_select %p418, %s25, 1
      %s420 = smul.addr %s419, 2
      %s421 = smul.addr %s420, 8
      %s422 = scalar_lea.vmem %s0, %s421
      %p423 = pneg %p46
      %p424 = pneg %p43
      %p425 = pneg %p67
      %p426 = pneg %p64
      %p427 = pneg %p88
      %p428 = pneg %p85
      %p429 = pneg %p109
      %p430 = pneg %p106
      %p431 = pneg %p130
      %p432 = pneg %p127
      %p433 = pneg %p151
      %p434 = pneg %p148
      %p435 = pneg %p172
      %p436 = pneg %p169
      %p437 = pneg %p193
      %p438 = pneg %p190
      %p439 = pneg %p214
      %p440 = pneg %p211
      %p441 = pneg %p235
      %p442 = pneg %p232
      %p443 = pneg %p256
      %p444 = pneg %p253
      %p445 = pneg %p277
      %p446 = pneg %p274
      %p447 = pneg %p298
      %p448 = pneg %p295
      %p449 = pneg %p319
      %p450 = pneg %p316
      %p451 = pneg %p345
      %p452 = pneg %p342
      %p453 = scmp.lt.s32.totalorder %s25, 1
      %s454 = scalar_select %p453, %s25, 1
      %s455 = smul.addr %s454, 2
      %s456 = smul.addr %s455, 8
      %s457 = scalar_lea.vmem %s14, %s456
      %p458 = scmp.lt.s32.totalorder %s25, 1
      %s459 = scalar_select %p458, %s25, 1
      %s460 = smul.addr %s459, 2
      %s461 = smul.addr %s460, 8
      %s462 = scalar_lea.vmem %s0, %s461
      %p463 = scmp.lt.s32.totalorder %s25, 1
      %s464 = scalar_select %p463, %s25, 1
      %s465 = smul.addr %s464, 2
      %s466 = smul.addr %s465, 8
      %s467 = scalar_lea.vmem %s14, %s466
      %v468 = vld [vmem:[%s13] sm:$0x1f]
      %v469 = vld [vmem:[%s13 + $0x8] sm:$0x1f]
      %v470 = vld [vmem:[%s462] sm:$0xff]
      %v471 = vld [vmem:[%s462 + $0x8] sm:$0xff]
      %474 = vrot.lane.b32.xlu0 %v470, 64
      %v475 = vpop.permute.xlu0 %474
      %476 = vrot.lane.b32.xlu0 %v471, 64
      %v477 = vpop.permute.xlu0 %476
      %vm478 = vcmask 523264
      %v479 = vsel %vm478, %v475, %v477
      %v483 = vsel %vm478, 0.0, %v475
      %v484 = vsel %vm478, %v477, 0.0
      %v485 = vld [vmem:[%s1] sm:$0xff]
      %487 = vset.pattern.permute.xlu0 0
      %488 = vperm.xlu0 %487, %v485
      %v489 = vpop.permute.xlu0 %488
      %v491 = vmul.f32 %v483, %v489
      %v492 = vmul.f32 %v479, %v489
      %v493 = vadd.f32 %v491, 0.0
      %v494 = vadd.f32 %v492, 0.0
      %495 = vset.pattern.permute.xlu0 1
      %496 = vperm.xlu0 %495, %v485
      %v497 = vpop.permute.xlu0 %496
      %v499 = vmul.f32 %v483, %v497
      %v500 = vmul.f32 %v479, %v497
      %v501 = vmul.f32 %v484, %v497
      %505 = vrot.lane.b32.xlu0 %v499, 112
      %v506 = vpop.permute.xlu0 %505
      %507 = vrot.lane.b32.xlu0 %v500, 112
      %v508 = vpop.permute.xlu0 %507
      %509 = vrot.lane.b32.xlu0 %v501, 112
      %v510 = vpop.permute.xlu0 %509
      %vm511 = vcmask 916480
      %v512 = vsel %vm511, %v506, %v508
      %v513 = vsel %vm511, %v508, %v510
      %v516 = vadd.f32 %v493, %v512
      %v517 = vadd.f32 %v494, %v513
      %518 = vset.pattern.permute.xlu0 2
      %519 = vperm.xlu0 %518, %v485
      %v520 = vpop.permute.xlu0 %519
      %v522 = vmul.f32 %v483, %v520
      %v523 = vmul.f32 %v479, %v520
      %v524 = vmul.f32 %v484, %v520
      %528 = vrot.lane.b32.xlu0 %v522, 96
      %v529 = vpop.permute.xlu0 %528
      %530 = vrot.lane.b32.xlu0 %v523, 96
      %v531 = vpop.permute.xlu0 %530
      %532 = vrot.lane.b32.xlu0 %v524, 96
      %v533 = vpop.permute.xlu0 %532
      %vm534 = vcmask 785408
      %v535 = vsel %vm534, %v529, %v531
      %v536 = vsel %vm534, %v531, %v533
      %v539 = vadd.f32 %v516, %v535
      %v540 = vadd.f32 %v517, %v536
      %541 = vset.pattern.permute.xlu0 3
      %542 = vperm.xlu0 %541, %v485
      %v543 = vpop.permute.xlu0 %542
      %v545 = vmul.f32 %v483, %v543
      %v546 = vmul.f32 %v479, %v543
      %v547 = vmul.f32 %v484, %v543
      %551 = vrot.lane.b32.xlu0 %v545, 80
      %v552 = vpop.permute.xlu0 %551
      %553 = vrot.lane.b32.xlu0 %v546, 80
      %v554 = vpop.permute.xlu0 %553
      %555 = vrot.lane.b32.xlu0 %v547, 80
      %v556 = vpop.permute.xlu0 %555
      %vm557 = vcmask 654336
      %v558 = vsel %vm557, %v552, %v554
      %v559 = vsel %vm557, %v554, %v556
      %v562 = vadd.f32 %v539, %v558
      %v563 = vadd.f32 %v540, %v559
      %564 = vset.pattern.permute.xlu0 4
      %565 = vperm.xlu0 %564, %v485
      %v566 = vpop.permute.xlu0 %565
      %v568 = vmul.f32 %v483, %v566
      %v569 = vmul.f32 %v479, %v566
      %v570 = vmul.f32 %v484, %v566
      %574 = vrot.lane.b32.xlu0 %v568, 64
      %v575 = vpop.permute.xlu0 %574
      %576 = vrot.lane.b32.xlu0 %v569, 64
      %v577 = vpop.permute.xlu0 %576
      %578 = vrot.lane.b32.xlu0 %v570, 64
      %v579 = vpop.permute.xlu0 %578
      %v580 = vsel %vm478, %v575, %v577
      %v581 = vsel %vm478, %v577, %v579
      %v584 = vadd.f32 %v562, %v580
      %v585 = vadd.f32 %v563, %v581
      %586 = vset.pattern.permute.xlu0 5
      %587 = vperm.xlu0 %586, %v485
      %v588 = vpop.permute.xlu0 %587
      %v590 = vmul.f32 %v483, %v588
      %v591 = vmul.f32 %v479, %v588
      %v592 = vmul.f32 %v484, %v588
      %596 = vrot.lane.b32.xlu0 %v590, 48
      %v597 = vpop.permute.xlu0 %596
      %598 = vrot.lane.b32.xlu0 %v591, 48
      %v599 = vpop.permute.xlu0 %598
      %600 = vrot.lane.b32.xlu0 %v592, 48
      %v601 = vpop.permute.xlu0 %600
      %vm602 = vcmask 392192
      %v603 = vsel %vm602, %v597, %v599
      %v604 = vsel %vm602, %v599, %v601
      %v607 = vadd.f32 %v584, %v603
      %v608 = vadd.f32 %v585, %v604
      %609 = vset.pattern.permute.xlu0 6
      %610 = vperm.xlu0 %609, %v485
      %v611 = vpop.permute.xlu0 %610
      %v613 = vmul.f32 %v483, %v611
      %v614 = vmul.f32 %v479, %v611
      %v615 = vmul.f32 %v484, %v611
      %619 = vrot.lane.b32.xlu0 %v613, 32
      %v620 = vpop.permute.xlu0 %619
      %621 = vrot.lane.b32.xlu0 %v614, 32
      %v622 = vpop.permute.xlu0 %621
      %623 = vrot.lane.b32.xlu0 %v615, 32
      %v624 = vpop.permute.xlu0 %623
      %vm625 = vcmask 261120
      %v626 = vsel %vm625, %v620, %v622
      %v627 = vsel %vm625, %v622, %v624
      %v630 = vadd.f32 %v607, %v626
      %v631 = vadd.f32 %v608, %v627
      %632 = vset.pattern.permute.xlu0 7
      %633 = vperm.xlu0 %632, %v485
      %v634 = vpop.permute.xlu0 %633
      %v636 = vmul.f32 %v483, %v634
      %v637 = vmul.f32 %v479, %v634
      %v638 = vmul.f32 %v484, %v634
      %642 = vrot.lane.b32.xlu0 %v636, 16
      %v643 = vpop.permute.xlu0 %642
      %644 = vrot.lane.b32.xlu0 %v637, 16
      %v645 = vpop.permute.xlu0 %644
      %646 = vrot.lane.b32.xlu0 %v638, 16
      %v647 = vpop.permute.xlu0 %646
      %vm648 = vcmask 130048
      %v649 = vsel %vm648, %v643, %v645
      %v650 = vsel %vm648, %v645, %v647
      %v653 = vadd.f32 %v630, %v649
      %v654 = vadd.f32 %v631, %v650
      %655 = vset.pattern.permute.xlu0 8
      %656 = vperm.xlu0 %655, %v485
      %v657 = vpop.permute.xlu0 %656
      %v659 = vmul.f32 %v479, %v657
      %v660 = vmul.f32 %v484, %v657
      %v661 = vadd.f32 %v653, %v659
      %v662 = vadd.f32 %v654, %v660
      %v663 = vld [vmem:[%s2] sm:$0xff]
      %665 = vset.pattern.permute.xlu0 0
      %666 = vperm.xlu0 %665, %v663
      %v667 = vpop.permute.xlu0 %666
      %v669 = vadd.f32 %v661, %v667
      %v670 = vadd.f32 %v662, %v667
      %v671 = vmax.f32 %v669, 0.0
      %v672 = vmax.f32 %v670, 0.0
      %675 = vrot.lane.b32.xlu0 %v671, 34
      %v676 = vpop.permute.xlu0 %675
      %677 = vrot.lane.b32.xlu0 %v672, 34
      %v678 = vpop.permute.xlu0 %677
      %vm679 = vcmask 277504
      %v680 = vsel %vm679, %v676, %v678
      %v684 = vsel %vm679, 0.0, %v676
      %v685 = vsel %vm679, %v678, 0.0
      %688 = vrot.lane.b32.xlu0 %v684, 112
      %v689 = vpop.permute.xlu0 %688
      %690 = vrot.lane.b32.xlu0 %v680, 112
      %v691 = vpop.permute.xlu0 %690
      %692 = vrot.lane.b32.xlu0 %v685, 112
      %v693 = vpop.permute.xlu0 %692
      %v694 = vsel %vm511, %v689, %v691
      %v695 = vsel %vm511, %v691, %v693
      %698 = vrot.lane.b32.xlu0 %v684, 96
      %v699 = vpop.permute.xlu0 %698
      %700 = vrot.lane.b32.xlu0 %v680, 96
      %v701 = vpop.permute.xlu0 %700
      %702 = vrot.lane.b32.xlu0 %v685, 96
      %v703 = vpop.permute.xlu0 %702
      %v704 = vsel %vm534, %v699, %v701
      %v705 = vsel %vm534, %v701, %v703
      %708 = vrot.lane.b32.xlu0 %v684, 80
      %v709 = vpop.permute.xlu0 %708
      %710 = vrot.lane.b32.xlu0 %v680, 80
      %v711 = vpop.permute.xlu0 %710
      %712 = vrot.lane.b32.xlu0 %v685, 80
      %v713 = vpop.permute.xlu0 %712
      %v714 = vsel %vm557, %v709, %v711
      %v715 = vsel %vm557, %v711, %v713
      %718 = vrot.lane.b32.xlu0 %v684, 64
      %v719 = vpop.permute.xlu0 %718
      %720 = vrot.lane.b32.xlu0 %v680, 64
      %v721 = vpop.permute.xlu0 %720
      %722 = vrot.lane.b32.xlu0 %v685, 64
      %v723 = vpop.permute.xlu0 %722
      %v724 = vsel %vm478, %v719, %v721
      %v725 = vsel %vm478, %v721, %v723
      %v728 = vld [vmem:[%s3] sm:$0xff]
      %vm729 = vcmask 326656
      %v731 = vsel %vm729, %v728, 0
      %733 = vmatprep.subr.mxu0 0.0
      %734 = vmatpush1.msra.mxu0 0.0
      %735 = vmatprep.subr.mxu0 0.0
      %736 = vmatpush1.msra.mxu0 0.0
      %737 = vmatprep.subr.mxu0 0.0
      %738 = vmatpush1.msra.mxu0 0.0
      %739 = vmatprep.subr.mxu0 0.0
      %740 = vmatpush1.msra.mxu0 0.0
      %741 = vmatprep.subr.mxu0 0.0
      %742 = vmatpush1.msra.mxu0 0.0
      %743 = vmatprep.subr.mxu0 0.0
      %744 = vmatpush1.msra.mxu0 0.0
      %745 = vmatprep.subr.mxu0 0.0
      %746 = vmatpush1.msra.mxu0 0.0
      %747 = vmatprep.subr.mxu0 0.0
      %748 = vmatpush1.msra.mxu0 0.0
      %749 = vmatprep.subr.mxu0 0.0
      %750 = vmatpush1.msra.mxu0 0.0
      %751 = vmatprep.subr.mxu0 0.0
      %752 = vmatpush1.msra.mxu0 0.0
      %753 = vmatprep.subr.mxu0 0.0
      %754 = vmatpush1.msra.mxu0 0.0
      %755 = vmatprep.subr.mxu0 %v725
      %756 = vmatpush1.msra.mxu0 %v724
      %757 = vmatprep.subr.mxu0 %v715
      %758 = vmatpush1.msra.mxu0 %v714
      %759 = vmatprep.subr.mxu0 %v705
      %760 = vmatpush1.msra.mxu0 %v704
      %761 = vmatprep.subr.mxu0 %v695
      %762 = vmatpush1.msra.mxu0 %v694
      %763 = vmatprep.subr.mxu0 %v680
      %764 = vmatpush1.msra.mxu0 %v684
      %765 = vmatprep.subr.mxu0 0.0
      %766 = vmatpush2.msra.mxu0 0.0
      %767 = vmatprep.subr.mxu0 0.0
      %768 = vmatpush2.msra.mxu0 0.0
      %769 = vmatprep.subr.mxu0 0.0
      %770 = vmatpush2.msra.mxu0 0.0
      %771 = vmatprep.subr.mxu0 0.0
      %772 = vmatpush2.msra.mxu0 0.0
      %773 = vmatprep.subr.mxu0 0.0
      %774 = vmatpush2.msra.mxu0 0.0
      %775 = vmatprep.subr.mxu0 0.0
      %776 = vmatpush2.msra.mxu0 0.0
      %777 = vmatprep.subr.mxu0 0.0
      %778 = vmatpush2.msra.mxu0 0.0
      %779 = vmatprep.subr.mxu0 0.0
      %780 = vmatpush2.msra.mxu0 0.0
      %781 = vmatprep.subr.mxu0 0.0
      %782 = vmatpush2.msra.mxu0 0.0
      %783 = vmatprep.subr.mxu0 0.0
      %784 = vmatpush2.msra.mxu0 0.0
      %785 = vmatprep.subr.mxu0 0.0
      %786 = vmatpush2.msra.mxu0 0.0
      %787 = vmatprep.subr.mxu0 0.0
      %788 = vmatpush2.msra.mxu0 0.0
      %789 = vmatprep.subr.mxu0 0.0
      %790 = vmatpush2.msra.mxu0 0.0
      %791 = vmatprep.subr.mxu0 0.0
      %792 = vmatpush2.msra.mxu0 0.0
      %793 = vmatprep.subr.mxu0 0.0
      %794 = vmatpush2.msra.mxu0 0.0
      %795 = vmatprep.subr.mxu0 0.0
      %796 = vmatpush2.msra.mxu0 0.0
      %797 = vmatprep.mubr.f32.mxu0 0.0
      %798 = vmatmul.mubr.f32.gmra.mxu0 %v731
      %v799 = vpop.f32.mrf.mxu0
      %v800 = vadd.f32 0.0, %v799
      %v801 = vpop.f32.mrf.mxu0
      %v802 = vadd.f32 0.0, %v801
      %803 = vdwg.mxu0
      %v804 = vlaneseq
      %v805 = vshrl.u32 %v804, 7
      %v806 = vsub.s32 0, %v805
      %v807 = vrot.slane %v468, %v806
      %v808 = vlaneseq
      %v809 = vshrl.u32 %v808, 7
      %v810 = vsub.s32 0, %v809
      %v811 = vrot.slane %v469, %v810
      %v812 = vmul.f32 %v800, %v807
      %v813 = vmul.f32 %v802, %v811
      %v814 = vadd.f32 %v812, 0.0
      %v815 = vadd.f32 %v813, 0.0
      %s816 = scalar_lea.vmem %s3, 8
      %v817 = vld [vmem:[%s816] sm:$0xff]
      %818 = vrot.lane.b32.xlu0 %v684, 127
      %v819 = vpop.permute.xlu0 %818
      %820 = vrot.lane.b32.xlu0 %v680, 127
      %v821 = vpop.permute.xlu0 %820
      %822 = vrot.lane.b32.xlu0 %v685, 127
      %v823 = vpop.permute.xlu0 %822
      %824 = vrot.lane.b32.xlu0 %v694, 127
      %v825 = vpop.permute.xlu0 %824
      %826 = vrot.lane.b32.xlu0 %v695, 127
      %v827 = vpop.permute.xlu0 %826
      %828 = vrot.lane.b32.xlu0 %v693, 127
      %v829 = vpop.permute.xlu0 %828
      %830 = vrot.lane.b32.xlu0 %v704, 127
      %v831 = vpop.permute.xlu0 %830
      %832 = vrot.lane.b32.xlu0 %v705, 127
      %v833 = vpop.permute.xlu0 %832
      %834 = vrot.lane.b32.xlu0 %v703, 127
      %v835 = vpop.permute.xlu0 %834
      %836 = vrot.lane.b32.xlu0 %v714, 127
      %v837 = vpop.permute.xlu0 %836
      %838 = vrot.lane.b32.xlu0 %v715, 127
      %v839 = vpop.permute.xlu0 %838
      %840 = vrot.lane.b32.xlu0 %v713, 127
      %v841 = vpop.permute.xlu0 %840
      %842 = vrot.lane.b32.xlu0 %v724, 127
      %v843 = vpop.permute.xlu0 %842
      %844 = vrot.lane.b32.xlu0 %v725, 127
      %v845 = vpop.permute.xlu0 %844
      %846 = vrot.lane.b32.xlu0 %v723, 127
      %v847 = vpop.permute.xlu0 %846
      %vm848 = vcmask 1039360
      %v849 = vsel %vm848, %v819, %v821
      %v850 = vsel %vm848, %v821, %v823
      %v851 = vsel %vm848, %v825, %v827
      %v852 = vsel %vm848, %v827, %v829
      %v853 = vsel %vm848, %v831, %v833
      %v854 = vsel %vm848, %v833, %v835
      %v855 = vsel %vm848, %v837, %v839
      %v856 = vsel %vm848, %v839, %v841
      %v857 = vsel %vm848, %v843, %v845
      %v858 = vsel %vm848, %v845, %v847
      %v870 = vsel %vm729, %v817, 0
      %872 = vmatprep.subr.mxu0 0.0
      %873 = vmatpush1.msra.mxu0 0.0
      %874 = vmatprep.subr.mxu0 0.0
      %875 = vmatpush1.msra.mxu0 0.0
      %876 = vmatprep.subr.mxu0 0.0
      %877 = vmatpush1.msra.mxu0 0.0
      %878 = vmatprep.subr.mxu0 0.0
      %879 = vmatpush1.msra.mxu0 0.0
      %880 = vmatprep.subr.mxu0 0.0
      %881 = vmatpush1.msra.mxu0 0.0
      %882 = vmatprep.subr.mxu0 0.0
      %883 = vmatpush1.msra.mxu0 0.0
      %884 = vmatprep.subr.mxu0 0.0
      %885 = vmatpush1.msra.mxu0 0.0
      %886 = vmatprep.subr.mxu0 0.0
      %887 = vmatpush1.msra.mxu0 0.0
      %888 = vmatprep.subr.mxu0 0.0
      %889 = vmatpush1.msra.mxu0 0.0
      %890 = vmatprep.subr.mxu0 0.0
      %891 = vmatpush1.msra.mxu0 0.0
      %892 = vmatprep.subr.mxu0 0.0
      %893 = vmatpush1.msra.mxu0 0.0
      %894 = vmatprep.subr.mxu0 %v858
      %895 = vmatpush1.msra.mxu0 %v857
      %896 = vmatprep.subr.mxu0 %v856
      %897 = vmatpush1.msra.mxu0 %v855
      %898 = vmatprep.subr.mxu0 %v854
      %899 = vmatpush1.msra.mxu0 %v853
      %900 = vmatprep.subr.mxu0 %v852
      %901 = vmatpush1.msra.mxu0 %v851
      %902 = vmatprep.subr.mxu0 %v850
      %903 = vmatpush1.msra.mxu0 %v849
      %904 = vmatprep.subr.mxu0 0.0
      %905 = vmatpush2.msra.mxu0 0.0
      %906 = vmatprep.subr.mxu0 0.0
      %907 = vmatpush2.msra.mxu0 0.0
      %908 = vmatprep.subr.mxu0 0.0
      %909 = vmatpush2.msra.mxu0 0.0
      %910 = vmatprep.subr.mxu0 0.0
      %911 = vmatpush2.msra.mxu0 0.0
      %912 = vmatprep.subr.mxu0 0.0
      %913 = vmatpush2.msra.mxu0 0.0
      %914 = vmatprep.subr.mxu0 0.0
      %915 = vmatpush2.msra.mxu0 0.0
      %916 = vmatprep.subr.mxu0 0.0
      %917 = vmatpush2.msra.mxu0 0.0
      %918 = vmatprep.subr.mxu0 0.0
      %919 = vmatpush2.msra.mxu0 0.0
      %920 = vmatprep.subr.mxu0 0.0
      %921 = vmatpush2.msra.mxu0 0.0
      %922 = vmatprep.subr.mxu0 0.0
      %923 = vmatpush2.msra.mxu0 0.0
      %924 = vmatprep.subr.mxu0 0.0
      %925 = vmatpush2.msra.mxu0 0.0
      %926 = vmatprep.subr.mxu0 0.0
      %927 = vmatpush2.msra.mxu0 0.0
      %928 = vmatprep.subr.mxu0 0.0
      %929 = vmatpush2.msra.mxu0 0.0
      %930 = vmatprep.subr.mxu0 0.0
      %931 = vmatpush2.msra.mxu0 0.0
      %932 = vmatprep.subr.mxu0 0.0
      %933 = vmatpush2.msra.mxu0 0.0
      %934 = vmatprep.subr.mxu0 0.0
      %935 = vmatpush2.msra.mxu0 0.0
      %936 = vmatprep.mubr.f32.mxu0 0.0
      %937 = vmatmul.mubr.f32.gmra.mxu0 %v870
      %v938 = vpop.f32.mrf.mxu0
      %v939 = vadd.f32 0.0, %v938
      %v940 = vpop.f32.mrf.mxu0
      %v941 = vadd.f32 0.0, %v940
      %942 = vdwg.mxu0
      %v943 = vlaneseq
      %v944 = vshrl.u32 %v943, 7
      %v945 = vsub.s32 1, %v944
      %v946 = vrot.slane %v468, %v945
      %v947 = vlaneseq
      %v948 = vshrl.u32 %v947, 7
      %v949 = vsub.s32 1, %v948
      %v950 = vrot.slane %v469, %v949
      %v951 = vmul.f32 %v939, %v946
      %v952 = vmul.f32 %v941, %v950
      %v953 = vadd.f32 %v814, %v951
      %v954 = vadd.f32 %v815, %v952
      %s955 = scalar_lea.vmem %s3, 16
      %v956 = vld [vmem:[%s955] sm:$0xff]
      %957 = vrot.lane.b32.xlu0 %v684, 126
      %v958 = vpop.permute.xlu0 %957
      %959 = vrot.lane.b32.xlu0 %v680, 126
      %v960 = vpop.permute.xlu0 %959
      %961 = vrot.lane.b32.xlu0 %v685, 126
      %v962 = vpop.permute.xlu0 %961
      %963 = vrot.lane.b32.xlu0 %v694, 126
      %v964 = vpop.permute.xlu0 %963
      %965 = vrot.lane.b32.xlu0 %v695, 126
      %v966 = vpop.permute.xlu0 %965
      %967 = vrot.lane.b32.xlu0 %v693, 126
      %v968 = vpop.permute.xlu0 %967
      %969 = vrot.lane.b32.xlu0 %v704, 126
      %v970 = vpop.permute.xlu0 %969
      %971 = vrot.lane.b32.xlu0 %v705, 126
      %v972 = vpop.permute.xlu0 %971
      %973 = vrot.lane.b32.xlu0 %v703, 126
      %v974 = vpop.permute.xlu0 %973
      %975 = vrot.lane.b32.xlu0 %v714, 126
      %v976 = vpop.permute.xlu0 %975
      %977 = vrot.lane.b32.xlu0 %v715, 126
      %v978 = vpop.permute.xlu0 %977
      %979 = vrot.lane.b32.xlu0 %v713, 126
      %v980 = vpop.permute.xlu0 %979
      %981 = vrot.lane.b32.xlu0 %v724, 126
      %v982 = vpop.permute.xlu0 %981
      %983 = vrot.lane.b32.xlu0 %v725, 126
      %v984 = vpop.permute.xlu0 %983
      %985 = vrot.lane.b32.xlu0 %v723, 126
      %v986 = vpop.permute.xlu0 %985
      %vm987 = vcmask 1031168
      %v988 = vsel %vm987, %v958, %v960
      %v989 = vsel %vm987, %v960, %v962
      %v990 = vsel %vm987, %v964, %v966
      %v991 = vsel %vm987, %v966, %v968
      %v992 = vsel %vm987, %v970, %v972
      %v993 = vsel %vm987, %v972, %v974
      %v994 = vsel %vm987, %v976, %v978
      %v995 = vsel %vm987, %v978, %v980
      %v996 = vsel %vm987, %v982, %v984
      %v997 = vsel %vm987, %v984, %v986
      %v1009 = vsel %vm729, %v956, 0
      %1011 = vmatprep.subr.mxu0 0.0
      %1012 = vmatpush1.msra.mxu0 0.0
      %1013 = vmatprep.subr.mxu0 0.0
      %1014 = vmatpush1.msra.mxu0 0.0
      %1015 = vmatprep.subr.mxu0 0.0
      %1016 = vmatpush1.msra.mxu0 0.0
      %1017 = vmatprep.subr.mxu0 0.0
      %1018 = vmatpush1.msra.mxu0 0.0
      %1019 = vmatprep.subr.mxu0 0.0
      %1020 = vmatpush1.msra.mxu0 0.0
      %1021 = vmatprep.subr.mxu0 0.0
      %1022 = vmatpush1.msra.mxu0 0.0
      %1023 = vmatprep.subr.mxu0 0.0
      %1024 = vmatpush1.msra.mxu0 0.0
      %1025 = vmatprep.subr.mxu0 0.0
      %1026 = vmatpush1.msra.mxu0 0.0
      %1027 = vmatprep.subr.mxu0 0.0
      %1028 = vmatpush1.msra.mxu0 0.0
      %1029 = vmatprep.subr.mxu0 0.0
      %1030 = vmatpush1.msra.mxu0 0.0
      %1031 = vmatprep.subr.mxu0 0.0
      %1032 = vmatpush1.msra.mxu0 0.0
      %1033 = vmatprep.subr.mxu0 %v997
      %1034 = vmatpush1.msra.mxu0 %v996
      %1035 = vmatprep.subr.mxu0 %v995
      %1036 = vmatpush1.msra.mxu0 %v994
      %1037 = vmatprep.subr.mxu0 %v993
      %1038 = vmatpush1.msra.mxu0 %v992
      %1039 = vmatprep.subr.mxu0 %v991
      %1040 = vmatpush1.msra.mxu0 %v990
      %1041 = vmatprep.subr.mxu0 %v989
      %1042 = vmatpush1.msra.mxu0 %v988
      %1043 = vmatprep.subr.mxu0 0.0
      %1044 = vmatpush2.msra.mxu0 0.0
      %1045 = vmatprep.subr.mxu0 0.0
      %1046 = vmatpush2.msra.mxu0 0.0
      %1047 = vmatprep.subr.mxu0 0.0
      %1048 = vmatpush2.msra.mxu0 0.0
      %1049 = vmatprep.subr.mxu0 0.0
      %1050 = vmatpush2.msra.mxu0 0.0
      %1051 = vmatprep.subr.mxu0 0.0
      %1052 = vmatpush2.msra.mxu0 0.0
      %1053 = vmatprep.subr.mxu0 0.0
      %1054 = vmatpush2.msra.mxu0 0.0
      %1055 = vmatprep.subr.mxu0 0.0
      %1056 = vmatpush2.msra.mxu0 0.0
      %1057 = vmatprep.subr.mxu0 0.0
      %1058 = vmatpush2.msra.mxu0 0.0
      %1059 = vmatprep.subr.mxu0 0.0
      %1060 = vmatpush2.msra.mxu0 0.0
      %1061 = vmatprep.subr.mxu0 0.0
      %1062 = vmatpush2.msra.mxu0 0.0
      %1063 = vmatprep.subr.mxu0 0.0
      %1064 = vmatpush2.msra.mxu0 0.0
      %1065 = vmatprep.subr.mxu0 0.0
      %1066 = vmatpush2.msra.mxu0 0.0
      %1067 = vmatprep.subr.mxu0 0.0
      %1068 = vmatpush2.msra.mxu0 0.0
      %1069 = vmatprep.subr.mxu0 0.0
      %1070 = vmatpush2.msra.mxu0 0.0
      %1071 = vmatprep.subr.mxu0 0.0
      %1072 = vmatpush2.msra.mxu0 0.0
      %1073 = vmatprep.subr.mxu0 0.0
      %1074 = vmatpush2.msra.mxu0 0.0
      %1075 = vmatprep.mubr.f32.mxu0 0.0
      %1076 = vmatmul.mubr.f32.gmra.mxu0 %v1009
      %v1077 = vpop.f32.mrf.mxu0
      %v1078 = vadd.f32 0.0, %v1077
      %v1079 = vpop.f32.mrf.mxu0
      %v1080 = vadd.f32 0.0, %v1079
      %1081 = vdwg.mxu0
      %v1082 = vlaneseq
      %v1083 = vshrl.u32 %v1082, 7
      %v1084 = vsub.s32 2, %v1083
      %v1085 = vrot.slane %v468, %v1084
      %v1086 = vlaneseq
      %v1087 = vshrl.u32 %v1086, 7
      %v1088 = vsub.s32 2, %v1087
      %v1089 = vrot.slane %v469, %v1088
      %v1090 = vmul.f32 %v1078, %v1085
      %v1091 = vmul.f32 %v1080, %v1089
      %v1092 = vadd.f32 %v953, %v1090
      %v1093 = vadd.f32 %v954, %v1091
      %s1094 = scalar_lea.vmem %s3, 24
      %v1095 = vld [vmem:[%s1094] sm:$0xff]
      %1096 = vrot.lane.b32.xlu0 %v684, 125
      %v1097 = vpop.permute.xlu0 %1096
      %1098 = vrot.lane.b32.xlu0 %v680, 125
      %v1099 = vpop.permute.xlu0 %1098
      %1100 = vrot.lane.b32.xlu0 %v685, 125
      %v1101 = vpop.permute.xlu0 %1100
      %1102 = vrot.lane.b32.xlu0 %v694, 125
      %v1103 = vpop.permute.xlu0 %1102
      %1104 = vrot.lane.b32.xlu0 %v695, 125
      %v1105 = vpop.permute.xlu0 %1104
      %1106 = vrot.lane.b32.xlu0 %v693, 125
      %v1107 = vpop.permute.xlu0 %1106
      %1108 = vrot.lane.b32.xlu0 %v704, 125
      %v1109 = vpop.permute.xlu0 %1108
      %1110 = vrot.lane.b32.xlu0 %v705, 125
      %v1111 = vpop.permute.xlu0 %1110
      %1112 = vrot.lane.b32.xlu0 %v703, 125
      %v1113 = vpop.permute.xlu0 %1112
      %1114 = vrot.lane.b32.xlu0 %v714, 125
      %v1115 = vpop.permute.xlu0 %1114
      %1116 = vrot.lane.b32.xlu0 %v715, 125
      %v1117 = vpop.permute.xlu0 %1116
      %1118 = vrot.lane.b32.xlu0 %v713, 125
      %v1119 = vpop.permute.xlu0 %1118
      %1120 = vrot.lane.b32.xlu0 %v724, 125
      %v1121 = vpop.permute.xlu0 %1120
      %1122 = vrot.lane.b32.xlu0 %v725, 125
      %v1123 = vpop.permute.xlu0 %1122
      %1124 = vrot.lane.b32.xlu0 %v723, 125
      %v1125 = vpop.permute.xlu0 %1124
      %vm1126 = vcmask 1022976
      %v1127 = vsel %vm1126, %v1097, %v1099
      %v1128 = vsel %vm1126, %v1099, %v1101
      %v1129 = vsel %vm1126, %v1103, %v1105
      %v1130 = vsel %vm1126, %v1105, %v1107
      %v1131 = vsel %vm1126, %v1109, %v1111
      %v1132 = vsel %vm1126, %v1111, %v1113
      %v1133 = vsel %vm1126, %v1115, %v1117
      %v1134 = vsel %vm1126, %v1117, %v1119
      %v1135 = vsel %vm1126, %v1121, %v1123
      %v1136 = vsel %vm1126, %v1123, %v1125
      %v1148 = vsel %vm729, %v1095, 0
      %1150 = vmatprep.subr.mxu0 0.0
      %1151 = vmatpush1.msra.mxu0 0.0
      %1152 = vmatprep.subr.mxu0 0.0
      %1153 = vmatpush1.msra.mxu0 0.0
      %1154 = vmatprep.subr.mxu0 0.0
      %1155 = vmatpush1.msra.mxu0 0.0
      %1156 = vmatprep.subr.mxu0 0.0
      %1157 = vmatpush1.msra.mxu0 0.0
      %1158 = vmatprep.subr.mxu0 0.0
      %1159 = vmatpush1.msra.mxu0 0.0
      %1160 = vmatprep.subr.mxu0 0.0
      %1161 = vmatpush1.msra.mxu0 0.0
      %1162 = vmatprep.subr.mxu0 0.0
      %1163 = vmatpush1.msra.mxu0 0.0
      %1164 = vmatprep.subr.mxu0 0.0
      %1165 = vmatpush1.msra.mxu0 0.0
      %1166 = vmatprep.subr.mxu0 0.0
      %1167 = vmatpush1.msra.mxu0 0.0
      %1168 = vmatprep.subr.mxu0 0.0
      %1169 = vmatpush1.msra.mxu0 0.0
      %1170 = vmatprep.subr.mxu0 0.0
      %1171 = vmatpush1.msra.mxu0 0.0
      %1172 = vmatprep.subr.mxu0 %v1136
      %1173 = vmatpush1.msra.mxu0 %v1135
      %1174 = vmatprep.subr.mxu0 %v1134
      %1175 = vmatpush1.msra.mxu0 %v1133
      %1176 = vmatprep.subr.mxu0 %v1132
      %1177 = vmatpush1.msra.mxu0 %v1131
      %1178 = vmatprep.subr.mxu0 %v1130
      %1179 = vmatpush1.msra.mxu0 %v1129
      %1180 = vmatprep.subr.mxu0 %v1128
      %1181 = vmatpush1.msra.mxu0 %v1127
      %1182 = vmatprep.subr.mxu0 0.0
      %1183 = vmatpush2.msra.mxu0 0.0
      %1184 = vmatprep.subr.mxu0 0.0
      %1185 = vmatpush2.msra.mxu0 0.0
      %1186 = vmatprep.subr.mxu0 0.0
      %1187 = vmatpush2.msra.mxu0 0.0
      %1188 = vmatprep.subr.mxu0 0.0
      %1189 = vmatpush2.msra.mxu0 0.0
      %1190 = vmatprep.subr.mxu0 0.0
      %1191 = vmatpush2.msra.mxu0 0.0
      %1192 = vmatprep.subr.mxu0 0.0
      %1193 = vmatpush2.msra.mxu0 0.0
      %1194 = vmatprep.subr.mxu0 0.0
      %1195 = vmatpush2.msra.mxu0 0.0
      %1196 = vmatprep.subr.mxu0 0.0
      %1197 = vmatpush2.msra.mxu0 0.0
      %1198 = vmatprep.subr.mxu0 0.0
      %1199 = vmatpush2.msra.mxu0 0.0
      %1200 = vmatprep.subr.mxu0 0.0
      %1201 = vmatpush2.msra.mxu0 0.0
      %1202 = vmatprep.subr.mxu0 0.0
      %1203 = vmatpush2.msra.mxu0 0.0
      %1204 = vmatprep.subr.mxu0 0.0
      %1205 = vmatpush2.msra.mxu0 0.0
      %1206 = vmatprep.subr.mxu0 0.0
      %1207 = vmatpush2.msra.mxu0 0.0
      %1208 = vmatprep.subr.mxu0 0.0
      %1209 = vmatpush2.msra.mxu0 0.0
      %1210 = vmatprep.subr.mxu0 0.0
      %1211 = vmatpush2.msra.mxu0 0.0
      %1212 = vmatprep.subr.mxu0 0.0
      %1213 = vmatpush2.msra.mxu0 0.0
      %1214 = vmatprep.mubr.f32.mxu0 0.0
      %1215 = vmatmul.mubr.f32.gmra.mxu0 %v1148
      %v1216 = vpop.f32.mrf.mxu0
      %v1217 = vadd.f32 0.0, %v1216
      %v1218 = vpop.f32.mrf.mxu0
      %v1219 = vadd.f32 0.0, %v1218
      %1220 = vdwg.mxu0
      %v1221 = vlaneseq
      %v1222 = vshrl.u32 %v1221, 7
      %v1223 = vsub.s32 3, %v1222
      %v1224 = vrot.slane %v468, %v1223
      %v1225 = vlaneseq
      %v1226 = vshrl.u32 %v1225, 7
      %v1227 = vsub.s32 3, %v1226
      %v1228 = vrot.slane %v469, %v1227
      %v1229 = vmul.f32 %v1217, %v1224
      %v1230 = vmul.f32 %v1219, %v1228
      %v1231 = vadd.f32 %v1092, %v1229
      %v1232 = vadd.f32 %v1093, %v1230
      %s1233 = scalar_lea.vmem %s3, 32
      %v1234 = vld [vmem:[%s1233] sm:$0xff]
      %1235 = vrot.lane.b32.xlu0 %v684, 124
      %v1236 = vpop.permute.xlu0 %1235
      %1237 = vrot.lane.b32.xlu0 %v680, 124
      %v1238 = vpop.permute.xlu0 %1237
      %1239 = vrot.lane.b32.xlu0 %v685, 124
      %v1240 = vpop.permute.xlu0 %1239
      %1241 = vrot.lane.b32.xlu0 %v694, 124
      %v1242 = vpop.permute.xlu0 %1241
      %1243 = vrot.lane.b32.xlu0 %v695, 124
      %v1244 = vpop.permute.xlu0 %1243
      %1245 = vrot.lane.b32.xlu0 %v693, 124
      %v1246 = vpop.permute.xlu0 %1245
      %1247 = vrot.lane.b32.xlu0 %v704, 124
      %v1248 = vpop.permute.xlu0 %1247
      %1249 = vrot.lane.b32.xlu0 %v705, 124
      %v1250 = vpop.permute.xlu0 %1249
      %1251 = vrot.lane.b32.xlu0 %v703, 124
      %v1252 = vpop.permute.xlu0 %1251
      %1253 = vrot.lane.b32.xlu0 %v714, 124
      %v1254 = vpop.permute.xlu0 %1253
      %1255 = vrot.lane.b32.xlu0 %v715, 124
      %v1256 = vpop.permute.xlu0 %1255
      %1257 = vrot.lane.b32.xlu0 %v713, 124
      %v1258 = vpop.permute.xlu0 %1257
      %1259 = vrot.lane.b32.xlu0 %v724, 124
      %v1260 = vpop.permute.xlu0 %1259
      %1261 = vrot.lane.b32.xlu0 %v725, 124
      %v1262 = vpop.permute.xlu0 %1261
      %1263 = vrot.lane.b32.xlu0 %v723, 124
      %v1264 = vpop.permute.xlu0 %1263
      %vm1265 = vcmask 1014784
      %v1266 = vsel %vm1265, %v1236, %v1238
      %v1267 = vsel %vm1265, %v1238, %v1240
      %v1268 = vsel %vm1265, %v1242, %v1244
      %v1269 = vsel %vm1265, %v1244, %v1246
      %v1270 = vsel %vm1265, %v1248, %v1250
      %v1271 = vsel %vm1265, %v1250, %v1252
      %v1272 = vsel %vm1265, %v1254, %v1256
      %v1273 = vsel %vm1265, %v1256, %v1258
      %v1274 = vsel %vm1265, %v1260, %v1262
      %v1275 = vsel %vm1265, %v1262, %v1264
      %v1287 = vsel %vm729, %v1234, 0
      %1289 = vmatprep.subr.mxu0 0.0
      %1290 = vmatpush1.msra.mxu0 0.0
      %1291 = vmatprep.subr.mxu0 0.0
      %1292 = vmatpush1.msra.mxu0 0.0
      %1293 = vmatprep.subr.mxu0 0.0
      %1294 = vmatpush1.msra.mxu0 0.0
      %1295 = vmatprep.subr.mxu0 0.0
      %1296 = vmatpush1.msra.mxu0 0.0
      %1297 = vmatprep.subr.mxu0 0.0
      %1298 = vmatpush1.msra.mxu0 0.0
      %1299 = vmatprep.subr.mxu0 0.0
      %1300 = vmatpush1.msra.mxu0 0.0
      %1301 = vmatprep.subr.mxu0 0.0
      %1302 = vmatpush1.msra.mxu0 0.0
      %1303 = vmatprep.subr.mxu0 0.0
      %1304 = vmatpush1.msra.mxu0 0.0
      %1305 = vmatprep.subr.mxu0 0.0
      %1306 = vmatpush1.msra.mxu0 0.0
      %1307 = vmatprep.subr.mxu0 0.0
      %1308 = vmatpush1.msra.mxu0 0.0
      %1309 = vmatprep.subr.mxu0 0.0
      %1310 = vmatpush1.msra.mxu0 0.0
      %1311 = vmatprep.subr.mxu0 %v1275
      %1312 = vmatpush1.msra.mxu0 %v1274
      %1313 = vmatprep.subr.mxu0 %v1273
      %1314 = vmatpush1.msra.mxu0 %v1272
      %1315 = vmatprep.subr.mxu0 %v1271
      %1316 = vmatpush1.msra.mxu0 %v1270
      %1317 = vmatprep.subr.mxu0 %v1269
      %1318 = vmatpush1.msra.mxu0 %v1268
      %1319 = vmatprep.subr.mxu0 %v1267
      %1320 = vmatpush1.msra.mxu0 %v1266
      %1321 = vmatprep.subr.mxu0 0.0
      %1322 = vmatpush2.msra.mxu0 0.0
      %1323 = vmatprep.subr.mxu0 0.0
      %1324 = vmatpush2.msra.mxu0 0.0
      %1325 = vmatprep.subr.mxu0 0.0
      %1326 = vmatpush2.msra.mxu0 0.0
      %1327 = vmatprep.subr.mxu0 0.0
      %1328 = vmatpush2.msra.mxu0 0.0
      %1329 = vmatprep.subr.mxu0 0.0
      %1330 = vmatpush2.msra.mxu0 0.0
      %1331 = vmatprep.subr.mxu0 0.0
      %1332 = vmatpush2.msra.mxu0 0.0
      %1333 = vmatprep.subr.mxu0 0.0
      %1334 = vmatpush2.msra.mxu0 0.0
      %1335 = vmatprep.subr.mxu0 0.0
      %1336 = vmatpush2.msra.mxu0 0.0
      %1337 = vmatprep.subr.mxu0 0.0
      %1338 = vmatpush2.msra.mxu0 0.0
      %1339 = vmatprep.subr.mxu0 0.0
      %1340 = vmatpush2.msra.mxu0 0.0
      %1341 = vmatprep.subr.mxu0 0.0
      %1342 = vmatpush2.msra.mxu0 0.0
      %1343 = vmatprep.subr.mxu0 0.0
      %1344 = vmatpush2.msra.mxu0 0.0
      %1345 = vmatprep.subr.mxu0 0.0
      %1346 = vmatpush2.msra.mxu0 0.0
      %1347 = vmatprep.subr.mxu0 0.0
      %1348 = vmatpush2.msra.mxu0 0.0
      %1349 = vmatprep.subr.mxu0 0.0
      %1350 = vmatpush2.msra.mxu0 0.0
      %1351 = vmatprep.subr.mxu0 0.0
      %1352 = vmatpush2.msra.mxu0 0.0
      %1353 = vmatprep.mubr.f32.mxu0 0.0
      %1354 = vmatmul.mubr.f32.gmra.mxu0 %v1287
      %v1355 = vpop.f32.mrf.mxu0
      %v1356 = vadd.f32 0.0, %v1355
      %v1357 = vpop.f32.mrf.mxu0
      %v1358 = vadd.f32 0.0, %v1357
      %1359 = vdwg.mxu0
      %v1360 = vlaneseq
      %v1361 = vshrl.u32 %v1360, 7
      %v1362 = vsub.s32 4, %v1361
      %v1363 = vrot.slane %v468, %v1362
      %v1364 = vlaneseq
      %v1365 = vshrl.u32 %v1364, 7
      %v1366 = vsub.s32 4, %v1365
      %v1367 = vrot.slane %v469, %v1366
      %v1368 = vmul.f32 %v1356, %v1363
      %v1369 = vmul.f32 %v1358, %v1367
      %v1370 = vadd.f32 %v1231, %v1368
      %v1371 = vadd.f32 %v1232, %v1369
      %v1372 = vld [vmem:[%s4] sm:$0xff]
      %1374 = vset.pattern.permute.xlu0 0
      %1375 = vperm.xlu0 %1374, %v1372
      %v1376 = vpop.permute.xlu0 %1375
      %v1378 = vadd.f32 %v1370, %v1376
      %v1379 = vadd.f32 %v1371, %v1376
      %v1380 = vmax.f32 %v1378, 0.0
      %v1381 = vmax.f32 %v1379, 0.0
      %1384 = vrot.lane.b32.xlu0 %v1380, 34
      %v1385 = vpop.permute.xlu0 %1384
      %1386 = vrot.lane.b32.xlu0 %v1381, 34
      %v1387 = vpop.permute.xlu0 %1386
      %v1388 = vsel %vm679, %v1385, %v1387
      %v1392 = vsel %vm679, 0.0, %v1385
      %v1393 = vsel %vm679, %v1387, 0.0
      %1396 = vrot.lane.b32.xlu0 %v1392, 112
      %v1397 = vpop.permute.xlu0 %1396
      %1398 = vrot.lane.b32.xlu0 %v1388, 112
      %v1399 = vpop.permute.xlu0 %1398
      %1400 = vrot.lane.b32.xlu0 %v1393, 112
      %v1401 = vpop.permute.xlu0 %1400
      %v1402 = vsel %vm511, %v1397, %v1399
      %v1403 = vsel %vm511, %v1399, %v1401
      %1406 = vrot.lane.b32.xlu0 %v1392, 96
      %v1407 = vpop.permute.xlu0 %1406
      %1408 = vrot.lane.b32.xlu0 %v1388, 96
      %v1409 = vpop.permute.xlu0 %1408
      %1410 = vrot.lane.b32.xlu0 %v1393, 96
      %v1411 = vpop.permute.xlu0 %1410
      %v1412 = vsel %vm534, %v1407, %v1409
      %v1413 = vsel %vm534, %v1409, %v1411
      %1416 = vrot.lane.b32.xlu0 %v1392, 80
      %v1417 = vpop.permute.xlu0 %1416
      %1418 = vrot.lane.b32.xlu0 %v1388, 80
      %v1419 = vpop.permute.xlu0 %1418
      %1420 = vrot.lane.b32.xlu0 %v1393, 80
      %v1421 = vpop.permute.xlu0 %1420
      %v1422 = vsel %vm557, %v1417, %v1419
      %v1423 = vsel %vm557, %v1419, %v1421
      %1426 = vrot.lane.b32.xlu0 %v1392, 64
      %v1427 = vpop.permute.xlu0 %1426
      %1428 = vrot.lane.b32.xlu0 %v1388, 64
      %v1429 = vpop.permute.xlu0 %1428
      %1430 = vrot.lane.b32.xlu0 %v1393, 64
      %v1431 = vpop.permute.xlu0 %1430
      %v1432 = vsel %vm478, %v1427, %v1429
      %v1433 = vsel %vm478, %v1429, %v1431
      %v1436 = vld [vmem:[%s5] sm:$0xff]
      %v1438 = vsel %vm729, %v1436, 0
      %1440 = vmatprep.subr.mxu0 0.0
      %1441 = vmatpush1.msra.mxu0 0.0
      %1442 = vmatprep.subr.mxu0 0.0
      %1443 = vmatpush1.msra.mxu0 0.0
      %1444 = vmatprep.subr.mxu0 0.0
      %1445 = vmatpush1.msra.mxu0 0.0
      %1446 = vmatprep.subr.mxu0 0.0
      %1447 = vmatpush1.msra.mxu0 0.0
      %1448 = vmatprep.subr.mxu0 0.0
      %1449 = vmatpush1.msra.mxu0 0.0
      %1450 = vmatprep.subr.mxu0 0.0
      %1451 = vmatpush1.msra.mxu0 0.0
      %1452 = vmatprep.subr.mxu0 0.0
      %1453 = vmatpush1.msra.mxu0 0.0
      %1454 = vmatprep.subr.mxu0 0.0
      %1455 = vmatpush1.msra.mxu0 0.0
      %1456 = vmatprep.subr.mxu0 0.0
      %1457 = vmatpush1.msra.mxu0 0.0
      %1458 = vmatprep.subr.mxu0 0.0
      %1459 = vmatpush1.msra.mxu0 0.0
      %1460 = vmatprep.subr.mxu0 0.0
      %1461 = vmatpush1.msra.mxu0 0.0
      %1462 = vmatprep.subr.mxu0 %v1433
      %1463 = vmatpush1.msra.mxu0 %v1432
      %1464 = vmatprep.subr.mxu0 %v1423
      %1465 = vmatpush1.msra.mxu0 %v1422
      %1466 = vmatprep.subr.mxu0 %v1413
      %1467 = vmatpush1.msra.mxu0 %v1412
      %1468 = vmatprep.subr.mxu0 %v1403
      %1469 = vmatpush1.msra.mxu0 %v1402
      %1470 = vmatprep.subr.mxu0 %v1388
      %1471 = vmatpush1.msra.mxu0 %v1392
      %1472 = vmatprep.subr.mxu0 0.0
      %1473 = vmatpush2.msra.mxu0 0.0
      %1474 = vmatprep.subr.mxu0 0.0
      %1475 = vmatpush2.msra.mxu0 0.0
      %1476 = vmatprep.subr.mxu0 0.0
      %1477 = vmatpush2.msra.mxu0 0.0
      %1478 = vmatprep.subr.mxu0 0.0
      %1479 = vmatpush2.msra.mxu0 0.0
      %1480 = vmatprep.subr.mxu0 0.0
      %1481 = vmatpush2.msra.mxu0 0.0
      %1482 = vmatprep.subr.mxu0 0.0
      %1483 = vmatpush2.msra.mxu0 0.0
      %1484 = vmatprep.subr.mxu0 0.0
      %1485 = vmatpush2.msra.mxu0 0.0
      %1486 = vmatprep.subr.mxu0 0.0
      %1487 = vmatpush2.msra.mxu0 0.0
      %1488 = vmatprep.subr.mxu0 0.0
      %1489 = vmatpush2.msra.mxu0 0.0
      %1490 = vmatprep.subr.mxu0 0.0
      %1491 = vmatpush2.msra.mxu0 0.0
      %1492 = vmatprep.subr.mxu0 0.0
      %1493 = vmatpush2.msra.mxu0 0.0
      %1494 = vmatprep.subr.mxu0 0.0
      %1495 = vmatpush2.msra.mxu0 0.0
      %1496 = vmatprep.subr.mxu0 0.0
      %1497 = vmatpush2.msra.mxu0 0.0
      %1498 = vmatprep.subr.mxu0 0.0
      %1499 = vmatpush2.msra.mxu0 0.0
      %1500 = vmatprep.subr.mxu0 0.0
      %1501 = vmatpush2.msra.mxu0 0.0
      %1502 = vmatprep.subr.mxu0 0.0
      %1503 = vmatpush2.msra.mxu0 0.0
      %1504 = vmatprep.mubr.f32.mxu0 0.0
      %1505 = vmatmul.mubr.f32.gmra.mxu0 %v1438
      %v1506 = vpop.f32.mrf.mxu0
      %v1507 = vadd.f32 0.0, %v1506
      %v1508 = vpop.f32.mrf.mxu0
      %v1509 = vadd.f32 0.0, %v1508
      %1510 = vdwg.mxu0
      %v1511 = vmul.f32 %v1507, %v807
      %v1512 = vmul.f32 %v1509, %v811
      %v1513 = vadd.f32 %v1511, 0.0
      %v1514 = vadd.f32 %v1512, 0.0
      %s1515 = scalar_lea.vmem %s5, 8
      %v1516 = vld [vmem:[%s1515] sm:$0xff]
      %1517 = vrot.lane.b32.xlu0 %v1392, 127
      %v1518 = vpop.permute.xlu0 %1517
      %1519 = vrot.lane.b32.xlu0 %v1388, 127
      %v1520 = vpop.permute.xlu0 %1519
      %1521 = vrot.lane.b32.xlu0 %v1393, 127
      %v1522 = vpop.permute.xlu0 %1521
      %1523 = vrot.lane.b32.xlu0 %v1402, 127
      %v1524 = vpop.permute.xlu0 %1523
      %1525 = vrot.lane.b32.xlu0 %v1403, 127
      %v1526 = vpop.permute.xlu0 %1525
      %1527 = vrot.lane.b32.xlu0 %v1401, 127
      %v1528 = vpop.permute.xlu0 %1527
      %1529 = vrot.lane.b32.xlu0 %v1412, 127
      %v1530 = vpop.permute.xlu0 %1529
      %1531 = vrot.lane.b32.xlu0 %v1413, 127
      %v1532 = vpop.permute.xlu0 %1531
      %1533 = vrot.lane.b32.xlu0 %v1411, 127
      %v1534 = vpop.permute.xlu0 %1533
      %1535 = vrot.lane.b32.xlu0 %v1422, 127
      %v1536 = vpop.permute.xlu0 %1535
      %1537 = vrot.lane.b32.xlu0 %v1423, 127
      %v1538 = vpop.permute.xlu0 %1537
      %1539 = vrot.lane.b32.xlu0 %v1421, 127
      %v1540 = vpop.permute.xlu0 %1539
      %1541 = vrot.lane.b32.xlu0 %v1432, 127
      %v1542 = vpop.permute.xlu0 %1541
      %1543 = vrot.lane.b32.xlu0 %v1433, 127
      %v1544 = vpop.permute.xlu0 %1543
      %1545 = vrot.lane.b32.xlu0 %v1431, 127
      %v1546 = vpop.permute.xlu0 %1545
      %v1547 = vsel %vm848, %v1518, %v1520
      %v1548 = vsel %vm848, %v1520, %v1522
      %v1549 = vsel %vm848, %v1524, %v1526
      %v1550 = vsel %vm848, %v1526, %v1528
      %v1551 = vsel %vm848, %v1530, %v1532
      %v1552 = vsel %vm848, %v1532, %v1534
      %v1553 = vsel %vm848, %v1536, %v1538
      %v1554 = vsel %vm848, %v1538, %v1540
      %v1555 = vsel %vm848, %v1542, %v1544
      %v1556 = vsel %vm848, %v1544, %v1546
      %v1568 = vsel %vm729, %v1516, 0
      %1570 = vmatprep.subr.mxu0 0.0
      %1571 = vmatpush1.msra.mxu0 0.0
      %1572 = vmatprep.subr.mxu0 0.0
      %1573 = vmatpush1.msra.mxu0 0.0
      %1574 = vmatprep.subr.mxu0 0.0
      %1575 = vmatpush1.msra.mxu0 0.0
      %1576 = vmatprep.subr.mxu0 0.0
      %1577 = vmatpush1.msra.mxu0 0.0
      %1578 = vmatprep.subr.mxu0 0.0
      %1579 = vmatpush1.msra.mxu0 0.0
      %1580 = vmatprep.subr.mxu0 0.0
      %1581 = vmatpush1.msra.mxu0 0.0
      %1582 = vmatprep.subr.mxu0 0.0
      %1583 = vmatpush1.msra.mxu0 0.0
      %1584 = vmatprep.subr.mxu0 0.0
      %1585 = vmatpush1.msra.mxu0 0.0
      %1586 = vmatprep.subr.mxu0 0.0
      %1587 = vmatpush1.msra.mxu0 0.0
      %1588 = vmatprep.subr.mxu0 0.0
      %1589 = vmatpush1.msra.mxu0 0.0
      %1590 = vmatprep.subr.mxu0 0.0
      %1591 = vmatpush1.msra.mxu0 0.0
      %1592 = vmatprep.subr.mxu0 %v1556
      %1593 = vmatpush1.msra.mxu0 %v1555
      %1594 = vmatprep.subr.mxu0 %v1554
      %1595 = vmatpush1.msra.mxu0 %v1553
      %1596 = vmatprep.subr.mxu0 %v1552
      %1597 = vmatpush1.msra.mxu0 %v1551
      %1598 = vmatprep.subr.mxu0 %v1550
      %1599 = vmatpush1.msra.mxu0 %v1549
      %1600 = vmatprep.subr.mxu0 %v1548
      %1601 = vmatpush1.msra.mxu0 %v1547
      %1602 = vmatprep.subr.mxu0 0.0
      %1603 = vmatpush2.msra.mxu0 0.0
      %1604 = vmatprep.subr.mxu0 0.0
      %1605 = vmatpush2.msra.mxu0 0.0
      %1606 = vmatprep.subr.mxu0 0.0
      %1607 = vmatpush2.msra.mxu0 0.0
      %1608 = vmatprep.subr.mxu0 0.0
      %1609 = vmatpush2.msra.mxu0 0.0
      %1610 = vmatprep.subr.mxu0 0.0
      %1611 = vmatpush2.msra.mxu0 0.0
      %1612 = vmatprep.subr.mxu0 0.0
      %1613 = vmatpush2.msra.mxu0 0.0
      %1614 = vmatprep.subr.mxu0 0.0
      %1615 = vmatpush2.msra.mxu0 0.0
      %1616 = vmatprep.subr.mxu0 0.0
      %1617 = vmatpush2.msra.mxu0 0.0
      %1618 = vmatprep.subr.mxu0 0.0
      %1619 = vmatpush2.msra.mxu0 0.0
      %1620 = vmatprep.subr.mxu0 0.0
      %1621 = vmatpush2.msra.mxu0 0.0
      %1622 = vmatprep.subr.mxu0 0.0
      %1623 = vmatpush2.msra.mxu0 0.0
      %1624 = vmatprep.subr.mxu0 0.0
      %1625 = vmatpush2.msra.mxu0 0.0
      %1626 = vmatprep.subr.mxu0 0.0
      %1627 = vmatpush2.msra.mxu0 0.0
      %1628 = vmatprep.subr.mxu0 0.0
      %1629 = vmatpush2.msra.mxu0 0.0
      %1630 = vmatprep.subr.mxu0 0.0
      %1631 = vmatpush2.msra.mxu0 0.0
      %1632 = vmatprep.subr.mxu0 0.0
      %1633 = vmatpush2.msra.mxu0 0.0
      %1634 = vmatprep.mubr.f32.mxu0 0.0
      %1635 = vmatmul.mubr.f32.gmra.mxu0 %v1568
      %v1636 = vpop.f32.mrf.mxu0
      %v1637 = vadd.f32 0.0, %v1636
      %v1638 = vpop.f32.mrf.mxu0
      %v1639 = vadd.f32 0.0, %v1638
      %1640 = vdwg.mxu0
      %v1641 = vmul.f32 %v1637, %v946
      %v1642 = vmul.f32 %v1639, %v950
      %v1643 = vadd.f32 %v1513, %v1641
      %v1644 = vadd.f32 %v1514, %v1642
      %s1645 = scalar_lea.vmem %s5, 16
      %v1646 = vld [vmem:[%s1645] sm:$0xff]
      %1647 = vrot.lane.b32.xlu0 %v1392, 126
      %v1648 = vpop.permute.xlu0 %1647
      %1649 = vrot.lane.b32.xlu0 %v1388, 126
      %v1650 = vpop.permute.xlu0 %1649
      %1651 = vrot.lane.b32.xlu0 %v1393, 126
      %v1652 = vpop.permute.xlu0 %1651
      %1653 = vrot.lane.b32.xlu0 %v1402, 126
      %v1654 = vpop.permute.xlu0 %1653
      %1655 = vrot.lane.b32.xlu0 %v1403, 126
      %v1656 = vpop.permute.xlu0 %1655
      %1657 = vrot.lane.b32.xlu0 %v1401, 126
      %v1658 = vpop.permute.xlu0 %1657
      %1659 = vrot.lane.b32.xlu0 %v1412, 126
      %v1660 = vpop.permute.xlu0 %1659
      %1661 = vrot.lane.b32.xlu0 %v1413, 126
      %v1662 = vpop.permute.xlu0 %1661
      %1663 = vrot.lane.b32.xlu0 %v1411, 126
      %v1664 = vpop.permute.xlu0 %1663
      %1665 = vrot.lane.b32.xlu0 %v1422, 126
      %v1666 = vpop.permute.xlu0 %1665
      %1667 = vrot.lane.b32.xlu0 %v1423, 126
      %v1668 = vpop.permute.xlu0 %1667
      %1669 = vrot.lane.b32.xlu0 %v1421, 126
      %v1670 = vpop.permute.xlu0 %1669
      %1671 = vrot.lane.b32.xlu0 %v1432, 126
      %v1672 = vpop.permute.xlu0 %1671
      %1673 = vrot.lane.b32.xlu0 %v1433, 126
      %v1674 = vpop.permute.xlu0 %1673
      %1675 = vrot.lane.b32.xlu0 %v1431, 126
      %v1676 = vpop.permute.xlu0 %1675
      %v1677 = vsel %vm987, %v1648, %v1650
      %v1678 = vsel %vm987, %v1650, %v1652
      %v1679 = vsel %vm987, %v1654, %v1656
      %v1680 = vsel %vm987, %v1656, %v1658
      %v1681 = vsel %vm987, %v1660, %v1662
      %v1682 = vsel %vm987, %v1662, %v1664
      %v1683 = vsel %vm987, %v1666, %v1668
      %v1684 = vsel %vm987, %v1668, %v1670
      %v1685 = vsel %vm987, %v1672, %v1674
      %v1686 = vsel %vm987, %v1674, %v1676
      %v1698 = vsel %vm729, %v1646, 0
      %1700 = vmatprep.subr.mxu0 0.0
      %1701 = vmatpush1.msra.mxu0 0.0
      %1702 = vmatprep.subr.mxu0 0.0
      %1703 = vmatpush1.msra.mxu0 0.0
      %1704 = vmatprep.subr.mxu0 0.0
      %1705 = vmatpush1.msra.mxu0 0.0
      %1706 = vmatprep.subr.mxu0 0.0
      %1707 = vmatpush1.msra.mxu0 0.0
      %1708 = vmatprep.subr.mxu0 0.0
      %1709 = vmatpush1.msra.mxu0 0.0
      %1710 = vmatprep.subr.mxu0 0.0
      %1711 = vmatpush1.msra.mxu0 0.0
      %1712 = vmatprep.subr.mxu0 0.0
      %1713 = vmatpush1.msra.mxu0 0.0
      %1714 = vmatprep.subr.mxu0 0.0
      %1715 = vmatpush1.msra.mxu0 0.0
      %1716 = vmatprep.subr.mxu0 0.0
      %1717 = vmatpush1.msra.mxu0 0.0
      %1718 = vmatprep.subr.mxu0 0.0
      %1719 = vmatpush1.msra.mxu0 0.0
      %1720 = vmatprep.subr.mxu0 0.0
      %1721 = vmatpush1.msra.mxu0 0.0
      %1722 = vmatprep.subr.mxu0 %v1686
      %1723 = vmatpush1.msra.mxu0 %v1685
      %1724 = vmatprep.subr.mxu0 %v1684
      %1725 = vmatpush1.msra.mxu0 %v1683
      %1726 = vmatprep.subr.mxu0 %v1682
      %1727 = vmatpush1.msra.mxu0 %v1681
      %1728 = vmatprep.subr.mxu0 %v1680
      %1729 = vmatpush1.msra.mxu0 %v1679
      %1730 = vmatprep.subr.mxu0 %v1678
      %1731 = vmatpush1.msra.mxu0 %v1677
      %1732 = vmatprep.subr.mxu0 0.0
      %1733 = vmatpush2.msra.mxu0 0.0
      %1734 = vmatprep.subr.mxu0 0.0
      %1735 = vmatpush2.msra.mxu0 0.0
      %1736 = vmatprep.subr.mxu0 0.0
      %1737 = vmatpush2.msra.mxu0 0.0
      %1738 = vmatprep.subr.mxu0 0.0
      %1739 = vmatpush2.msra.mxu0 0.0
      %1740 = vmatprep.subr.mxu0 0.0
      %1741 = vmatpush2.msra.mxu0 0.0
      %1742 = vmatprep.subr.mxu0 0.0
      %1743 = vmatpush2.msra.mxu0 0.0
      %1744 = vmatprep.subr.mxu0 0.0
      %1745 = vmatpush2.msra.mxu0 0.0
      %1746 = vmatprep.subr.mxu0 0.0
      %1747 = vmatpush2.msra.mxu0 0.0
      %1748 = vmatprep.subr.mxu0 0.0
      %1749 = vmatpush2.msra.mxu0 0.0
      %1750 = vmatprep.subr.mxu0 0.0
      %1751 = vmatpush2.msra.mxu0 0.0
      %1752 = vmatprep.subr.mxu0 0.0
      %1753 = vmatpush2.msra.mxu0 0.0
      %1754 = vmatprep.subr.mxu0 0.0
      %1755 = vmatpush2.msra.mxu0 0.0
      %1756 = vmatprep.subr.mxu0 0.0
      %1757 = vmatpush2.msra.mxu0 0.0
      %1758 = vmatprep.subr.mxu0 0.0
      %1759 = vmatpush2.msra.mxu0 0.0
      %1760 = vmatprep.subr.mxu0 0.0
      %1761 = vmatpush2.msra.mxu0 0.0
      %1762 = vmatprep.subr.mxu0 0.0
      %1763 = vmatpush2.msra.mxu0 0.0
      %1764 = vmatprep.mubr.f32.mxu0 0.0
      %1765 = vmatmul.mubr.f32.gmra.mxu0 %v1698
      %v1766 = vpop.f32.mrf.mxu0
      %v1767 = vadd.f32 0.0, %v1766
      %v1768 = vpop.f32.mrf.mxu0
      %v1769 = vadd.f32 0.0, %v1768
      %1770 = vdwg.mxu0
      %v1771 = vmul.f32 %v1767, %v1085
      %v1772 = vmul.f32 %v1769, %v1089
      %v1773 = vadd.f32 %v1643, %v1771
      %v1774 = vadd.f32 %v1644, %v1772
      %s1775 = scalar_lea.vmem %s5, 24
      %v1776 = vld [vmem:[%s1775] sm:$0xff]
      %1777 = vrot.lane.b32.xlu0 %v1392, 125
      %v1778 = vpop.permute.xlu0 %1777
      %1779 = vrot.lane.b32.xlu0 %v1388, 125
      %v1780 = vpop.permute.xlu0 %1779
      %1781 = vrot.lane.b32.xlu0 %v1393, 125
      %v1782 = vpop.permute.xlu0 %1781
      %1783 = vrot.lane.b32.xlu0 %v1402, 125
      %v1784 = vpop.permute.xlu0 %1783
      %1785 = vrot.lane.b32.xlu0 %v1403, 125
      %v1786 = vpop.permute.xlu0 %1785
      %1787 = vrot.lane.b32.xlu0 %v1401, 125
      %v1788 = vpop.permute.xlu0 %1787
      %1789 = vrot.lane.b32.xlu0 %v1412, 125
      %v1790 = vpop.permute.xlu0 %1789
      %1791 = vrot.lane.b32.xlu0 %v1413, 125
      %v1792 = vpop.permute.xlu0 %1791
      %1793 = vrot.lane.b32.xlu0 %v1411, 125
      %v1794 = vpop.permute.xlu0 %1793
      %1795 = vrot.lane.b32.xlu0 %v1422, 125
      %v1796 = vpop.permute.xlu0 %1795
      %1797 = vrot.lane.b32.xlu0 %v1423, 125
      %v1798 = vpop.permute.xlu0 %1797
      %1799 = vrot.lane.b32.xlu0 %v1421, 125
      %v1800 = vpop.permute.xlu0 %1799
      %1801 = vrot.lane.b32.xlu0 %v1432, 125
      %v1802 = vpop.permute.xlu0 %1801
      %1803 = vrot.lane.b32.xlu0 %v1433, 125
      %v1804 = vpop.permute.xlu0 %1803
      %1805 = vrot.lane.b32.xlu0 %v1431, 125
      %v1806 = vpop.permute.xlu0 %1805
      %v1807 = vsel %vm1126, %v1778, %v1780
      %v1808 = vsel %vm1126, %v1780, %v1782
      %v1809 = vsel %vm1126, %v1784, %v1786
      %v1810 = vsel %vm1126, %v1786, %v1788
      %v1811 = vsel %vm1126, %v1790, %v1792
      %v1812 = vsel %vm1126, %v1792, %v1794
      %v1813 = vsel %vm1126, %v1796, %v1798
      %v1814 = vsel %vm1126, %v1798, %v1800
      %v1815 = vsel %vm1126, %v1802, %v1804
      %v1816 = vsel %vm1126, %v1804, %v1806
      %v1828 = vsel %vm729, %v1776, 0
      %1830 = vmatprep.subr.mxu0 0.0
      %1831 = vmatpush1.msra.mxu0 0.0
      %1832 = vmatprep.subr.mxu0 0.0
      %1833 = vmatpush1.msra.mxu0 0.0
      %1834 = vmatprep.subr.mxu0 0.0
      %1835 = vmatpush1.msra.mxu0 0.0
      %1836 = vmatprep.subr.mxu0 0.0
      %1837 = vmatpush1.msra.mxu0 0.0
      %1838 = vmatprep.subr.mxu0 0.0
      %1839 = vmatpush1.msra.mxu0 0.0
      %1840 = vmatprep.subr.mxu0 0.0
      %1841 = vmatpush1.msra.mxu0 0.0
      %1842 = vmatprep.subr.mxu0 0.0
      %1843 = vmatpush1.msra.mxu0 0.0
      %1844 = vmatprep.subr.mxu0 0.0
      %1845 = vmatpush1.msra.mxu0 0.0
      %1846 = vmatprep.subr.mxu0 0.0
      %1847 = vmatpush1.msra.mxu0 0.0
      %1848 = vmatprep.subr.mxu0 0.0
      %1849 = vmatpush1.msra.mxu0 0.0
      %1850 = vmatprep.subr.mxu0 0.0
      %1851 = vmatpush1.msra.mxu0 0.0
      %1852 = vmatprep.subr.mxu0 %v1816
      %1853 = vmatpush1.msra.mxu0 %v1815
      %1854 = vmatprep.subr.mxu0 %v1814
      %1855 = vmatpush1.msra.mxu0 %v1813
      %1856 = vmatprep.subr.mxu0 %v1812
      %1857 = vmatpush1.msra.mxu0 %v1811
      %1858 = vmatprep.subr.mxu0 %v1810
      %1859 = vmatpush1.msra.mxu0 %v1809
      %1860 = vmatprep.subr.mxu0 %v1808
      %1861 = vmatpush1.msra.mxu0 %v1807
      %1862 = vmatprep.subr.mxu0 0.0
      %1863 = vmatpush2.msra.mxu0 0.0
      %1864 = vmatprep.subr.mxu0 0.0
      %1865 = vmatpush2.msra.mxu0 0.0
      %1866 = vmatprep.subr.mxu0 0.0
      %1867 = vmatpush2.msra.mxu0 0.0
      %1868 = vmatprep.subr.mxu0 0.0
      %1869 = vmatpush2.msra.mxu0 0.0
      %1870 = vmatprep.subr.mxu0 0.0
      %1871 = vmatpush2.msra.mxu0 0.0
      %1872 = vmatprep.subr.mxu0 0.0
      %1873 = vmatpush2.msra.mxu0 0.0
      %1874 = vmatprep.subr.mxu0 0.0
      %1875 = vmatpush2.msra.mxu0 0.0
      %1876 = vmatprep.subr.mxu0 0.0
      %1877 = vmatpush2.msra.mxu0 0.0
      %1878 = vmatprep.subr.mxu0 0.0
      %1879 = vmatpush2.msra.mxu0 0.0
      %1880 = vmatprep.subr.mxu0 0.0
      %1881 = vmatpush2.msra.mxu0 0.0
      %1882 = vmatprep.subr.mxu0 0.0
      %1883 = vmatpush2.msra.mxu0 0.0
      %1884 = vmatprep.subr.mxu0 0.0
      %1885 = vmatpush2.msra.mxu0 0.0
      %1886 = vmatprep.subr.mxu0 0.0
      %1887 = vmatpush2.msra.mxu0 0.0
      %1888 = vmatprep.subr.mxu0 0.0
      %1889 = vmatpush2.msra.mxu0 0.0
      %1890 = vmatprep.subr.mxu0 0.0
      %1891 = vmatpush2.msra.mxu0 0.0
      %1892 = vmatprep.subr.mxu0 0.0
      %1893 = vmatpush2.msra.mxu0 0.0
      %1894 = vmatprep.mubr.f32.mxu0 0.0
      %1895 = vmatmul.mubr.f32.gmra.mxu0 %v1828
      %v1896 = vpop.f32.mrf.mxu0
      %v1897 = vadd.f32 0.0, %v1896
      %v1898 = vpop.f32.mrf.mxu0
      %v1899 = vadd.f32 0.0, %v1898
      %1900 = vdwg.mxu0
      %v1901 = vmul.f32 %v1897, %v1224
      %v1902 = vmul.f32 %v1899, %v1228
      %v1903 = vadd.f32 %v1773, %v1901
      %v1904 = vadd.f32 %v1774, %v1902
      %s1905 = scalar_lea.vmem %s5, 32
      %v1906 = vld [vmem:[%s1905] sm:$0xff]
      %1907 = vrot.lane.b32.xlu0 %v1392, 124
      %v1908 = vpop.permute.xlu0 %1907
      %1909 = vrot.lane.b32.xlu0 %v1388, 124
      %v1910 = vpop.permute.xlu0 %1909
      %1911 = vrot.lane.b32.xlu0 %v1393, 124
      %v1912 = vpop.permute.xlu0 %1911
      %1913 = vrot.lane.b32.xlu0 %v1402, 124
      %v1914 = vpop.permute.xlu0 %1913
      %1915 = vrot.lane.b32.xlu0 %v1403, 124
      %v1916 = vpop.permute.xlu0 %1915
      %1917 = vrot.lane.b32.xlu0 %v1401, 124
      %v1918 = vpop.permute.xlu0 %1917
      %1919 = vrot.lane.b32.xlu0 %v1412, 124
      %v1920 = vpop.permute.xlu0 %1919
      %1921 = vrot.lane.b32.xlu0 %v1413, 124
      %v1922 = vpop.permute.xlu0 %1921
      %1923 = vrot.lane.b32.xlu0 %v1411, 124
      %v1924 = vpop.permute.xlu0 %1923
      %1925 = vrot.lane.b32.xlu0 %v1422, 124
      %v1926 = vpop.permute.xlu0 %1925
      %1927 = vrot.lane.b32.xlu0 %v1423, 124
      %v1928 = vpop.permute.xlu0 %1927
      %1929 = vrot.lane.b32.xlu0 %v1421, 124
      %v1930 = vpop.permute.xlu0 %1929
      %1931 = vrot.lane.b32.xlu0 %v1432, 124
      %v1932 = vpop.permute.xlu0 %1931
      %1933 = vrot.lane.b32.xlu0 %v1433, 124
      %v1934 = vpop.permute.xlu0 %1933
      %1935 = vrot.lane.b32.xlu0 %v1431, 124
      %v1936 = vpop.permute.xlu0 %1935
      %v1937 = vsel %vm1265, %v1908, %v1910
      %v1938 = vsel %vm1265, %v1910, %v1912
      %v1939 = vsel %vm1265, %v1914, %v1916
      %v1940 = vsel %vm1265, %v1916, %v1918
      %v1941 = vsel %vm1265, %v1920, %v1922
      %v1942 = vsel %vm1265, %v1922, %v1924
      %v1943 = vsel %vm1265, %v1926, %v1928
      %v1944 = vsel %vm1265, %v1928, %v1930
      %v1945 = vsel %vm1265, %v1932, %v1934
      %v1946 = vsel %vm1265, %v1934, %v1936
      %v1958 = vsel %vm729, %v1906, 0
      %1960 = vmatprep.subr.mxu0 0.0
      %1961 = vmatpush1.msra.mxu0 0.0
      %1962 = vmatprep.subr.mxu0 0.0
      %1963 = vmatpush1.msra.mxu0 0.0
      %1964 = vmatprep.subr.mxu0 0.0
      %1965 = vmatpush1.msra.mxu0 0.0
      %1966 = vmatprep.subr.mxu0 0.0
      %1967 = vmatpush1.msra.mxu0 0.0
      %1968 = vmatprep.subr.mxu0 0.0
      %1969 = vmatpush1.msra.mxu0 0.0
      %1970 = vmatprep.subr.mxu0 0.0
      %1971 = vmatpush1.msra.mxu0 0.0
      %1972 = vmatprep.subr.mxu0 0.0
      %1973 = vmatpush1.msra.mxu0 0.0
      %1974 = vmatprep.subr.mxu0 0.0
      %1975 = vmatpush1.msra.mxu0 0.0
      %1976 = vmatprep.subr.mxu0 0.0
      %1977 = vmatpush1.msra.mxu0 0.0
      %1978 = vmatprep.subr.mxu0 0.0
      %1979 = vmatpush1.msra.mxu0 0.0
      %1980 = vmatprep.subr.mxu0 0.0
      %1981 = vmatpush1.msra.mxu0 0.0
      %1982 = vmatprep.subr.mxu0 %v1946
      %1983 = vmatpush1.msra.mxu0 %v1945
      %1984 = vmatprep.subr.mxu0 %v1944
      %1985 = vmatpush1.msra.mxu0 %v1943
      %1986 = vmatprep.subr.mxu0 %v1942
      %1987 = vmatpush1.msra.mxu0 %v1941
      %1988 = vmatprep.subr.mxu0 %v1940
      %1989 = vmatpush1.msra.mxu0 %v1939
      %1990 = vmatprep.subr.mxu0 %v1938
      %1991 = vmatpush1.msra.mxu0 %v1937
      %1992 = vmatprep.subr.mxu0 0.0
      %1993 = vmatpush2.msra.mxu0 0.0
      %1994 = vmatprep.subr.mxu0 0.0
      %1995 = vmatpush2.msra.mxu0 0.0
      %1996 = vmatprep.subr.mxu0 0.0
      %1997 = vmatpush2.msra.mxu0 0.0
      %1998 = vmatprep.subr.mxu0 0.0
      %1999 = vmatpush2.msra.mxu0 0.0
      %2000 = vmatprep.subr.mxu0 0.0
      %2001 = vmatpush2.msra.mxu0 0.0
      %2002 = vmatprep.subr.mxu0 0.0
      %2003 = vmatpush2.msra.mxu0 0.0
      %2004 = vmatprep.subr.mxu0 0.0
      %2005 = vmatpush2.msra.mxu0 0.0
      %2006 = vmatprep.subr.mxu0 0.0
      %2007 = vmatpush2.msra.mxu0 0.0
      %2008 = vmatprep.subr.mxu0 0.0
      %2009 = vmatpush2.msra.mxu0 0.0
      %2010 = vmatprep.subr.mxu0 0.0
      %2011 = vmatpush2.msra.mxu0 0.0
      %2012 = vmatprep.subr.mxu0 0.0
      %2013 = vmatpush2.msra.mxu0 0.0
      %2014 = vmatprep.subr.mxu0 0.0
      %2015 = vmatpush2.msra.mxu0 0.0
      %2016 = vmatprep.subr.mxu0 0.0
      %2017 = vmatpush2.msra.mxu0 0.0
      %2018 = vmatprep.subr.mxu0 0.0
      %2019 = vmatpush2.msra.mxu0 0.0
      %2020 = vmatprep.subr.mxu0 0.0
      %2021 = vmatpush2.msra.mxu0 0.0
      %2022 = vmatprep.subr.mxu0 0.0
      %2023 = vmatpush2.msra.mxu0 0.0
      %2024 = vmatprep.mubr.f32.mxu0 0.0
      %2025 = vmatmul.mubr.f32.gmra.mxu0 %v1958
      %v2026 = vpop.f32.mrf.mxu0
      %v2027 = vadd.f32 0.0, %v2026
      %v2028 = vpop.f32.mrf.mxu0
      %v2029 = vadd.f32 0.0, %v2028
      %2030 = vdwg.mxu0
      %v2031 = vmul.f32 %v2027, %v1363
      %v2032 = vmul.f32 %v2029, %v1367
      %v2033 = vadd.f32 %v1903, %v2031
      %v2034 = vadd.f32 %v1904, %v2032
      %v2035 = vld [vmem:[%s6] sm:$0xff]
      %2037 = vset.pattern.permute.xlu0 0
      %2038 = vperm.xlu0 %2037, %v2035
      %v2039 = vpop.permute.xlu0 %2038
      %v2041 = vadd.f32 %v2033, %v2039
      %v2042 = vadd.f32 %v2034, %v2039
      %v2043 = vadd.f32 %v2041, %v671
      %v2044 = vadd.f32 %v2042, %v672
      %v2045 = vmax.f32 %v2043, 0.0
      %v2046 = vmax.f32 %v2044, 0.0
      %2049 = vrot.lane.b32.xlu0 %v2045, 34
      %v2050 = vpop.permute.xlu0 %2049
      %2051 = vrot.lane.b32.xlu0 %v2046, 34
      %v2052 = vpop.permute.xlu0 %2051
      %v2053 = vsel %vm679, %v2050, %v2052
      %v2057 = vsel %vm679, 0.0, %v2050
      %v2058 = vsel %vm679, %v2052, 0.0
      %2061 = vrot.lane.b32.xlu0 %v2057, 112
      %v2062 = vpop.permute.xlu0 %2061
      %2063 = vrot.lane.b32.xlu0 %v2053, 112
      %v2064 = vpop.permute.xlu0 %2063
      %2065 = vrot.lane.b32.xlu0 %v2058, 112
      %v2066 = vpop.permute.xlu0 %2065
      %v2067 = vsel %vm511, %v2062, %v2064
      %v2068 = vsel %vm511, %v2064, %v2066
      %2071 = vrot.lane.b32.xlu0 %v2057, 96
      %v2072 = vpop.permute.xlu0 %2071
      %2073 = vrot.lane.b32.xlu0 %v2053, 96
      %v2074 = vpop.permute.xlu0 %2073
      %2075 = vrot.lane.b32.xlu0 %v2058, 96
      %v2076 = vpop.permute.xlu0 %2075
      %v2077 = vsel %vm534, %v2072, %v2074
      %v2078 = vsel %vm534, %v2074, %v2076
      %2081 = vrot.lane.b32.xlu0 %v2057, 80
      %v2082 = vpop.permute.xlu0 %2081
      %2083 = vrot.lane.b32.xlu0 %v2053, 80
      %v2084 = vpop.permute.xlu0 %2083
      %2085 = vrot.lane.b32.xlu0 %v2058, 80
      %v2086 = vpop.permute.xlu0 %2085
      %v2087 = vsel %vm557, %v2082, %v2084
      %v2088 = vsel %vm557, %v2084, %v2086
      %2091 = vrot.lane.b32.xlu0 %v2057, 64
      %v2092 = vpop.permute.xlu0 %2091
      %2093 = vrot.lane.b32.xlu0 %v2053, 64
      %v2094 = vpop.permute.xlu0 %2093
      %2095 = vrot.lane.b32.xlu0 %v2058, 64
      %v2096 = vpop.permute.xlu0 %2095
      %v2097 = vsel %vm478, %v2092, %v2094
      %v2098 = vsel %vm478, %v2094, %v2096
      %v2101 = vld [vmem:[%s7] sm:$0xff]
      %v2103 = vsel %vm729, %v2101, 0
      %2105 = vmatprep.subr.mxu0 0.0
      %2106 = vmatpush1.msra.mxu0 0.0
      %2107 = vmatprep.subr.mxu0 0.0
      %2108 = vmatpush1.msra.mxu0 0.0
      %2109 = vmatprep.subr.mxu0 0.0
      %2110 = vmatpush1.msra.mxu0 0.0
      %2111 = vmatprep.subr.mxu0 0.0
      %2112 = vmatpush1.msra.mxu0 0.0
      %2113 = vmatprep.subr.mxu0 0.0
      %2114 = vmatpush1.msra.mxu0 0.0
      %2115 = vmatprep.subr.mxu0 0.0
      %2116 = vmatpush1.msra.mxu0 0.0
      %2117 = vmatprep.subr.mxu0 0.0
      %2118 = vmatpush1.msra.mxu0 0.0
      %2119 = vmatprep.subr.mxu0 0.0
      %2120 = vmatpush1.msra.mxu0 0.0
      %2121 = vmatprep.subr.mxu0 0.0
      %2122 = vmatpush1.msra.mxu0 0.0
      %2123 = vmatprep.subr.mxu0 0.0
      %2124 = vmatpush1.msra.mxu0 0.0
      %2125 = vmatprep.subr.mxu0 0.0
      %2126 = vmatpush1.msra.mxu0 0.0
      %2127 = vmatprep.subr.mxu0 %v2098
      %2128 = vmatpush1.msra.mxu0 %v2097
      %2129 = vmatprep.subr.mxu0 %v2088
      %2130 = vmatpush1.msra.mxu0 %v2087
      %2131 = vmatprep.subr.mxu0 %v2078
      %2132 = vmatpush1.msra.mxu0 %v2077
      %2133 = vmatprep.subr.mxu0 %v2068
      %2134 = vmatpush1.msra.mxu0 %v2067
      %2135 = vmatprep.subr.mxu0 %v2053
      %2136 = vmatpush1.msra.mxu0 %v2057
      %2137 = vmatprep.subr.mxu0 0.0
      %2138 = vmatpush2.msra.mxu0 0.0
      %2139 = vmatprep.subr.mxu0 0.0
      %2140 = vmatpush2.msra.mxu0 0.0
      %2141 = vmatprep.subr.mxu0 0.0
      %2142 = vmatpush2.msra.mxu0 0.0
      %2143 = vmatprep.subr.mxu0 0.0
      %2144 = vmatpush2.msra.mxu0 0.0
      %2145 = vmatprep.subr.mxu0 0.0
      %2146 = vmatpush2.msra.mxu0 0.0
      %2147 = vmatprep.subr.mxu0 0.0
      %2148 = vmatpush2.msra.mxu0 0.0
      %2149 = vmatprep.subr.mxu0 0.0
      %2150 = vmatpush2.msra.mxu0 0.0
      %2151 = vmatprep.subr.mxu0 0.0
      %2152 = vmatpush2.msra.mxu0 0.0
      %2153 = vmatprep.subr.mxu0 0.0
      %2154 = vmatpush2.msra.mxu0 0.0
      %2155 = vmatprep.subr.mxu0 0.0
      %2156 = vmatpush2.msra.mxu0 0.0
      %2157 = vmatprep.subr.mxu0 0.0
      %2158 = vmatpush2.msra.mxu0 0.0
      %2159 = vmatprep.subr.mxu0 0.0
      %2160 = vmatpush2.msra.mxu0 0.0
      %2161 = vmatprep.subr.mxu0 0.0
      %2162 = vmatpush2.msra.mxu0 0.0
      %2163 = vmatprep.subr.mxu0 0.0
      %2164 = vmatpush2.msra.mxu0 0.0
      %2165 = vmatprep.subr.mxu0 0.0
      %2166 = vmatpush2.msra.mxu0 0.0
      %2167 = vmatprep.subr.mxu0 0.0
      %2168 = vmatpush2.msra.mxu0 0.0
      %2169 = vmatprep.mubr.f32.mxu0 0.0
      %2170 = vmatmul.mubr.f32.gmra.mxu0 %v2103
      %v2171 = vpop.f32.mrf.mxu0
      %v2172 = vadd.f32 0.0, %v2171
      %v2173 = vpop.f32.mrf.mxu0
      %v2174 = vadd.f32 0.0, %v2173
      %2175 = vdwg.mxu0
      %v2176 = vmul.f32 %v2172, %v807
      %v2177 = vmul.f32 %v2174, %v811
      %v2178 = vadd.f32 %v2176, 0.0
      %v2179 = vadd.f32 %v2177, 0.0
      %s2180 = scalar_lea.vmem %s7, 8
      %v2181 = vld [vmem:[%s2180] sm:$0xff]
      %2182 = vrot.lane.b32.xlu0 %v2057, 127
      %v2183 = vpop.permute.xlu0 %2182
      %2184 = vrot.lane.b32.xlu0 %v2053, 127
      %v2185 = vpop.permute.xlu0 %2184
      %2186 = vrot.lane.b32.xlu0 %v2058, 127
      %v2187 = vpop.permute.xlu0 %2186
      %2188 = vrot.lane.b32.xlu0 %v2067, 127
      %v2189 = vpop.permute.xlu0 %2188
      %2190 = vrot.lane.b32.xlu0 %v2068, 127
      %v2191 = vpop.permute.xlu0 %2190
      %2192 = vrot.lane.b32.xlu0 %v2066, 127
      %v2193 = vpop.permute.xlu0 %2192
      %2194 = vrot.lane.b32.xlu0 %v2077, 127
      %v2195 = vpop.permute.xlu0 %2194
      %2196 = vrot.lane.b32.xlu0 %v2078, 127
      %v2197 = vpop.permute.xlu0 %2196
      %2198 = vrot.lane.b32.xlu0 %v2076, 127
      %v2199 = vpop.permute.xlu0 %2198
      %2200 = vrot.lane.b32.xlu0 %v2087, 127
      %v2201 = vpop.permute.xlu0 %2200
      %2202 = vrot.lane.b32.xlu0 %v2088, 127
      %v2203 = vpop.permute.xlu0 %2202
      %2204 = vrot.lane.b32.xlu0 %v2086, 127
      %v2205 = vpop.permute.xlu0 %2204
      %2206 = vrot.lane.b32.xlu0 %v2097, 127
      %v2207 = vpop.permute.xlu0 %2206
      %2208 = vrot.lane.b32.xlu0 %v2098, 127
      %v2209 = vpop.permute.xlu0 %2208
      %2210 = vrot.lane.b32.xlu0 %v2096, 127
      %v2211 = vpop.permute.xlu0 %2210
      %v2212 = vsel %vm848, %v2183, %v2185
      %v2213 = vsel %vm848, %v2185, %v2187
      %v2214 = vsel %vm848, %v2189, %v2191
      %v2215 = vsel %vm848, %v2191, %v2193
      %v2216 = vsel %vm848, %v2195, %v2197
      %v2217 = vsel %vm848, %v2197, %v2199
      %v2218 = vsel %vm848, %v2201, %v2203
      %v2219 = vsel %vm848, %v2203, %v2205
      %v2220 = vsel %vm848, %v2207, %v2209
      %v2221 = vsel %vm848, %v2209, %v2211
      %v2233 = vsel %vm729, %v2181, 0
      %2235 = vmatprep.subr.mxu0 0.0
      %2236 = vmatpush1.msra.mxu0 0.0
      %2237 = vmatprep.subr.mxu0 0.0
      %2238 = vmatpush1.msra.mxu0 0.0
      %2239 = vmatprep.subr.mxu0 0.0
      %2240 = vmatpush1.msra.mxu0 0.0
      %2241 = vmatprep.subr.mxu0 0.0
      %2242 = vmatpush1.msra.mxu0 0.0
      %2243 = vmatprep.subr.mxu0 0.0
      %2244 = vmatpush1.msra.mxu0 0.0
      %2245 = vmatprep.subr.mxu0 0.0
      %2246 = vmatpush1.msra.mxu0 0.0
      %2247 = vmatprep.subr.mxu0 0.0
      %2248 = vmatpush1.msra.mxu0 0.0
      %2249 = vmatprep.subr.mxu0 0.0
      %2250 = vmatpush1.msra.mxu0 0.0
      %2251 = vmatprep.subr.mxu0 0.0
      %2252 = vmatpush1.msra.mxu0 0.0
      %2253 = vmatprep.subr.mxu0 0.0
      %2254 = vmatpush1.msra.mxu0 0.0
      %2255 = vmatprep.subr.mxu0 0.0
      %2256 = vmatpush1.msra.mxu0 0.0
      %2257 = vmatprep.subr.mxu0 %v2221
      %2258 = vmatpush1.msra.mxu0 %v2220
      %2259 = vmatprep.subr.mxu0 %v2219
      %2260 = vmatpush1.msra.mxu0 %v2218
      %2261 = vmatprep.subr.mxu0 %v2217
      %2262 = vmatpush1.msra.mxu0 %v2216
      %2263 = vmatprep.subr.mxu0 %v2215
      %2264 = vmatpush1.msra.mxu0 %v2214
      %2265 = vmatprep.subr.mxu0 %v2213
      %2266 = vmatpush1.msra.mxu0 %v2212
      %2267 = vmatprep.subr.mxu0 0.0
      %2268 = vmatpush2.msra.mxu0 0.0
      %2269 = vmatprep.subr.mxu0 0.0
      %2270 = vmatpush2.msra.mxu0 0.0
      %2271 = vmatprep.subr.mxu0 0.0
      %2272 = vmatpush2.msra.mxu0 0.0
      %2273 = vmatprep.subr.mxu0 0.0
      %2274 = vmatpush2.msra.mxu0 0.0
      %2275 = vmatprep.subr.mxu0 0.0
      %2276 = vmatpush2.msra.mxu0 0.0
      %2277 = vmatprep.subr.mxu0 0.0
      %2278 = vmatpush2.msra.mxu0 0.0
      %2279 = vmatprep.subr.mxu0 0.0
      %2280 = vmatpush2.msra.mxu0 0.0
      %2281 = vmatprep.subr.mxu0 0.0
      %2282 = vmatpush2.msra.mxu0 0.0
      %2283 = vmatprep.subr.mxu0 0.0
      %2284 = vmatpush2.msra.mxu0 0.0
      %2285 = vmatprep.subr.mxu0 0.0
      %2286 = vmatpush2.msra.mxu0 0.0
      %2287 = vmatprep.subr.mxu0 0.0
      %2288 = vmatpush2.msra.mxu0 0.0
      %2289 = vmatprep.subr.mxu0 0.0
      %2290 = vmatpush2.msra.mxu0 0.0
      %2291 = vmatprep.subr.mxu0 0.0
      %2292 = vmatpush2.msra.mxu0 0.0
      %2293 = vmatprep.subr.mxu0 0.0
      %2294 = vmatpush2.msra.mxu0 0.0
      %2295 = vmatprep.subr.mxu0 0.0
      %2296 = vmatpush2.msra.mxu0 0.0
      %2297 = vmatprep.subr.mxu0 0.0
      %2298 = vmatpush2.msra.mxu0 0.0
      %2299 = vmatprep.mubr.f32.mxu0 0.0
      %2300 = vmatmul.mubr.f32.gmra.mxu0 %v2233
      %v2301 = vpop.f32.mrf.mxu0
      %v2302 = vadd.f32 0.0, %v2301
      %v2303 = vpop.f32.mrf.mxu0
      %v2304 = vadd.f32 0.0, %v2303
      %2305 = vdwg.mxu0
      %v2306 = vmul.f32 %v2302, %v946
      %v2307 = vmul.f32 %v2304, %v950
      %v2308 = vadd.f32 %v2178, %v2306
      %v2309 = vadd.f32 %v2179, %v2307
      %s2310 = scalar_lea.vmem %s7, 16
      %v2311 = vld [vmem:[%s2310] sm:$0xff]
      %2312 = vrot.lane.b32.xlu0 %v2057, 126
      %v2313 = vpop.permute.xlu0 %2312
      %2314 = vrot.lane.b32.xlu0 %v2053, 126
      %v2315 = vpop.permute.xlu0 %2314
      %2316 = vrot.lane.b32.xlu0 %v2058, 126
      %v2317 = vpop.permute.xlu0 %2316
      %2318 = vrot.lane.b32.xlu0 %v2067, 126
      %v2319 = vpop.permute.xlu0 %2318
      %2320 = vrot.lane.b32.xlu0 %v2068, 126
      %v2321 = vpop.permute.xlu0 %2320
      %2322 = vrot.lane.b32.xlu0 %v2066, 126
      %v2323 = vpop.permute.xlu0 %2322
      %2324 = vrot.lane.b32.xlu0 %v2077, 126
      %v2325 = vpop.permute.xlu0 %2324
      %2326 = vrot.lane.b32.xlu0 %v2078, 126
      %v2327 = vpop.permute.xlu0 %2326
      %2328 = vrot.lane.b32.xlu0 %v2076, 126
      %v2329 = vpop.permute.xlu0 %2328
      %2330 = vrot.lane.b32.xlu0 %v2087, 126
      %v2331 = vpop.permute.xlu0 %2330
      %2332 = vrot.lane.b32.xlu0 %v2088, 126
      %v2333 = vpop.permute.xlu0 %2332
      %2334 = vrot.lane.b32.xlu0 %v2086, 126
      %v2335 = vpop.permute.xlu0 %2334
      %2336 = vrot.lane.b32.xlu0 %v2097, 126
      %v2337 = vpop.permute.xlu0 %2336
      %2338 = vrot.lane.b32.xlu0 %v2098, 126
      %v2339 = vpop.permute.xlu0 %2338
      %2340 = vrot.lane.b32.xlu0 %v2096, 126
      %v2341 = vpop.permute.xlu0 %2340
      %v2342 = vsel %vm987, %v2313, %v2315
      %v2343 = vsel %vm987, %v2315, %v2317
      %v2344 = vsel %vm987, %v2319, %v2321
      %v2345 = vsel %vm987, %v2321, %v2323
      %v2346 = vsel %vm987, %v2325, %v2327
      %v2347 = vsel %vm987, %v2327, %v2329
      %v2348 = vsel %vm987, %v2331, %v2333
      %v2349 = vsel %vm987, %v2333, %v2335
      %v2350 = vsel %vm987, %v2337, %v2339
      %v2351 = vsel %vm987, %v2339, %v2341
      %v2363 = vsel %vm729, %v2311, 0
      %2365 = vmatprep.subr.mxu0 0.0
      %2366 = vmatpush1.msra.mxu0 0.0
      %2367 = vmatprep.subr.mxu0 0.0
      %2368 = vmatpush1.msra.mxu0 0.0
      %2369 = vmatprep.subr.mxu0 0.0
      %2370 = vmatpush1.msra.mxu0 0.0
      %2371 = vmatprep.subr.mxu0 0.0
      %2372 = vmatpush1.msra.mxu0 0.0
      %2373 = vmatprep.subr.mxu0 0.0
      %2374 = vmatpush1.msra.mxu0 0.0
      %2375 = vmatprep.subr.mxu0 0.0
      %2376 = vmatpush1.msra.mxu0 0.0
      %2377 = vmatprep.subr.mxu0 0.0
      %2378 = vmatpush1.msra.mxu0 0.0
      %2379 = vmatprep.subr.mxu0 0.0
      %2380 = vmatpush1.msra.mxu0 0.0
      %2381 = vmatprep.subr.mxu0 0.0
      %2382 = vmatpush1.msra.mxu0 0.0
      %2383 = vmatprep.subr.mxu0 0.0
      %2384 = vmatpush1.msra.mxu0 0.0
      %2385 = vmatprep.subr.mxu0 0.0
      %2386 = vmatpush1.msra.mxu0 0.0
      %2387 = vmatprep.subr.mxu0 %v2351
      %2388 = vmatpush1.msra.mxu0 %v2350
      %2389 = vmatprep.subr.mxu0 %v2349
      %2390 = vmatpush1.msra.mxu0 %v2348
      %2391 = vmatprep.subr.mxu0 %v2347
      %2392 = vmatpush1.msra.mxu0 %v2346
      %2393 = vmatprep.subr.mxu0 %v2345
      %2394 = vmatpush1.msra.mxu0 %v2344
      %2395 = vmatprep.subr.mxu0 %v2343
      %2396 = vmatpush1.msra.mxu0 %v2342
      %2397 = vmatprep.subr.mxu0 0.0
      %2398 = vmatpush2.msra.mxu0 0.0
      %2399 = vmatprep.subr.mxu0 0.0
      %2400 = vmatpush2.msra.mxu0 0.0
      %2401 = vmatprep.subr.mxu0 0.0
      %2402 = vmatpush2.msra.mxu0 0.0
      %2403 = vmatprep.subr.mxu0 0.0
      %2404 = vmatpush2.msra.mxu0 0.0
      %2405 = vmatprep.subr.mxu0 0.0
      %2406 = vmatpush2.msra.mxu0 0.0
      %2407 = vmatprep.subr.mxu0 0.0
      %2408 = vmatpush2.msra.mxu0 0.0
      %2409 = vmatprep.subr.mxu0 0.0
      %2410 = vmatpush2.msra.mxu0 0.0
      %2411 = vmatprep.subr.mxu0 0.0
      %2412 = vmatpush2.msra.mxu0 0.0
      %2413 = vmatprep.subr.mxu0 0.0
      %2414 = vmatpush2.msra.mxu0 0.0
      %2415 = vmatprep.subr.mxu0 0.0
      %2416 = vmatpush2.msra.mxu0 0.0
      %2417 = vmatprep.subr.mxu0 0.0
      %2418 = vmatpush2.msra.mxu0 0.0
      %2419 = vmatprep.subr.mxu0 0.0
      %2420 = vmatpush2.msra.mxu0 0.0
      %2421 = vmatprep.subr.mxu0 0.0
      %2422 = vmatpush2.msra.mxu0 0.0
      %2423 = vmatprep.subr.mxu0 0.0
      %2424 = vmatpush2.msra.mxu0 0.0
      %2425 = vmatprep.subr.mxu0 0.0
      %2426 = vmatpush2.msra.mxu0 0.0
      %2427 = vmatprep.subr.mxu0 0.0
      %2428 = vmatpush2.msra.mxu0 0.0
      %2429 = vmatprep.mubr.f32.mxu0 0.0
      %2430 = vmatmul.mubr.f32.gmra.mxu0 %v2363
      %v2431 = vpop.f32.mrf.mxu0
      %v2432 = vadd.f32 0.0, %v2431
      %v2433 = vpop.f32.mrf.mxu0
      %v2434 = vadd.f32 0.0, %v2433
      %2435 = vdwg.mxu0
      %v2436 = vmul.f32 %v2432, %v1085
      %v2437 = vmul.f32 %v2434, %v1089
      %v2438 = vadd.f32 %v2308, %v2436
      %v2439 = vadd.f32 %v2309, %v2437
      %s2440 = scalar_lea.vmem %s7, 24
      %v2441 = vld [vmem:[%s2440] sm:$0xff]
      %2442 = vrot.lane.b32.xlu0 %v2057, 125
      %v2443 = vpop.permute.xlu0 %2442
      %2444 = vrot.lane.b32.xlu0 %v2053, 125
      %v2445 = vpop.permute.xlu0 %2444
      %2446 = vrot.lane.b32.xlu0 %v2058, 125
      %v2447 = vpop.permute.xlu0 %2446
      %2448 = vrot.lane.b32.xlu0 %v2067, 125
      %v2449 = vpop.permute.xlu0 %2448
      %2450 = vrot.lane.b32.xlu0 %v2068, 125
      %v2451 = vpop.permute.xlu0 %2450
      %2452 = vrot.lane.b32.xlu0 %v2066, 125
      %v2453 = vpop.permute.xlu0 %2452
      %2454 = vrot.lane.b32.xlu0 %v2077, 125
      %v2455 = vpop.permute.xlu0 %2454
      %2456 = vrot.lane.b32.xlu0 %v2078, 125
      %v2457 = vpop.permute.xlu0 %2456
      %2458 = vrot.lane.b32.xlu0 %v2076, 125
      %v2459 = vpop.permute.xlu0 %2458
      %2460 = vrot.lane.b32.xlu0 %v2087, 125
      %v2461 = vpop.permute.xlu0 %2460
      %2462 = vrot.lane.b32.xlu0 %v2088, 125
      %v2463 = vpop.permute.xlu0 %2462
      %2464 = vrot.lane.b32.xlu0 %v2086, 125
      %v2465 = vpop.permute.xlu0 %2464
      %2466 = vrot.lane.b32.xlu0 %v2097, 125
      %v2467 = vpop.permute.xlu0 %2466
      %2468 = vrot.lane.b32.xlu0 %v2098, 125
      %v2469 = vpop.permute.xlu0 %2468
      %2470 = vrot.lane.b32.xlu0 %v2096, 125
      %v2471 = vpop.permute.xlu0 %2470
      %v2472 = vsel %vm1126, %v2443, %v2445
      %v2473 = vsel %vm1126, %v2445, %v2447
      %v2474 = vsel %vm1126, %v2449, %v2451
      %v2475 = vsel %vm1126, %v2451, %v2453
      %v2476 = vsel %vm1126, %v2455, %v2457
      %v2477 = vsel %vm1126, %v2457, %v2459
      %v2478 = vsel %vm1126, %v2461, %v2463
      %v2479 = vsel %vm1126, %v2463, %v2465
      %v2480 = vsel %vm1126, %v2467, %v2469
      %v2481 = vsel %vm1126, %v2469, %v2471
      %v2493 = vsel %vm729, %v2441, 0
      %2495 = vmatprep.subr.mxu0 0.0
      %2496 = vmatpush1.msra.mxu0 0.0
      %2497 = vmatprep.subr.mxu0 0.0
      %2498 = vmatpush1.msra.mxu0 0.0
      %2499 = vmatprep.subr.mxu0 0.0
      %2500 = vmatpush1.msra.mxu0 0.0
      %2501 = vmatprep.subr.mxu0 0.0
      %2502 = vmatpush1.msra.mxu0 0.0
      %2503 = vmatprep.subr.mxu0 0.0
      %2504 = vmatpush1.msra.mxu0 0.0
      %2505 = vmatprep.subr.mxu0 0.0
      %2506 = vmatpush1.msra.mxu0 0.0
      %2507 = vmatprep.subr.mxu0 0.0
      %2508 = vmatpush1.msra.mxu0 0.0
      %2509 = vmatprep.subr.mxu0 0.0
      %2510 = vmatpush1.msra.mxu0 0.0
      %2511 = vmatprep.subr.mxu0 0.0
      %2512 = vmatpush1.msra.mxu0 0.0
      %2513 = vmatprep.subr.mxu0 0.0
      %2514 = vmatpush1.msra.mxu0 0.0
      %2515 = vmatprep.subr.mxu0 0.0
      %2516 = vmatpush1.msra.mxu0 0.0
      %2517 = vmatprep.subr.mxu0 %v2481
      %2518 = vmatpush1.msra.mxu0 %v2480
      %2519 = vmatprep.subr.mxu0 %v2479
      %2520 = vmatpush1.msra.mxu0 %v2478
      %2521 = vmatprep.subr.mxu0 %v2477
      %2522 = vmatpush1.msra.mxu0 %v2476
      %2523 = vmatprep.subr.mxu0 %v2475
      %2524 = vmatpush1.msra.mxu0 %v2474
      %2525 = vmatprep.subr.mxu0 %v2473
      %2526 = vmatpush1.msra.mxu0 %v2472
      %2527 = vmatprep.subr.mxu0 0.0
      %2528 = vmatpush2.msra.mxu0 0.0
      %2529 = vmatprep.subr.mxu0 0.0
      %2530 = vmatpush2.msra.mxu0 0.0
      %2531 = vmatprep.subr.mxu0 0.0
      %2532 = vmatpush2.msra.mxu0 0.0
      %2533 = vmatprep.subr.mxu0 0.0
      %2534 = vmatpush2.msra.mxu0 0.0
      %2535 = vmatprep.subr.mxu0 0.0
      %2536 = vmatpush2.msra.mxu0 0.0
      %2537 = vmatprep.subr.mxu0 0.0
      %2538 = vmatpush2.msra.mxu0 0.0
      %2539 = vmatprep.subr.mxu0 0.0
      %2540 = vmatpush2.msra.mxu0 0.0
      %2541 = vmatprep.subr.mxu0 0.0
      %2542 = vmatpush2.msra.mxu0 0.0
      %2543 = vmatprep.subr.mxu0 0.0
      %2544 = vmatpush2.msra.mxu0 0.0
      %2545 = vmatprep.subr.mxu0 0.0
      %2546 = vmatpush2.msra.mxu0 0.0
      %2547 = vmatprep.subr.mxu0 0.0
      %2548 = vmatpush2.msra.mxu0 0.0
      %2549 = vmatprep.subr.mxu0 0.0
      %2550 = vmatpush2.msra.mxu0 0.0
      %2551 = vmatprep.subr.mxu0 0.0
      %2552 = vmatpush2.msra.mxu0 0.0
      %2553 = vmatprep.subr.mxu0 0.0
      %2554 = vmatpush2.msra.mxu0 0.0
      %2555 = vmatprep.subr.mxu0 0.0
      %2556 = vmatpush2.msra.mxu0 0.0
      %2557 = vmatprep.subr.mxu0 0.0
      %2558 = vmatpush2.msra.mxu0 0.0
      %2559 = vmatprep.mubr.f32.mxu0 0.0
      %2560 = vmatmul.mubr.f32.gmra.mxu0 %v2493
      %v2561 = vpop.f32.mrf.mxu0
      %v2562 = vadd.f32 0.0, %v2561
      %v2563 = vpop.f32.mrf.mxu0
      %v2564 = vadd.f32 0.0, %v2563
      %2565 = vdwg.mxu0
      %v2566 = vmul.f32 %v2562, %v1224
      %v2567 = vmul.f32 %v2564, %v1228
      %v2568 = vadd.f32 %v2438, %v2566
      %v2569 = vadd.f32 %v2439, %v2567
      %s2570 = scalar_lea.vmem %s7, 32
      %v2571 = vld [vmem:[%s2570] sm:$0xff]
      %2572 = vrot.lane.b32.xlu0 %v2057, 124
      %v2573 = vpop.permute.xlu0 %2572
      %2574 = vrot.lane.b32.xlu0 %v2053, 124
      %v2575 = vpop.permute.xlu0 %2574
      %2576 = vrot.lane.b32.xlu0 %v2058, 124
      %v2577 = vpop.permute.xlu0 %2576
      %2578 = vrot.lane.b32.xlu0 %v2067, 124
      %v2579 = vpop.permute.xlu0 %2578
      %2580 = vrot.lane.b32.xlu0 %v2068, 124
      %v2581 = vpop.permute.xlu0 %2580
      %2582 = vrot.lane.b32.xlu0 %v2066, 124
      %v2583 = vpop.permute.xlu0 %2582
      %2584 = vrot.lane.b32.xlu0 %v2077, 124
      %v2585 = vpop.permute.xlu0 %2584
      %2586 = vrot.lane.b32.xlu0 %v2078, 124
      %v2587 = vpop.permute.xlu0 %2586
      %2588 = vrot.lane.b32.xlu0 %v2076, 124
      %v2589 = vpop.permute.xlu0 %2588
      %2590 = vrot.lane.b32.xlu0 %v2087, 124
      %v2591 = vpop.permute.xlu0 %2590
      %2592 = vrot.lane.b32.xlu0 %v2088, 124
      %v2593 = vpop.permute.xlu0 %2592
      %2594 = vrot.lane.b32.xlu0 %v2086, 124
      %v2595 = vpop.permute.xlu0 %2594
      %2596 = vrot.lane.b32.xlu0 %v2097, 124
      %v2597 = vpop.permute.xlu0 %2596
      %2598 = vrot.lane.b32.xlu0 %v2098, 124
      %v2599 = vpop.permute.xlu0 %2598
      %2600 = vrot.lane.b32.xlu0 %v2096, 124
      %v2601 = vpop.permute.xlu0 %2600
      %v2602 = vsel %vm1265, %v2573, %v2575
      %v2603 = vsel %vm1265, %v2575, %v2577
      %v2604 = vsel %vm1265, %v2579, %v2581
      %v2605 = vsel %vm1265, %v2581, %v2583
      %v2606 = vsel %vm1265, %v2585, %v2587
      %v2607 = vsel %vm1265, %v2587, %v2589
      %v2608 = vsel %vm1265, %v2591, %v2593
      %v2609 = vsel %vm1265, %v2593, %v2595
      %v2610 = vsel %vm1265, %v2597, %v2599
      %v2611 = vsel %vm1265, %v2599, %v2601
      %v2623 = vsel %vm729, %v2571, 0
      %2625 = vmatprep.subr.mxu0 0.0
      %2626 = vmatpush1.msra.mxu0 0.0
      %2627 = vmatprep.subr.mxu0 0.0
      %2628 = vmatpush1.msra.mxu0 0.0
      %2629 = vmatprep.subr.mxu0 0.0
      %2630 = vmatpush1.msra.mxu0 0.0
      %2631 = vmatprep.subr.mxu0 0.0
      %2632 = vmatpush1.msra.mxu0 0.0
      %2633 = vmatprep.subr.mxu0 0.0
      %2634 = vmatpush1.msra.mxu0 0.0
      %2635 = vmatprep.subr.mxu0 0.0
      %2636 = vmatpush1.msra.mxu0 0.0
      %2637 = vmatprep.subr.mxu0 0.0
      %2638 = vmatpush1.msra.mxu0 0.0
      %2639 = vmatprep.subr.mxu0 0.0
      %2640 = vmatpush1.msra.mxu0 0.0
      %2641 = vmatprep.subr.mxu0 0.0
      %2642 = vmatpush1.msra.mxu0 0.0
      %2643 = vmatprep.subr.mxu0 0.0
      %2644 = vmatpush1.msra.mxu0 0.0
      %2645 = vmatprep.subr.mxu0 0.0
      %2646 = vmatpush1.msra.mxu0 0.0
      %2647 = vmatprep.subr.mxu0 %v2611
      %2648 = vmatpush1.msra.mxu0 %v2610
      %2649 = vmatprep.subr.mxu0 %v2609
      %2650 = vmatpush1.msra.mxu0 %v2608
      %2651 = vmatprep.subr.mxu0 %v2607
      %2652 = vmatpush1.msra.mxu0 %v2606
      %2653 = vmatprep.subr.mxu0 %v2605
      %2654 = vmatpush1.msra.mxu0 %v2604
      %2655 = vmatprep.subr.mxu0 %v2603
      %2656 = vmatpush1.msra.mxu0 %v2602
      %2657 = vmatprep.subr.mxu0 0.0
      %2658 = vmatpush2.msra.mxu0 0.0
      %2659 = vmatprep.subr.mxu0 0.0
      %2660 = vmatpush2.msra.mxu0 0.0
      %2661 = vmatprep.subr.mxu0 0.0
      %2662 = vmatpush2.msra.mxu0 0.0
      %2663 = vmatprep.subr.mxu0 0.0
      %2664 = vmatpush2.msra.mxu0 0.0
      %2665 = vmatprep.subr.mxu0 0.0
      %2666 = vmatpush2.msra.mxu0 0.0
      %2667 = vmatprep.subr.mxu0 0.0
      %2668 = vmatpush2.msra.mxu0 0.0
      %2669 = vmatprep.subr.mxu0 0.0
      %2670 = vmatpush2.msra.mxu0 0.0
      %2671 = vmatprep.subr.mxu0 0.0
      %2672 = vmatpush2.msra.mxu0 0.0
      %2673 = vmatprep.subr.mxu0 0.0
      %2674 = vmatpush2.msra.mxu0 0.0
      %2675 = vmatprep.subr.mxu0 0.0
      %2676 = vmatpush2.msra.mxu0 0.0
      %2677 = vmatprep.subr.mxu0 0.0
      %2678 = vmatpush2.msra.mxu0 0.0
      %2679 = vmatprep.subr.mxu0 0.0
      %2680 = vmatpush2.msra.mxu0 0.0
      %2681 = vmatprep.subr.mxu0 0.0
      %2682 = vmatpush2.msra.mxu0 0.0
      %2683 = vmatprep.subr.mxu0 0.0
      %2684 = vmatpush2.msra.mxu0 0.0
      %2685 = vmatprep.subr.mxu0 0.0
      %2686 = vmatpush2.msra.mxu0 0.0
      %2687 = vmatprep.subr.mxu0 0.0
      %2688 = vmatpush2.msra.mxu0 0.0
      %2689 = vmatprep.mubr.f32.mxu0 0.0
      %2690 = vmatmul.mubr.f32.gmra.mxu0 %v2623
      %v2691 = vpop.f32.mrf.mxu0
      %v2692 = vadd.f32 0.0, %v2691
      %v2693 = vpop.f32.mrf.mxu0
      %v2694 = vadd.f32 0.0, %v2693
      %2695 = vdwg.mxu0
      %v2696 = vmul.f32 %v2692, %v1363
      %v2697 = vmul.f32 %v2694, %v1367
      %v2698 = vadd.f32 %v2568, %v2696
      %v2699 = vadd.f32 %v2569, %v2697
      %v2700 = vld [vmem:[%s8] sm:$0xff]
      %2702 = vset.pattern.permute.xlu0 0
      %2703 = vperm.xlu0 %2702, %v2700
      %v2704 = vpop.permute.xlu0 %2703
      %v2706 = vadd.f32 %v2698, %v2704
      %v2707 = vadd.f32 %v2699, %v2704
      %v2708 = vmax.f32 %v2706, 0.0
      %v2709 = vmax.f32 %v2707, 0.0
      %v2710 = vld [vmem:[%s11] sm:$0xff]
      %v2711 = vld [vmem:[%s12] sm:$0xff]
      %2713 = vset.pattern.permute.xlu0 0
      %2714 = vperm.xlu0 %2713, %v2711
      %v2715 = vpop.permute.xlu0 %2714
      %vm2717 = vcmask 64512
      %v2719 = vsel %vm2717, %v2710, 0
      %2721 = vmatprep.subr.mxu0 0.0
      %2722 = vmatpush1.msra.mxu0 0.0
      %2723 = vmatprep.subr.mxu0 0.0
      %2724 = vmatpush1.msra.mxu0 0.0
      %2725 = vmatprep.subr.mxu0 0.0
      %2726 = vmatpush1.msra.mxu0 0.0
      %2727 = vmatprep.subr.mxu0 0.0
      %2728 = vmatpush1.msra.mxu0 0.0
      %2729 = vmatprep.subr.mxu0 0.0
      %2730 = vmatpush1.msra.mxu0 0.0
      %2731 = vmatprep.subr.mxu0 0.0
      %2732 = vmatpush1.msra.mxu0 0.0
      %2733 = vmatprep.subr.mxu0 0.0
      %2734 = vmatpush1.msra.mxu0 0.0
      %2735 = vmatprep.subr.mxu0 0.0
      %2736 = vmatpush1.msra.mxu0 0.0
      %2737 = vmatprep.subr.mxu0 0.0
      %2738 = vmatpush1.msra.mxu0 0.0
      %2739 = vmatprep.subr.mxu0 0.0
      %2740 = vmatpush1.msra.mxu0 0.0
      %2741 = vmatprep.subr.mxu0 0.0
      %2742 = vmatpush1.msra.mxu0 0.0
      %2743 = vmatprep.subr.mxu0 0.0
      %2744 = vmatpush1.msra.mxu0 0.0
      %2745 = vmatprep.subr.mxu0 0.0
      %2746 = vmatpush1.msra.mxu0 0.0
      %2747 = vmatprep.subr.mxu0 0.0
      %2748 = vmatpush1.msra.mxu0 0.0
      %2749 = vmatprep.subr.mxu0 0.0
      %2750 = vmatpush1.msra.mxu0 0.0
      %2751 = vmatprep.subr.mxu0 %v2046
      %2752 = vmatpush1.msra.mxu0 %v2045
      %2753 = vmatprep.subr.mxu0 0.0
      %2754 = vmatpush2.msra.mxu0 0.0
      %2755 = vmatprep.subr.mxu0 0.0
      %2756 = vmatpush2.msra.mxu0 0.0
      %2757 = vmatprep.subr.mxu0 0.0
      %2758 = vmatpush2.msra.mxu0 0.0
      %2759 = vmatprep.subr.mxu0 0.0
      %2760 = vmatpush2.msra.mxu0 0.0
      %2761 = vmatprep.subr.mxu0 0.0
      %2762 = vmatpush2.msra.mxu0 0.0
      %2763 = vmatprep.subr.mxu0 0.0
      %2764 = vmatpush2.msra.mxu0 0.0
      %2765 = vmatprep.subr.mxu0 0.0
      %2766 = vmatpush2.msra.mxu0 0.0
      %2767 = vmatprep.subr.mxu0 0.0
      %2768 = vmatpush2.msra.mxu0 0.0
      %2769 = vmatprep.subr.mxu0 0.0
      %2770 = vmatpush2.msra.mxu0 0.0
      %2771 = vmatprep.subr.mxu0 0.0
      %2772 = vmatpush2.msra.mxu0 0.0
      %2773 = vmatprep.subr.mxu0 0.0
      %2774 = vmatpush2.msra.mxu0 0.0
      %2775 = vmatprep.subr.mxu0 0.0
      %2776 = vmatpush2.msra.mxu0 0.0
      %2777 = vmatprep.subr.mxu0 0.0
      %2778 = vmatpush2.msra.mxu0 0.0
      %2779 = vmatprep.subr.mxu0 0.0
      %2780 = vmatpush2.msra.mxu0 0.0
      %2781 = vmatprep.subr.mxu0 0.0
      %2782 = vmatpush2.msra.mxu0 0.0
      %2783 = vmatprep.subr.mxu0 0.0
      %2784 = vmatpush2.msra.mxu0 0.0
      %2785 = vmatprep.mubr.f32.mxu0 0.0
      %2786 = vmatmul.mubr.f32.gmra.mxu0 %v2719
      %v2787 = vpop.f32.mrf.mxu0
      %v2788 = vadd.f32 %v2715, %v2787
      %v2789 = vpop.f32.mrf.mxu0
      %v2790 = vadd.f32 %v2715, %v2789
      %2791 = vdwg.mxu0
      %2794 = vrot.lane.b32.xlu0 %v2708, 34
      %v2795 = vpop.permute.xlu0 %2794
      %2796 = vrot.lane.b32.xlu0 %v2709, 34
      %v2797 = vpop.permute.xlu0 %2796
      %v2798 = vsel %vm679, %v2795, %v2797
      %v2802 = vsel %vm679, 0.0, %v2795
      %v2803 = vsel %vm679, %v2797, 0.0
      %2806 = vrot.lane.b32.xlu0 %v2802, 112
      %v2807 = vpop.permute.xlu0 %2806
      %2808 = vrot.lane.b32.xlu0 %v2798, 112
      %v2809 = vpop.permute.xlu0 %2808
      %2810 = vrot.lane.b32.xlu0 %v2803, 112
      %v2811 = vpop.permute.xlu0 %2810
      %v2812 = vsel %vm511, %v2807, %v2809
      %v2813 = vsel %vm511, %v2809, %v2811
      %2816 = vrot.lane.b32.xlu0 %v2802, 96
      %v2817 = vpop.permute.xlu0 %2816
      %2818 = vrot.lane.b32.xlu0 %v2798, 96
      %v2819 = vpop.permute.xlu0 %2818
      %2820 = vrot.lane.b32.xlu0 %v2803, 96
      %v2821 = vpop.permute.xlu0 %2820
      %v2822 = vsel %vm534, %v2817, %v2819
      %v2823 = vsel %vm534, %v2819, %v2821
      %2826 = vrot.lane.b32.xlu0 %v2802, 80
      %v2827 = vpop.permute.xlu0 %2826
      %2828 = vrot.lane.b32.xlu0 %v2798, 80
      %v2829 = vpop.permute.xlu0 %2828
      %2830 = vrot.lane.b32.xlu0 %v2803, 80
      %v2831 = vpop.permute.xlu0 %2830
      %v2832 = vsel %vm557, %v2827, %v2829
      %v2833 = vsel %vm557, %v2829, %v2831
      %2836 = vrot.lane.b32.xlu0 %v2802, 64
      %v2837 = vpop.permute.xlu0 %2836
      %2838 = vrot.lane.b32.xlu0 %v2798, 64
      %v2839 = vpop.permute.xlu0 %2838
      %2840 = vrot.lane.b32.xlu0 %v2803, 64
      %v2841 = vpop.permute.xlu0 %2840
      %v2842 = vsel %vm478, %v2837, %v2839
      %v2843 = vsel %vm478, %v2839, %v2841
      %v2846 = vld [vmem:[%s9] sm:$0xff]
      %v2848 = vsel %vm729, %v2846, 0
      %2850 = vmatprep.subr.mxu0 0.0
      %2851 = vmatpush1.msra.mxu0 0.0
      %2852 = vmatprep.subr.mxu0 0.0
      %2853 = vmatpush1.msra.mxu0 0.0
      %2854 = vmatprep.subr.mxu0 0.0
      %2855 = vmatpush1.msra.mxu0 0.0
      %2856 = vmatprep.subr.mxu0 0.0
      %2857 = vmatpush1.msra.mxu0 0.0
      %2858 = vmatprep.subr.mxu0 0.0
      %2859 = vmatpush1.msra.mxu0 0.0
      %2860 = vmatprep.subr.mxu0 0.0
      %2861 = vmatpush1.msra.mxu0 0.0
      %2862 = vmatprep.subr.mxu0 0.0
      %2863 = vmatpush1.msra.mxu0 0.0
      %2864 = vmatprep.subr.mxu0 0.0
      %2865 = vmatpush1.msra.mxu0 0.0
      %2866 = vmatprep.subr.mxu0 0.0
      %2867 = vmatpush1.msra.mxu0 0.0
      %2868 = vmatprep.subr.mxu0 0.0
      %2869 = vmatpush1.msra.mxu0 0.0
      %2870 = vmatprep.subr.mxu0 0.0
      %2871 = vmatpush1.msra.mxu0 0.0
      %2872 = vmatprep.subr.mxu0 %v2843
      %2873 = vmatpush1.msra.mxu0 %v2842
      %2874 = vmatprep.subr.mxu0 %v2833
      %2875 = vmatpush1.msra.mxu0 %v2832
      %2876 = vmatprep.subr.mxu0 %v2823
      %2877 = vmatpush1.msra.mxu0 %v2822
      %2878 = vmatprep.subr.mxu0 %v2813
      %2879 = vmatpush1.msra.mxu0 %v2812
      %2880 = vmatprep.subr.mxu0 %v2798
      %2881 = vmatpush1.msra.mxu0 %v2802
      %2882 = vmatprep.subr.mxu0 0.0
      %2883 = vmatpush2.msra.mxu0 0.0
      %2884 = vmatprep.subr.mxu0 0.0
      %2885 = vmatpush2.msra.mxu0 0.0
      %2886 = vmatprep.subr.mxu0 0.0
      %2887 = vmatpush2.msra.mxu0 0.0
      %2888 = vmatprep.subr.mxu0 0.0
      %2889 = vmatpush2.msra.mxu0 0.0
      %2890 = vmatprep.subr.mxu0 0.0
      %2891 = vmatpush2.msra.mxu0 0.0
      %2892 = vmatprep.subr.mxu0 0.0
      %2893 = vmatpush2.msra.mxu0 0.0
      %2894 = vmatprep.subr.mxu0 0.0
      %2895 = vmatpush2.msra.mxu0 0.0
      %2896 = vmatprep.subr.mxu0 0.0
      %2897 = vmatpush2.msra.mxu0 0.0
      %2898 = vmatprep.subr.mxu0 0.0
      %2899 = vmatpush2.msra.mxu0 0.0
      %2900 = vmatprep.subr.mxu0 0.0
      %2901 = vmatpush2.msra.mxu0 0.0
      %2902 = vmatprep.subr.mxu0 0.0
      %2903 = vmatpush2.msra.mxu0 0.0
      %2904 = vmatprep.subr.mxu0 0.0
      %2905 = vmatpush2.msra.mxu0 0.0
      %2906 = vmatprep.subr.mxu0 0.0
      %2907 = vmatpush2.msra.mxu0 0.0
      %2908 = vmatprep.subr.mxu0 0.0
      %2909 = vmatpush2.msra.mxu0 0.0
      %2910 = vmatprep.subr.mxu0 0.0
      %2911 = vmatpush2.msra.mxu0 0.0
      %2912 = vmatprep.subr.mxu0 0.0
      %2913 = vmatpush2.msra.mxu0 0.0
      %2914 = vmatprep.mubr.f32.mxu0 0.0
      %2915 = vmatmul.mubr.f32.gmra.mxu0 %v2848
      %v2916 = vpop.f32.mrf.mxu0
      %v2917 = vadd.f32 0.0, %v2916
      %v2918 = vpop.f32.mrf.mxu0
      %v2919 = vadd.f32 0.0, %v2918
      %2920 = vdwg.mxu0
      %v2921 = vmul.f32 %v2917, %v807
      %v2922 = vmul.f32 %v2919, %v811
      %v2923 = vadd.f32 %v2921, 0.0
      %v2924 = vadd.f32 %v2922, 0.0
      %s2925 = scalar_lea.vmem %s9, 8
      %v2926 = vld [vmem:[%s2925] sm:$0xff]
      %2927 = vrot.lane.b32.xlu0 %v2802, 127
      %v2928 = vpop.permute.xlu0 %2927
      %2929 = vrot.lane.b32.xlu0 %v2798, 127
      %v2930 = vpop.permute.xlu0 %2929
      %2931 = vrot.lane.b32.xlu0 %v2803, 127
      %v2932 = vpop.permute.xlu0 %2931
      %2933 = vrot.lane.b32.xlu0 %v2812, 127
      %v2934 = vpop.permute.xlu0 %2933
      %2935 = vrot.lane.b32.xlu0 %v2813, 127
      %v2936 = vpop.permute.xlu0 %2935
      %2937 = vrot.lane.b32.xlu0 %v2811, 127
      %v2938 = vpop.permute.xlu0 %2937
      %2939 = vrot.lane.b32.xlu0 %v2822, 127
      %v2940 = vpop.permute.xlu0 %2939
      %2941 = vrot.lane.b32.xlu0 %v2823, 127
      %v2942 = vpop.permute.xlu0 %2941
      %2943 = vrot.lane.b32.xlu0 %v2821, 127
      %v2944 = vpop.permute.xlu0 %2943
      %2945 = vrot.lane.b32.xlu0 %v2832, 127
      %v2946 = vpop.permute.xlu0 %2945
      %2947 = vrot.lane.b32.xlu0 %v2833, 127
      %v2948 = vpop.permute.xlu0 %2947
      %2949 = vrot.lane.b32.xlu0 %v2831, 127
      %v2950 = vpop.permute.xlu0 %2949
      %2951 = vrot.lane.b32.xlu0 %v2842, 127
      %v2952 = vpop.permute.xlu0 %2951
      %2953 = vrot.lane.b32.xlu0 %v2843, 127
      %v2954 = vpop.permute.xlu0 %2953
      %2955 = vrot.lane.b32.xlu0 %v2841, 127
      %v2956 = vpop.permute.xlu0 %2955
      %v2957 = vsel %vm848, %v2928, %v2930
      %v2958 = vsel %vm848, %v2930, %v2932
      %v2959 = vsel %vm848, %v2934, %v2936
      %v2960 = vsel %vm848, %v2936, %v2938
      %v2961 = vsel %vm848, %v2940, %v2942
      %v2962 = vsel %vm848, %v2942, %v2944
      %v2963 = vsel %vm848, %v2946, %v2948
      %v2964 = vsel %vm848, %v2948, %v2950
      %v2965 = vsel %vm848, %v2952, %v2954
      %v2966 = vsel %vm848, %v2954, %v2956
      %v2978 = vsel %vm729, %v2926, 0
      %2980 = vmatprep.subr.mxu0 0.0
      %2981 = vmatpush1.msra.mxu0 0.0
      %2982 = vmatprep.subr.mxu0 0.0
      %2983 = vmatpush1.msra.mxu0 0.0
      %2984 = vmatprep.subr.mxu0 0.0
      %2985 = vmatpush1.msra.mxu0 0.0
      %2986 = vmatprep.subr.mxu0 0.0
      %2987 = vmatpush1.msra.mxu0 0.0
      %2988 = vmatprep.subr.mxu0 0.0
      %2989 = vmatpush1.msra.mxu0 0.0
      %2990 = vmatprep.subr.mxu0 0.0
      %2991 = vmatpush1.msra.mxu0 0.0
      %2992 = vmatprep.subr.mxu0 0.0
      %2993 = vmatpush1.msra.mxu0 0.0
      %2994 = vmatprep.subr.mxu0 0.0
      %2995 = vmatpush1.msra.mxu0 0.0
      %2996 = vmatprep.subr.mxu0 0.0
      %2997 = vmatpush1.msra.mxu0 0.0
      %2998 = vmatprep.subr.mxu0 0.0
      %2999 = vmatpush1.msra.mxu0 0.0
      %3000 = vmatprep.subr.mxu0 0.0
      %3001 = vmatpush1.msra.mxu0 0.0
      %3002 = vmatprep.subr.mxu0 %v2966
      %3003 = vmatpush1.msra.mxu0 %v2965
      %3004 = vmatprep.subr.mxu0 %v2964
      %3005 = vmatpush1.msra.mxu0 %v2963
      %3006 = vmatprep.subr.mxu0 %v2962
      %3007 = vmatpush1.msra.mxu0 %v2961
      %3008 = vmatprep.subr.mxu0 %v2960
      %3009 = vmatpush1.msra.mxu0 %v2959
      %3010 = vmatprep.subr.mxu0 %v2958
      %3011 = vmatpush1.msra.mxu0 %v2957
      %3012 = vmatprep.subr.mxu0 0.0
      %3013 = vmatpush2.msra.mxu0 0.0
      %3014 = vmatprep.subr.mxu0 0.0
      %3015 = vmatpush2.msra.mxu0 0.0
      %3016 = vmatprep.subr.mxu0 0.0
      %3017 = vmatpush2.msra.mxu0 0.0
      %3018 = vmatprep.subr.mxu0 0.0
      %3019 = vmatpush2.msra.mxu0 0.0
      %3020 = vmatprep.subr.mxu0 0.0
      %3021 = vmatpush2.msra.mxu0 0.0
      %3022 = vmatprep.subr.mxu0 0.0
      %3023 = vmatpush2.msra.mxu0 0.0
      %3024 = vmatprep.subr.mxu0 0.0
      %3025 = vmatpush2.msra.mxu0 0.0
      %3026 = vmatprep.subr.mxu0 0.0
      %3027 = vmatpush2.msra.mxu0 0.0
      %3028 = vmatprep.subr.mxu0 0.0
      %3029 = vmatpush2.msra.mxu0 0.0
      %3030 = vmatprep.subr.mxu0 0.0
      %3031 = vmatpush2.msra.mxu0 0.0
      %3032 = vmatprep.subr.mxu0 0.0
      %3033 = vmatpush2.msra.mxu0 0.0
      %3034 = vmatprep.subr.mxu0 0.0
      %3035 = vmatpush2.msra.mxu0 0.0
      %3036 = vmatprep.subr.mxu0 0.0
      %3037 = vmatpush2.msra.mxu0 0.0
      %3038 = vmatprep.subr.mxu0 0.0
      %3039 = vmatpush2.msra.mxu0 0.0
      %3040 = vmatprep.subr.mxu0 0.0
      %3041 = vmatpush2.msra.mxu0 0.0
      %3042 = vmatprep.subr.mxu0 0.0
      %3043 = vmatpush2.msra.mxu0 0.0
      %3044 = vmatprep.mubr.f32.mxu0 0.0
      %3045 = vmatmul.mubr.f32.gmra.mxu0 %v2978
      %v3046 = vpop.f32.mrf.mxu0
      %v3047 = vadd.f32 0.0, %v3046
      %v3048 = vpop.f32.mrf.mxu0
      %v3049 = vadd.f32 0.0, %v3048
      %3050 = vdwg.mxu0
      %v3051 = vmul.f32 %v3047, %v946
      %v3052 = vmul.f32 %v3049, %v950
      %v3053 = vadd.f32 %v2923, %v3051
      %v3054 = vadd.f32 %v2924, %v3052
      %s3055 = scalar_lea.vmem %s9, 16
      %v3056 = vld [vmem:[%s3055] sm:$0xff]
      %3057 = vrot.lane.b32.xlu0 %v2802, 126
      %v3058 = vpop.permute.xlu0 %3057
      %3059 = vrot.lane.b32.xlu0 %v2798, 126
      %v3060 = vpop.permute.xlu0 %3059
      %3061 = vrot.lane.b32.xlu0 %v2803, 126
      %v3062 = vpop.permute.xlu0 %3061
      %3063 = vrot.lane.b32.xlu0 %v2812, 126
      %v3064 = vpop.permute.xlu0 %3063
      %3065 = vrot.lane.b32.xlu0 %v2813, 126
      %v3066 = vpop.permute.xlu0 %3065
      %3067 = vrot.lane.b32.xlu0 %v2811, 126
      %v3068 = vpop.permute.xlu0 %3067
      %3069 = vrot.lane.b32.xlu0 %v2822, 126
      %v3070 = vpop.permute.xlu0 %3069
      %3071 = vrot.lane.b32.xlu0 %v2823, 126
      %v3072 = vpop.permute.xlu0 %3071
      %3073 = vrot.lane.b32.xlu0 %v2821, 126
      %v3074 = vpop.permute.xlu0 %3073
      %3075 = vrot.lane.b32.xlu0 %v2832, 126
      %v3076 = vpop.permute.xlu0 %3075
      %3077 = vrot.lane.b32.xlu0 %v2833, 126
      %v3078 = vpop.permute.xlu0 %3077
      %3079 = vrot.lane.b32.xlu0 %v2831, 126
      %v3080 = vpop.permute.xlu0 %3079
      %3081 = vrot.lane.b32.xlu0 %v2842, 126
      %v3082 = vpop.permute.xlu0 %3081
      %3083 = vrot.lane.b32.xlu0 %v2843, 126
      %v3084 = vpop.permute.xlu0 %3083
      %3085 = vrot.lane.b32.xlu0 %v2841, 126
      %v3086 = vpop.permute.xlu0 %3085
      %v3087 = vsel %vm987, %v3058, %v3060
      %v3088 = vsel %vm987, %v3060, %v3062
      %v3089 = vsel %vm987, %v3064, %v3066
      %v3090 = vsel %vm987, %v3066, %v3068
      %v3091 = vsel %vm987, %v3070, %v3072
      %v3092 = vsel %vm987, %v3072, %v3074
      %v3093 = vsel %vm987, %v3076, %v3078
      %v3094 = vsel %vm987, %v3078, %v3080
      %v3095 = vsel %vm987, %v3082, %v3084
      %v3096 = vsel %vm987, %v3084, %v3086
      %v3108 = vsel %vm729, %v3056, 0
      %3110 = vmatprep.subr.mxu0 0.0
      %3111 = vmatpush1.msra.mxu0 0.0
      %3112 = vmatprep.subr.mxu0 0.0
      %3113 = vmatpush1.msra.mxu0 0.0
      %3114 = vmatprep.subr.mxu0 0.0
      %3115 = vmatpush1.msra.mxu0 0.0
      %3116 = vmatprep.subr.mxu0 0.0
      %3117 = vmatpush1.msra.mxu0 0.0
      %3118 = vmatprep.subr.mxu0 0.0
      %3119 = vmatpush1.msra.mxu0 0.0
      %3120 = vmatprep.subr.mxu0 0.0
      %3121 = vmatpush1.msra.mxu0 0.0
      %3122 = vmatprep.subr.mxu0 0.0
      %3123 = vmatpush1.msra.mxu0 0.0
      %3124 = vmatprep.subr.mxu0 0.0
      %3125 = vmatpush1.msra.mxu0 0.0
      %3126 = vmatprep.subr.mxu0 0.0
      %3127 = vmatpush1.msra.mxu0 0.0
      %3128 = vmatprep.subr.mxu0 0.0
      %3129 = vmatpush1.msra.mxu0 0.0
      %3130 = vmatprep.subr.mxu0 0.0
      %3131 = vmatpush1.msra.mxu0 0.0
      %3132 = vmatprep.subr.mxu0 %v3096
      %3133 = vmatpush1.msra.mxu0 %v3095
      %3134 = vmatprep.subr.mxu0 %v3094
      %3135 = vmatpush1.msra.mxu0 %v3093
      %3136 = vmatprep.subr.mxu0 %v3092
      %3137 = vmatpush1.msra.mxu0 %v3091
      %3138 = vmatprep.subr.mxu0 %v3090
      %3139 = vmatpush1.msra.mxu0 %v3089
      %3140 = vmatprep.subr.mxu0 %v3088
      %3141 = vmatpush1.msra.mxu0 %v3087
      %3142 = vmatprep.subr.mxu0 0.0
      %3143 = vmatpush2.msra.mxu0 0.0
      %3144 = vmatprep.subr.mxu0 0.0
      %3145 = vmatpush2.msra.mxu0 0.0
      %3146 = vmatprep.subr.mxu0 0.0
      %3147 = vmatpush2.msra.mxu0 0.0
      %3148 = vmatprep.subr.mxu0 0.0
      %3149 = vmatpush2.msra.mxu0 0.0
      %3150 = vmatprep.subr.mxu0 0.0
      %3151 = vmatpush2.msra.mxu0 0.0
      %3152 = vmatprep.subr.mxu0 0.0
      %3153 = vmatpush2.msra.mxu0 0.0
      %3154 = vmatprep.subr.mxu0 0.0
      %3155 = vmatpush2.msra.mxu0 0.0
      %3156 = vmatprep.subr.mxu0 0.0
      %3157 = vmatpush2.msra.mxu0 0.0
      %3158 = vmatprep.subr.mxu0 0.0
      %3159 = vmatpush2.msra.mxu0 0.0
      %3160 = vmatprep.subr.mxu0 0.0
      %3161 = vmatpush2.msra.mxu0 0.0
      %3162 = vmatprep.subr.mxu0 0.0
      %3163 = vmatpush2.msra.mxu0 0.0
      %3164 = vmatprep.subr.mxu0 0.0
      %3165 = vmatpush2.msra.mxu0 0.0
      %3166 = vmatprep.subr.mxu0 0.0
      %3167 = vmatpush2.msra.mxu0 0.0
      %3168 = vmatprep.subr.mxu0 0.0
      %3169 = vmatpush2.msra.mxu0 0.0
      %3170 = vmatprep.subr.mxu0 0.0
      %3171 = vmatpush2.msra.mxu0 0.0
      %3172 = vmatprep.subr.mxu0 0.0
      %3173 = vmatpush2.msra.mxu0 0.0
      %3174 = vmatprep.mubr.f32.mxu0 0.0
      %3175 = vmatmul.mubr.f32.gmra.mxu0 %v3108
      %v3176 = vpop.f32.mrf.mxu0
      %v3177 = vadd.f32 0.0, %v3176
      %v3178 = vpop.f32.mrf.mxu0
      %v3179 = vadd.f32 0.0, %v3178
      %3180 = vdwg.mxu0
      %v3181 = vmul.f32 %v3177, %v1085
      %v3182 = vmul.f32 %v3179, %v1089
      %v3183 = vadd.f32 %v3053, %v3181
      %v3184 = vadd.f32 %v3054, %v3182
      %s3185 = scalar_lea.vmem %s9, 24
      %v3186 = vld [vmem:[%s3185] sm:$0xff]
      %3187 = vrot.lane.b32.xlu0 %v2802, 125
      %v3188 = vpop.permute.xlu0 %3187
      %3189 = vrot.lane.b32.xlu0 %v2798, 125
      %v3190 = vpop.permute.xlu0 %3189
      %3191 = vrot.lane.b32.xlu0 %v2803, 125
      %v3192 = vpop.permute.xlu0 %3191
      %3193 = vrot.lane.b32.xlu0 %v2812, 125
      %v3194 = vpop.permute.xlu0 %3193
      %3195 = vrot.lane.b32.xlu0 %v2813, 125
      %v3196 = vpop.permute.xlu0 %3195
      %3197 = vrot.lane.b32.xlu0 %v2811, 125
      %v3198 = vpop.permute.xlu0 %3197
      %3199 = vrot.lane.b32.xlu0 %v2822, 125
      %v3200 = vpop.permute.xlu0 %3199
      %3201 = vrot.lane.b32.xlu0 %v2823, 125
      %v3202 = vpop.permute.xlu0 %3201
      %3203 = vrot.lane.b32.xlu0 %v2821, 125
      %v3204 = vpop.permute.xlu0 %3203
      %3205 = vrot.lane.b32.xlu0 %v2832, 125
      %v3206 = vpop.permute.xlu0 %3205
      %3207 = vrot.lane.b32.xlu0 %v2833, 125
      %v3208 = vpop.permute.xlu0 %3207
      %3209 = vrot.lane.b32.xlu0 %v2831, 125
      %v3210 = vpop.permute.xlu0 %3209
      %3211 = vrot.lane.b32.xlu0 %v2842, 125
      %v3212 = vpop.permute.xlu0 %3211
      %3213 = vrot.lane.b32.xlu0 %v2843, 125
      %v3214 = vpop.permute.xlu0 %3213
      %3215 = vrot.lane.b32.xlu0 %v2841, 125
      %v3216 = vpop.permute.xlu0 %3215
      %v3217 = vsel %vm1126, %v3188, %v3190
      %v3218 = vsel %vm1126, %v3190, %v3192
      %v3219 = vsel %vm1126, %v3194, %v3196
      %v3220 = vsel %vm1126, %v3196, %v3198
      %v3221 = vsel %vm1126, %v3200, %v3202
      %v3222 = vsel %vm1126, %v3202, %v3204
      %v3223 = vsel %vm1126, %v3206, %v3208
      %v3224 = vsel %vm1126, %v3208, %v3210
      %v3225 = vsel %vm1126, %v3212, %v3214
      %v3226 = vsel %vm1126, %v3214, %v3216
      %v3238 = vsel %vm729, %v3186, 0
      %3240 = vmatprep.subr.mxu0 0.0
      %3241 = vmatpush1.msra.mxu0 0.0
      %3242 = vmatprep.subr.mxu0 0.0
      %3243 = vmatpush1.msra.mxu0 0.0
      %3244 = vmatprep.subr.mxu0 0.0
      %3245 = vmatpush1.msra.mxu0 0.0
      %3246 = vmatprep.subr.mxu0 0.0
      %3247 = vmatpush1.msra.mxu0 0.0
      %3248 = vmatprep.subr.mxu0 0.0
      %3249 = vmatpush1.msra.mxu0 0.0
      %3250 = vmatprep.subr.mxu0 0.0
      %3251 = vmatpush1.msra.mxu0 0.0
      %3252 = vmatprep.subr.mxu0 0.0
      %3253 = vmatpush1.msra.mxu0 0.0
      %3254 = vmatprep.subr.mxu0 0.0
      %3255 = vmatpush1.msra.mxu0 0.0
      %3256 = vmatprep.subr.mxu0 0.0
      %3257 = vmatpush1.msra.mxu0 0.0
      %3258 = vmatprep.subr.mxu0 0.0
      %3259 = vmatpush1.msra.mxu0 0.0
      %3260 = vmatprep.subr.mxu0 0.0
      %3261 = vmatpush1.msra.mxu0 0.0
      %3262 = vmatprep.subr.mxu0 %v3226
      %3263 = vmatpush1.msra.mxu0 %v3225
      %3264 = vmatprep.subr.mxu0 %v3224
      %3265 = vmatpush1.msra.mxu0 %v3223
      %3266 = vmatprep.subr.mxu0 %v3222
      %3267 = vmatpush1.msra.mxu0 %v3221
      %3268 = vmatprep.subr.mxu0 %v3220
      %3269 = vmatpush1.msra.mxu0 %v3219
      %3270 = vmatprep.subr.mxu0 %v3218
      %3271 = vmatpush1.msra.mxu0 %v3217
      %3272 = vmatprep.subr.mxu0 0.0
      %3273 = vmatpush2.msra.mxu0 0.0
      %3274 = vmatprep.subr.mxu0 0.0
      %3275 = vmatpush2.msra.mxu0 0.0
      %3276 = vmatprep.subr.mxu0 0.0
      %3277 = vmatpush2.msra.mxu0 0.0
      %3278 = vmatprep.subr.mxu0 0.0
      %3279 = vmatpush2.msra.mxu0 0.0
      %3280 = vmatprep.subr.mxu0 0.0
      %3281 = vmatpush2.msra.mxu0 0.0
      %3282 = vmatprep.subr.mxu0 0.0
      %3283 = vmatpush2.msra.mxu0 0.0
      %3284 = vmatprep.subr.mxu0 0.0
      %3285 = vmatpush2.msra.mxu0 0.0
      %3286 = vmatprep.subr.mxu0 0.0
      %3287 = vmatpush2.msra.mxu0 0.0
      %3288 = vmatprep.subr.mxu0 0.0
      %3289 = vmatpush2.msra.mxu0 0.0
      %3290 = vmatprep.subr.mxu0 0.0
      %3291 = vmatpush2.msra.mxu0 0.0
      %3292 = vmatprep.subr.mxu0 0.0
      %3293 = vmatpush2.msra.mxu0 0.0
      %3294 = vmatprep.subr.mxu0 0.0
      %3295 = vmatpush2.msra.mxu0 0.0
      %3296 = vmatprep.subr.mxu0 0.0
      %3297 = vmatpush2.msra.mxu0 0.0
      %3298 = vmatprep.subr.mxu0 0.0
      %3299 = vmatpush2.msra.mxu0 0.0
      %3300 = vmatprep.subr.mxu0 0.0
      %3301 = vmatpush2.msra.mxu0 0.0
      %3302 = vmatprep.subr.mxu0 0.0
      %3303 = vmatpush2.msra.mxu0 0.0
      %3304 = vmatprep.mubr.f32.mxu0 0.0
      %3305 = vmatmul.mubr.f32.gmra.mxu0 %v3238
      %v3306 = vpop.f32.mrf.mxu0
      %v3307 = vadd.f32 0.0, %v3306
      %v3308 = vpop.f32.mrf.mxu0
      %v3309 = vadd.f32 0.0, %v3308
      %3310 = vdwg.mxu0
      %v3311 = vmul.f32 %v3307, %v1224
      %v3312 = vmul.f32 %v3309, %v1228
      %v3313 = vadd.f32 %v3183, %v3311
      %v3314 = vadd.f32 %v3184, %v3312
      %s3315 = scalar_lea.vmem %s9, 32
      %v3316 = vld [vmem:[%s3315] sm:$0xff]
      %3317 = vrot.lane.b32.xlu0 %v2802, 124
      %v3318 = vpop.permute.xlu0 %3317
      %3319 = vrot.lane.b32.xlu0 %v2798, 124
      %v3320 = vpop.permute.xlu0 %3319
      %3321 = vrot.lane.b32.xlu0 %v2803, 124
      %v3322 = vpop.permute.xlu0 %3321
      %3323 = vrot.lane.b32.xlu0 %v2812, 124
      %v3324 = vpop.permute.xlu0 %3323
      %3325 = vrot.lane.b32.xlu0 %v2813, 124
      %v3326 = vpop.permute.xlu0 %3325
      %3327 = vrot.lane.b32.xlu0 %v2811, 124
      %v3328 = vpop.permute.xlu0 %3327
      %3329 = vrot.lane.b32.xlu0 %v2822, 124
      %v3330 = vpop.permute.xlu0 %3329
      %3331 = vrot.lane.b32.xlu0 %v2823, 124
      %v3332 = vpop.permute.xlu0 %3331
      %3333 = vrot.lane.b32.xlu0 %v2821, 124
      %v3334 = vpop.permute.xlu0 %3333
      %3335 = vrot.lane.b32.xlu0 %v2832, 124
      %v3336 = vpop.permute.xlu0 %3335
      %3337 = vrot.lane.b32.xlu0 %v2833, 124
      %v3338 = vpop.permute.xlu0 %3337
      %3339 = vrot.lane.b32.xlu0 %v2831, 124
      %v3340 = vpop.permute.xlu0 %3339
      %3341 = vrot.lane.b32.xlu0 %v2842, 124
      %v3342 = vpop.permute.xlu0 %3341
      %3343 = vrot.lane.b32.xlu0 %v2843, 124
      %v3344 = vpop.permute.xlu0 %3343
      %3345 = vrot.lane.b32.xlu0 %v2841, 124
      %v3346 = vpop.permute.xlu0 %3345
      %v3347 = vsel %vm1265, %v3318, %v3320
      %v3348 = vsel %vm1265, %v3320, %v3322
      %v3349 = vsel %vm1265, %v3324, %v3326
      %v3350 = vsel %vm1265, %v3326, %v3328
      %v3351 = vsel %vm1265, %v3330, %v3332
      %v3352 = vsel %vm1265, %v3332, %v3334
      %v3353 = vsel %vm1265, %v3336, %v3338
      %v3354 = vsel %vm1265, %v3338, %v3340
      %v3355 = vsel %vm1265, %v3342, %v3344
      %v3356 = vsel %vm1265, %v3344, %v3346
      %v3368 = vsel %vm729, %v3316, 0
      %3370 = vmatprep.subr.mxu0 0.0
      %3371 = vmatpush1.msra.mxu0 0.0
      %3372 = vmatprep.subr.mxu0 0.0
      %3373 = vmatpush1.msra.mxu0 0.0
      %3374 = vmatprep.subr.mxu0 0.0
      %3375 = vmatpush1.msra.mxu0 0.0
      %3376 = vmatprep.subr.mxu0 0.0
      %3377 = vmatpush1.msra.mxu0 0.0
      %3378 = vmatprep.subr.mxu0 0.0
      %3379 = vmatpush1.msra.mxu0 0.0
      %3380 = vmatprep.subr.mxu0 0.0
      %3381 = vmatpush1.msra.mxu0 0.0
      %3382 = vmatprep.subr.mxu0 0.0
      %3383 = vmatpush1.msra.mxu0 0.0
      %3384 = vmatprep.subr.mxu0 0.0
      %3385 = vmatpush1.msra.mxu0 0.0
      %3386 = vmatprep.subr.mxu0 0.0
      %3387 = vmatpush1.msra.mxu0 0.0
      %3388 = vmatprep.subr.mxu0 0.0
      %3389 = vmatpush1.msra.mxu0 0.0
      %3390 = vmatprep.subr.mxu0 0.0
      %3391 = vmatpush1.msra.mxu0 0.0
      %3392 = vmatprep.subr.mxu0 %v3356
      %3393 = vmatpush1.msra.mxu0 %v3355
      %3394 = vmatprep.subr.mxu0 %v3354
      %3395 = vmatpush1.msra.mxu0 %v3353
      %3396 = vmatprep.subr.mxu0 %v3352
      %3397 = vmatpush1.msra.mxu0 %v3351
      %3398 = vmatprep.subr.mxu0 %v3350
      %3399 = vmatpush1.msra.mxu0 %v3349
      %3400 = vmatprep.subr.mxu0 %v3348
      %3401 = vmatpush1.msra.mxu0 %v3347
      %3402 = vmatprep.subr.mxu0 0.0
      %3403 = vmatpush2.msra.mxu0 0.0
      %3404 = vmatprep.subr.mxu0 0.0
      %3405 = vmatpush2.msra.mxu0 0.0
      %3406 = vmatprep.subr.mxu0 0.0
      %3407 = vmatpush2.msra.mxu0 0.0
      %3408 = vmatprep.subr.mxu0 0.0
      %3409 = vmatpush2.msra.mxu0 0.0
      %3410 = vmatprep.subr.mxu0 0.0
      %3411 = vmatpush2.msra.mxu0 0.0
      %3412 = vmatprep.subr.mxu0 0.0
      %3413 = vmatpush2.msra.mxu0 0.0
      %3414 = vmatprep.subr.mxu0 0.0
      %3415 = vmatpush2.msra.mxu0 0.0
      %3416 = vmatprep.subr.mxu0 0.0
      %3417 = vmatpush2.msra.mxu0 0.0
      %3418 = vmatprep.subr.mxu0 0.0
      %3419 = vmatpush2.msra.mxu0 0.0
      %3420 = vmatprep.subr.mxu0 0.0
      %3421 = vmatpush2.msra.mxu0 0.0
      %3422 = vmatprep.subr.mxu0 0.0
      %3423 = vmatpush2.msra.mxu0 0.0
      %3424 = vmatprep.subr.mxu0 0.0
      %3425 = vmatpush2.msra.mxu0 0.0
      %3426 = vmatprep.subr.mxu0 0.0
      %3427 = vmatpush2.msra.mxu0 0.0
      %3428 = vmatprep.subr.mxu0 0.0
      %3429 = vmatpush2.msra.mxu0 0.0
      %3430 = vmatprep.subr.mxu0 0.0
      %3431 = vmatpush2.msra.mxu0 0.0
      %3432 = vmatprep.subr.mxu0 0.0
      %3433 = vmatpush2.msra.mxu0 0.0
      %3434 = vmatprep.mubr.f32.mxu0 0.0
      %3435 = vmatmul.mubr.f32.gmra.mxu0 %v3368
      %v3436 = vpop.f32.mrf.mxu0
      %v3437 = vadd.f32 0.0, %v3436
      %v3438 = vpop.f32.mrf.mxu0
      %v3439 = vadd.f32 0.0, %v3438
      %3440 = vdwg.mxu0
      %v3441 = vmul.f32 %v3437, %v1363
      %v3442 = vmul.f32 %v3439, %v1367
      %v3443 = vadd.f32 %v3313, %v3441
      %v3444 = vadd.f32 %v3314, %v3442
      %v3445 = vld [vmem:[%s10] sm:$0xff]
      %3447 = vset.pattern.permute.xlu0 0
      %3448 = vperm.xlu0 %3447, %v3445
      %v3449 = vpop.permute.xlu0 %3448
      %v3451 = vadd.f32 %v3443, %v3449
      %v3452 = vadd.f32 %v3444, %v3449
      %v3453 = vadd.f32 %v3451, %v2788
      %v3454 = vadd.f32 %v3452, %v2790
      %v3455 = vmax.f32 %v3453, 0.0
      %v3456 = vmax.f32 %v3454, 0.0
      %3457 = vst [vmem:[%s467] sm:$0xff] %v3455
      %3458 = vst [vmem:[%s467 + $0x8] sm:$0xff] %v3456
      %p3459 = scmp.lt.s32.totalorder %s25, 1
      %s3460 = scalar_select %p3459, %s25, 1
      %s3461 = smul.addr %s3460, 2
      %s3462 = smul.addr %s3461, 8
      %s3463 = scalar_lea.vmem %s14, %s3462
      // Predicated region
      $region77: #{ht_conv_forward.1} parent=75 // pred_check
        %p3464 = pneg %p342
      $region78: #{ht_conv_forward.1} parent=75 // pred_check_branch
        %3466 = sbr.rel (%p3464) target = $region80
      $region79: #{ht_conv_forward.1} parent=75 // pred_region
        _
      $region80: #{ht_conv_forward.1} parent=75 // pred_fallthru
        _
    $region76: #{ht_conv_forward.1} parent=5 // pred_fallthru
      _
    %p3467 = scmp.le.s32.totalorder 2, %s20
    // Predicated region
    $region81: #{ht_conv_forward.1} parent=5 // pred_check
      %p3468 = pneg %p3467
    $region82: #{ht_conv_forward.1} parent=5 // pred_check_branch
      %3470 = sbr.rel (%p3468) target = $region84
    $region83: #{ht_conv_forward.1} parent=5 // pred_region
      %s3471 = ssub.s32 %s20, 2
      // Predicated region
      $region85: #{ht_conv_forward.1} parent=83 // pred_check
        %p3472 = pneg %p348
      $region86: #{ht_conv_forward.1} parent=83 // pred_check_branch
        %3474 = sbr.rel (%p3472) target = $region88
      $region87: #{ht_conv_forward.1} parent=83 // pred_region
        %p3475 = scmp.lt.s32.totalorder %s26, 1
        %s3476 = scalar_select %p3475, %s26, 1
        %s3477 = smul.addr %s3476, 2
        %s3478 = smul.addr %s3477, 8
        %s3479 = scalar_lea.vmem %s14, %s3478
      $region88: #{ht_conv_forward.1} parent=83 // pred_fallthru
        _
    $region84: #{ht_conv_forward.1} parent=5 // pred_fallthru
      _
  $region6: #{ht_conv_forward.1} parent=0 // loop_footer
    %s24 = sadd.s32 1, %s20
  $region7: #{ht_conv_forward.1} parent=0 // loop_footer_branch
    %19 = sbr.rel target = $region3
  $region8: #{ht_conv_forward.1} parent=0 // loop_exit
    _

</llo_original>
